<compile_context>
chip_gen: v6e
topology: v6e:2x2x1
jax: 0.10.0
libtpu: 0.0.40
codegen_flags: <defaults>
</compile_context>

<pallas_src>
import functools

import jax
import jax.numpy as jnp
from jax.experimental import pallas as pl
from jax.experimental.pallas import tpu as pltpu


# ----------------------------- shared epilogue -----------------------------

def _bn_lrelu(y, cout, groups, gamma, beta, eps, slope):
    """Training-mode BatchNorm2d + LeakyReLU on a [M, groups*cout] f32 block.

    Columns are ordered (group, channel) with channel fastest.  Per-channel
    batch statistics span all rows AND all `groups` column groups, i.e. every
    output pixel of that channel in the batch (biased variance), matching
    PyTorch BatchNorm2d in training mode.
    """
    m_rows = y.shape[0]
    n_samples = float(groups * m_rows)
    s1 = jnp.sum(y, axis=0, keepdims=True)            # [1, groups*cout]
    s2 = jnp.sum(y * y, axis=0, keepdims=True)
    s1c = s1[:, 0:cout]
    s2c = s2[:, 0:cout]
    for p in range(1, groups):                        # fold the phase groups
        s1c = s1c + s1[:, p * cout:(p + 1) * cout]
        s2c = s2c + s2[:, p * cout:(p + 1) * cout]
    mean = s1c / n_samples
    var = s2c / n_samples - mean * mean               # biased variance (train mode)
    inv = jax.lax.rsqrt(var + eps)
    mean_g = jnp.concatenate([mean] * groups, axis=1)
    inv_g = jnp.concatenate([inv] * groups, axis=1)
    z = (y - mean_g) * inv_g * gamma + beta
    return jnp.where(z >= 0.0, z, slope * z)


# ----------------------------- Pallas kernels -----------------------------

def _vmem_specs(n):
    return [pl.BlockSpec(memory_space=pltpu.MemorySpace.VMEM) for _ in range(n)]


def _stage1_kernel(mean_ref, logvar_ref, eps_ref, w_ref, b_ref, gamma_ref, beta_ref,
                   o_ref, *, cout, groups, bn_eps, slope):
    # Fused: reparameterization + Linear projection + first ConvTranspose2d
    # (composed into one dense matmul at prep time) + BatchNorm2d + LeakyReLU.
    # mean/logvar/eps: [B, Z] f32, w: [Z, 16*C1] f32, out: [B, 16*C1] bf16.
    z = eps_ref[...] * jnp.exp(0.5 * logvar_ref[...]) + mean_ref[...]
    y = jnp.dot(z, w_ref[...], preferred_element_type=jnp.float32) + b_ref[...]
    o_ref[...] = _bn_lrelu(y, cout, groups, gamma_ref[...], beta_ref[...],
                           bn_eps, slope).astype(o_ref.dtype)


def _deconv_bn_lrelu_kernel(x_ref, w_ref, b_ref, gamma_ref, beta_ref, o_ref, *,
                            cout, bn_eps, slope):
    # Fused ConvTranspose2d(k=4,s=2,p=1) (im2col matmul, 4 sub-pixel phases folded
    # into the lane axis) + bias + BatchNorm2d (training-mode batch statistics)
    # + LeakyReLU.
    # x: [M, 9*Cin] bf16, w: [9*Cin, 4*Cout] bf16, out: [M, 4*Cout] bf16.
    y = jnp.dot(x_ref[...], w_ref[...], preferred_element_type=jnp.float32)
    y = y + b_ref[...]
    o_ref[...] = _bn_lrelu(y, cout, 4, gamma_ref[...], beta_ref[...],
                           bn_eps, slope).astype(o_ref.dtype)


def _matmul_bias_tanh_kernel(x_ref, w_ref, b_ref, o_ref):
    y = jnp.dot(x_ref[...], w_ref[...], preferred_element_type=jnp.float32)
    o_ref[...] = jnp.tanh(y + b_ref[...])


# ----------------------------- kernel wrappers -----------------------------

def fused_proj_deconv1(mean, logvar, eps, w, b, gamma, beta,
                       bn_eps=1e-5, slope=0.01):
    B = mean.shape[0]
    N = w.shape[1]
    cout = N // 16                                   # 16 = (2x2 base pixels)x(2x2 phases)
    kern = functools.partial(_stage1_kernel, cout=cout, groups=16,
                             bn_eps=bn_eps, slope=slope)
    return pl.pallas_call(
        kern,
        out_shape=jax.ShapeDtypeStruct((B, N), jnp.bfloat16),
        in_specs=_vmem_specs(7),
        out_specs=pl.BlockSpec(memory_space=pltpu.MemorySpace.VMEM),
    )(mean, logvar, eps, w, b, gamma, beta)


def fused_deconv_bn_lrelu(xcol, wf, b4, gamma4, beta4, bn_eps=1e-5, slope=0.01):
    # TODO(synk): for large B*H*W, grid over rows with cross-tile BN statistics
    # (two-phase) and move the im2col gather in-kernel; at these shapes a single
    # resident VMEM block is fastest (activations are tiny).
    M = xcol.shape[0]
    N = wf.shape[1]
    cout = N // 4
    kern = functools.partial(_deconv_bn_lrelu_kernel, cout=cout,
                             bn_eps=bn_eps, slope=slope)
    return pl.pallas_call(
        kern,
        out_shape=jax.ShapeDtypeStruct((M, N), jnp.bfloat16),
        in_specs=_vmem_specs(5),
        out_specs=pl.BlockSpec(memory_space=pltpu.MemorySpace.VMEM),
    )(xcol, wf, b4, gamma4, beta4)


def conv3x3_tanh_matmul(xcol, w2, b, tile_m=1024):
    M, K = xcol.shape
    N = w2.shape[1]
    if M <= tile_m or M % tile_m != 0:
        return pl.pallas_call(
            _matmul_bias_tanh_kernel,
            out_shape=jax.ShapeDtypeStruct((M, N), jnp.float32),
            in_specs=_vmem_specs(3),
            out_specs=pl.BlockSpec(memory_space=pltpu.MemorySpace.VMEM),
        )(xcol, w2, b)
    return pl.pallas_call(
        _matmul_bias_tanh_kernel,
        out_shape=jax.ShapeDtypeStruct((M, N), jnp.float32),
        grid_spec=pltpu.PrefetchScalarGridSpec(
            num_scalar_prefetch=0,
            grid=(M // tile_m,),
            in_specs=[pl.BlockSpec((tile_m, K), lambda i: (i, 0)),
                      pl.BlockSpec((K, N), lambda i: (0, 0)),
                      pl.BlockSpec((1, N), lambda i: (0, 0))],
            out_specs=pl.BlockSpec((tile_m, N), lambda i: (i, 0))),
        compiler_params=pltpu.CompilerParams(
            dimension_semantics=("parallel",)),
    )(xcol, w2, b)


# ----------------------------- XLA glue (layout only) -----------------------------

def _im2col_3x3(x_nhwc, dtype=jnp.bfloat16):
    # 3x3 window (pad=1) im2col; columns ordered (r, s, ci). Shared by the
    # phase-fused deconv layers and the final 3x3 conv.
    B, H, W, C = x_nhwc.shape
    xp = jnp.pad(x_nhwc.astype(dtype), ((0, 0), (1, 1), (1, 1), (0, 0)))
    cols = [xp[:, r:r + H, s:s + W, :] for r in range(3) for s in range(3)]
    return jnp.concatenate(cols, axis=-1).reshape(B * H * W, 9 * C)


def _pixel_shuffle_2x(y2d, B, H, W, C):
    # [B*H*W, (d, e, C)] -> [B, 2H, 2W, C]  (replaces the 4 strided scatters)
    y = y2d.reshape(B, H, W, 2, 2, C)
    y = jnp.transpose(y, (0, 1, 3, 2, 4, 5))
    return y.reshape(B, 2 * H, 2 * W, C)


# ----------------------------- model -----------------------------

DECODER_CONFIG = {32: [1, 2, 4, 8, 8],
                  64: [1, 2, 4, 8, 8, 8],
                  128: [1, 2, 4, 8, 8, 8, 8],
                  256: [1, 2, 4, 8, 8, 8, 8, 8]}


def init_params(key, image_size, channel_num, kernel_num, z_size):
    # PyTorch-layout params (ConvTranspose2d: [Cin,Cout,4,4], Conv2d: [Cout,Cin,3,3]).
    feature_size = 2
    feature_volume = kernel_num * feature_size ** 2
    cfg = DECODER_CONFIG[image_size]

    n_deconv = len(cfg) - 1
    keys = jax.random.split(key, 2 + 2 * n_deconv + 2)
    ki = iter(range(len(keys)))

    def _init(k, shape, fan_in):
        return jax.random.normal(k, shape, jnp.float32) / jnp.sqrt(float(fan_in))

    params = {
        "proj_w": _init(keys[next(ki)], (z_size, feature_volume), z_size),
        "proj_b": _init(keys[next(ki)], (feature_volume,), z_size),
        "deconvs": [],
    }
    for i in range(n_deconv):
        cin = kernel_num // cfg[i]
        cout = kernel_num // cfg[i + 1]
        fan_in = cin * 4 * 4
        params["deconvs"].append({
            "w": _init(keys[next(ki)], (cin, cout, 4, 4), fan_in),
            "b": _init(keys[next(ki)], (cout,), fan_in),
            "gamma": jnp.ones((cout,), jnp.float32),     # BatchNorm2d affine defaults
            "beta": jnp.zeros((cout,), jnp.float32),
        })
    c_last = kernel_num // cfg[-1]
    params["conv_w"] = _init(keys[next(ki)], (channel_num, c_last, 3, 3), c_last * 9)
    params["conv_b"] = _init(keys[next(ki)], (channel_num,), c_last * 9)
    return params


def _fold_deconv_weight(w_t):
    """ConvTranspose2d(k=4,s=2,p=1) weight [Cin,Cout,4,4] -> matmul form
    [9*Cin, 4*Cout]: a 3x3-window conv whose 4 sub-pixel output phases (d,e)
    are folded into the output (lane) axis, columns ordered (d, e, cout):
      out[2h+d, 2w+e, co] = sum_{r,s,ci} xpad[h+r, w+s, ci] * w_t[ci, co, d+3-2r, e+3-2s]
    """
    cin, cout = int(w_t.shape[0]), int(w_t.shape[1])
    wf = jnp.zeros((3, 3, cin, 2, 2, cout), jnp.float32)
    for r in range(3):
        for d in range(2):
            ky = d + 3 - 2 * r
            if not 0 <= ky <= 3:
                continue
            for s in range(3):
                for e in range(2):
                    kx = e + 3 - 2 * s
                    if not 0 <= kx <= 3:
                        continue
                    wf = wf.at[r, s, :, d, e, :].set(w_t[:, :, ky, kx])
    return wf.reshape(9 * cin, 4 * cout)


def prepare_params(params):
    """One-time conversion of PyTorch-layout weights into fused matmul form."""
    proj_w = params["proj_w"].astype(jnp.float32)            # [Z, 4*kn]
    proj_b = params["proj_b"].astype(jnp.float32)            # [4*kn]
    feature_volume = proj_w.shape[1]
    kn = feature_volume // 4

    deconvs = params["deconvs"]

    # ---- stage 1: projection (+bias) and the first deconv are both linear maps,
    # so compose them once into a dense [Z, 16*C1] weight (columns ordered
    # (h, w, d, e, c) over the 2x2 base pixels, 2x2 phases and C1 channels).
    l0 = deconvs[0]
    wf0 = _fold_deconv_weight(l0["w"])                       # [9*kn, 4*C1] f32
    c1 = int(l0["w"].shape[1])

    def stage1_linear(v):
        # v: [4*kn] flat projection output in PyTorch (c, h, w) order.
        x = v.reshape(1, kn, 2, 2).transpose(0, 2, 3, 1)     # NHWC [1, 2, 2, kn]
        xcol = _im2col_3x3(x, dtype=jnp.float32)             # [4, 9*kn], rows (h, w)
        y = xcol @ wf0                                       # [4, 4*C1], cols (d, e, c)
        return y.reshape(-1)                                 # (h, w, d, e, c)

    j_mat = jax.vmap(stage1_linear)(jnp.eye(feature_volume, dtype=jnp.float32))
    stage1_w = proj_w @ j_mat                                # [Z, 16*C1]
    stage1_b = stage1_linear(proj_b) + jnp.broadcast_to(l0["b"], (16, c1)).reshape(-1)

    prep = {
        "stage1_w": stage1_w.astype(jnp.float32),
        "stage1_b": stage1_b.reshape(1, -1).astype(jnp.float32),
        "stage1_gamma": jnp.broadcast_to(l0["gamma"], (16, c1)).reshape(1, -1).astype(jnp.float32),
        "stage1_beta": jnp.broadcast_to(l0["beta"], (16, c1)).reshape(1, -1).astype(jnp.float32),
        "deconvs": [],
    }

    # ---- remaining deconv layers: phase-folded matmul form, bf16 operands.
    for layer in deconvs[1:]:
        cout = int(layer["w"].shape[1])
        prep["deconvs"].append({
            "w": _fold_deconv_weight(layer["w"]).astype(jnp.bfloat16),
            "b": jnp.tile(layer["b"], 4).reshape(1, 4 * cout).astype(jnp.float32),
            "gamma": jnp.tile(layer["gamma"], 4).reshape(1, 4 * cout).astype(jnp.float32),
            "beta": jnp.tile(layer["beta"], 4).reshape(1, 4 * cout).astype(jnp.float32),
        })

    conv_w = params["conv_w"]                                # [Cout, Cin, 3, 3]
    prep["conv_w"] = jnp.transpose(conv_w, (2, 3, 1, 0)).reshape(
        -1, conv_w.shape[0]).astype(jnp.bfloat16)
    prep["conv_b"] = params["conv_b"].reshape(1, -1).astype(jnp.float32)
    return prep


def tiny_vae_forward(prep, image_syn, eps):
    """image_syn: [B, z_size, 2] (mean, logvar). Returns NCHW float32."""
    mean = image_syn[:, :, 0]
    logvar = image_syn[:, :, 1]
    B = mean.shape[0]

    # Stage 1: reparam + projection + first deconv + BN + LeakyReLU (one kernel).
    y0 = fused_proj_deconv1(mean, logvar, eps, prep["stage1_w"], prep["stage1_b"],
                            prep["stage1_gamma"], prep["stage1_beta"])  # [B, 16*C1] bf16
    c1 = y0.shape[1] // 16
    x = y0.reshape(B, 2, 2, 2, 2, c1)                                   # (b, h, w, d, e, c)
    x = jnp.transpose(x, (0, 1, 3, 2, 4, 5)).reshape(B, 4, 4, c1)       # NHWC 4x4

    # Remaining deconv + BN + LeakyReLU stages (one fused kernel each).
    for layer in prep["deconvs"]:
        Bq, H, W, _ = x.shape
        cout = layer["w"].shape[1] // 4
        xcol = _im2col_3x3(x)                                           # [B*H*W, 9*Cin] bf16
        y2d = fused_deconv_bn_lrelu(xcol, layer["w"], layer["b"],
                                    layer["gamma"], layer["beta"])      # [B*H*W, 4*Cout] bf16
        x = _pixel_shuffle_2x(y2d, Bq, H, W, cout)                      # [B, 2H, 2W, Cout]

    # Final Conv2d(3x3, pad=1) + Tanh.
    Bq, H, W, _ = x.shape
    xcol = _im2col_3x3(x)
    y = conv3x3_tanh_matmul(xcol, prep["conv_w"], prep["conv_b"])       # [B*H*W, C] f32
    return y.reshape(Bq, H, W, -1).transpose(0, 3, 1, 2)                # NCHW


# ----------------------------- main -----------------------------

if __name__ == "__main__":
    image_size = 32
    channel_num = 3
    kernel_num = 32
    z_size = 16
    batch = 2

    key = jax.random.PRNGKey(0)
    k_param, k_in, k_eps = jax.random.split(key, 3)

    params = init_params(k_param, image_size, channel_num, kernel_num, z_size)
    prep = prepare_params(params)          # one-time weight prep/fusion, outside the jit
    image_syn = jax.random.normal(k_in, (batch, z_size, 2), jnp.float32)
    # TODO(synk): PyTorch forward() draws eps via torch.randn (stateful CUDA RNG);
    # here eps is drawn deterministically from a JAX key and passed explicitly.
    # TODO(synk): BatchNorm running-stat updates (training side effect) are not
    # modeled; forward output uses batch statistics exactly as nn.BatchNorm2d in
    # training mode does.
    eps = jax.random.normal(k_eps, (batch, z_size), jnp.float32)

    fwd = jax.jit(tiny_vae_forward)
    out = jax.block_until_ready(fwd(prep, image_syn, eps))

    assert out.shape == (batch, channel_num, image_size, image_size), out.shape
    assert bool(jnp.all(jnp.isfinite(out)))
    assert bool(jnp.all(jnp.abs(out) <= 1.0 + 1e-6))  # tanh range
    print("KERNEL_OK")
</pallas_src>

<mosaic_0001>
module attributes {stable_mosaic.version = 11 : i64} {
  func.func @_stage1_kernel(%arg0: memref<2x16xf32, #tpu.memory_space<vmem>>, %arg1: memref<2x16xf32, #tpu.memory_space<vmem>>, %arg2: memref<2x16xf32, #tpu.memory_space<vmem>>, %arg3: memref<16x256xf32, #tpu.memory_space<vmem>>, %arg4: memref<1x256xf32, #tpu.memory_space<vmem>>, %arg5: memref<1x256xf32, #tpu.memory_space<vmem>>, %arg6: memref<1x256xf32, #tpu.memory_space<vmem>>, %arg7: memref<2x256xbf16, #tpu.memory_space<vmem>>) attributes {dimension_semantics = [], scalar_prefetch = 0 : i64, scratch_operands = 0 : i64, tpu.core_type = #tpu.core_type<tc>} {
    %c0 = arith.constant 0 : index
    %c0_0 = arith.constant 0 : index
    %0 = vector.load %arg2[%c0, %c0_0] : memref<2x16xf32, #tpu.memory_space<vmem>>, vector<2x16xf32>
    %c0_1 = arith.constant 0 : index
    %c0_2 = arith.constant 0 : index
    %1 = vector.load %arg1[%c0_1, %c0_2] : memref<2x16xf32, #tpu.memory_space<vmem>>, vector<2x16xf32>
    %cst = arith.constant 5.000000e-01 : f32
    %2 = vector.broadcast %cst : f32 to vector<2x16xf32>
    %3 = arith.mulf %2, %1 : vector<2x16xf32>
    %4 = math.exp %3 : vector<2x16xf32>
    %5 = arith.mulf %0, %4 : vector<2x16xf32>
    %c0_3 = arith.constant 0 : index
    %c0_4 = arith.constant 0 : index
    %6 = vector.load %arg0[%c0_3, %c0_4] : memref<2x16xf32, #tpu.memory_space<vmem>>, vector<2x16xf32>
    %7 = arith.addf %5, %6 : vector<2x16xf32>
    %c0_5 = arith.constant 0 : index
    %c0_6 = arith.constant 0 : index
    %8 = vector.load %arg3[%c0_5, %c0_6] : memref<16x256xf32, #tpu.memory_space<vmem>>, vector<16x256xf32>
    %cst_7 = arith.constant dense<0.000000e+00> : vector<2x256xf32>
    %9 = tpu.matmul %7, %8, %cst_7 {dimension_numbers = #tpu.dot_dimension_numbers<[1], [0], [0], [1], [0, 0, 1, 1], [], []>} : vector<2x16xf32>, vector<16x256xf32>, vector<2x256xf32> -> vector<2x256xf32>
    %c0_8 = arith.constant 0 : index
    %c0_9 = arith.constant 0 : index
    %10 = vector.load %arg4[%c0_8, %c0_9] : memref<1x256xf32, #tpu.memory_space<vmem>>, vector<1x256xf32>
    %11 = vector.broadcast %10 : vector<1x256xf32> to vector<2x256xf32>
    %12 = arith.addf %9, %11 : vector<2x256xf32>
    %c0_10 = arith.constant 0 : index
    %c0_11 = arith.constant 0 : index
    %13 = vector.load %arg5[%c0_10, %c0_11] : memref<1x256xf32, #tpu.memory_space<vmem>>, vector<1x256xf32>
    %c0_12 = arith.constant 0 : index
    %c0_13 = arith.constant 0 : index
    %14 = vector.load %arg6[%c0_12, %c0_13] : memref<1x256xf32, #tpu.memory_space<vmem>>, vector<1x256xf32>
    %cst_14 = arith.constant dense<0.000000e+00> : vector<256xf32>
    %15 = vector.multi_reduction <add>, %12, %cst_14 [0] : vector<2x256xf32> to vector<256xf32>
    %16 = vector.shape_cast %15 : vector<256xf32> to vector<1x256xf32>
    %17 = arith.mulf %12, %12 : vector<2x256xf32>
    %cst_15 = arith.constant dense<0.000000e+00> : vector<256xf32>
    %18 = vector.multi_reduction <add>, %17, %cst_15 [0] : vector<2x256xf32> to vector<256xf32>
    %19 = vector.shape_cast %18 : vector<256xf32> to vector<1x256xf32>
    %20 = vector.extract_strided_slice %16 {offsets = [0, 0], sizes = [1, 16], strides = [1, 1]} : vector<1x256xf32> to vector<1x16xf32>
    %21 = vector.extract_strided_slice %19 {offsets = [0, 0], sizes = [1, 16], strides = [1, 1]} : vector<1x256xf32> to vector<1x16xf32>
    %22 = vector.extract_strided_slice %16 {offsets = [0, 16], sizes = [1, 16], strides = [1, 1]} : vector<1x256xf32> to vector<1x16xf32>
    %23 = arith.addf %20, %22 : vector<1x16xf32>
    %24 = vector.extract_strided_slice %19 {offsets = [0, 16], sizes = [1, 16], strides = [1, 1]} : vector<1x256xf32> to vector<1x16xf32>
    %25 = arith.addf %21, %24 : vector<1x16xf32>
    %26 = vector.extract_strided_slice %16 {offsets = [0, 32], sizes = [1, 16], strides = [1, 1]} : vector<1x256xf32> to vector<1x16xf32>
    %27 = arith.addf %23, %26 : vector<1x16xf32>
    %28 = vector.extract_strided_slice %19 {offsets = [0, 32], sizes = [1, 16], strides = [1, 1]} : vector<1x256xf32> to vector<1x16xf32>
    %29 = arith.addf %25, %28 : vector<1x16xf32>
    %30 = vector.extract_strided_slice %16 {offsets = [0, 48], sizes = [1, 16], strides = [1, 1]} : vector<1x256xf32> to vector<1x16xf32>
    %31 = arith.addf %27, %30 : vector<1x16xf32>
    %32 = vector.extract_strided_slice %19 {offsets = [0, 48], sizes = [1, 16], strides = [1, 1]} : vector<1x256xf32> to vector<1x16xf32>
    %33 = arith.addf %29, %32 : vector<1x16xf32>
    %34 = vector.extract_strided_slice %16 {offsets = [0, 64], sizes = [1, 16], strides = [1, 1]} : vector<1x256xf32> to vector<1x16xf32>
    %35 = arith.addf %31, %34 : vector<1x16xf32>
    %36 = vector.extract_strided_slice %19 {offsets = [0, 64], sizes = [1, 16], strides = [1, 1]} : vector<1x256xf32> to vector<1x16xf32>
    %37 = arith.addf %33, %36 : vector<1x16xf32>
    %38 = vector.extract_strided_slice %16 {offsets = [0, 80], sizes = [1, 16], strides = [1, 1]} : vector<1x256xf32> to vector<1x16xf32>
    %39 = arith.addf %35, %38 : vector<1x16xf32>
    %40 = vector.extract_strided_slice %19 {offsets = [0, 80], sizes = [1, 16], strides = [1, 1]} : vector<1x256xf32> to vector<1x16xf32>
    %41 = arith.addf %37, %40 : vector<1x16xf32>
    %42 = vector.extract_strided_slice %16 {offsets = [0, 96], sizes = [1, 16], strides = [1, 1]} : vector<1x256xf32> to vector<1x16xf32>
    %43 = arith.addf %39, %42 : vector<1x16xf32>
    %44 = vector.extract_strided_slice %19 {offsets = [0, 96], sizes = [1, 16], strides = [1, 1]} : vector<1x256xf32> to vector<1x16xf32>
    %45 = arith.addf %41, %44 : vector<1x16xf32>
    %46 = vector.extract_strided_slice %16 {offsets = [0, 112], sizes = [1, 16], strides = [1, 1]} : vector<1x256xf32> to vector<1x16xf32>
    %47 = arith.addf %43, %46 : vector<1x16xf32>
    %48 = vector.extract_strided_slice %19 {offsets = [0, 112], sizes = [1, 16], strides = [1, 1]} : vector<1x256xf32> to vector<1x16xf32>
    %49 = arith.addf %45, %48 : vector<1x16xf32>
    %50 = vector.extract_strided_slice %16 {offsets = [0, 128], sizes = [1, 16], strides = [1, 1]} : vector<1x256xf32> to vector<1x16xf32>
    %51 = arith.addf %47, %50 : vector<1x16xf32>
    %52 = vector.extract_strided_slice %19 {offsets = [0, 128], sizes = [1, 16], strides = [1, 1]} : vector<1x256xf32> to vector<1x16xf32>
    %53 = arith.addf %49, %52 : vector<1x16xf32>
    %54 = vector.extract_strided_slice %16 {offsets = [0, 144], sizes = [1, 16], strides = [1, 1]} : vector<1x256xf32> to vector<1x16xf32>
    %55 = arith.addf %51, %54 : vector<1x16xf32>
    %56 = vector.extract_strided_slice %19 {offsets = [0, 144], sizes = [1, 16], strides = [1, 1]} : vector<1x256xf32> to vector<1x16xf32>
    %57 = arith.addf %53, %56 : vector<1x16xf32>
    %58 = vector.extract_strided_slice %16 {offsets = [0, 160], sizes = [1, 16], strides = [1, 1]} : vector<1x256xf32> to vector<1x16xf32>
    %59 = arith.addf %55, %58 : vector<1x16xf32>
    %60 = vector.extract_strided_slice %19 {offsets = [0, 160], sizes = [1, 16], strides = [1, 1]} : vector<1x256xf32> to vector<1x16xf32>
    %61 = arith.addf %57, %60 : vector<1x16xf32>
    %62 = vector.extract_strided_slice %16 {offsets = [0, 176], sizes = [1, 16], strides = [1, 1]} : vector<1x256xf32> to vector<1x16xf32>
    %63 = arith.addf %59, %62 : vector<1x16xf32>
    %64 = vector.extract_strided_slice %19 {offsets = [0, 176], sizes = [1, 16], strides = [1, 1]} : vector<1x256xf32> to vector<1x16xf32>
    %65 = arith.addf %61, %64 : vector<1x16xf32>
    %66 = vector.extract_strided_slice %16 {offsets = [0, 192], sizes = [1, 16], strides = [1, 1]} : vector<1x256xf32> to vector<1x16xf32>
    %67 = arith.addf %63, %66 : vector<1x16xf32>
    %68 = vector.extract_strided_slice %19 {offsets = [0, 192], sizes = [1, 16], strides = [1, 1]} : vector<1x256xf32> to vector<1x16xf32>
    %69 = arith.addf %65, %68 : vector<1x16xf32>
    %70 = vector.extract_strided_slice %16 {offsets = [0, 208], sizes = [1, 16], strides = [1, 1]} : vector<1x256xf32> to vector<1x16xf32>
    %71 = arith.addf %67, %70 : vector<1x16xf32>
    %72 = vector.extract_strided_slice %19 {offsets = [0, 208], sizes = [1, 16], strides = [1, 1]} : vector<1x256xf32> to vector<1x16xf32>
    %73 = arith.addf %69, %72 : vector<1x16xf32>
    %74 = vector.extract_strided_slice %16 {offsets = [0, 224], sizes = [1, 16], strides = [1, 1]} : vector<1x256xf32> to vector<1x16xf32>
    %75 = arith.addf %71, %74 : vector<1x16xf32>
    %76 = vector.extract_strided_slice %19 {offsets = [0, 224], sizes = [1, 16], strides = [1, 1]} : vector<1x256xf32> to vector<1x16xf32>
    %77 = arith.addf %73, %76 : vector<1x16xf32>
    %78 = vector.extract_strided_slice %16 {offsets = [0, 240], sizes = [1, 16], strides = [1, 1]} : vector<1x256xf32> to vector<1x16xf32>
    %79 = arith.addf %75, %78 : vector<1x16xf32>
    %80 = vector.extract_strided_slice %19 {offsets = [0, 240], sizes = [1, 16], strides = [1, 1]} : vector<1x256xf32> to vector<1x16xf32>
    %81 = arith.addf %77, %80 : vector<1x16xf32>
    %cst_16 = arith.constant 3.200000e+01 : f32
    %82 = vector.broadcast %cst_16 : f32 to vector<1x16xf32>
    %83 = arith.divf %79, %82 : vector<1x16xf32>
    %cst_17 = arith.constant 3.200000e+01 : f32
    %84 = vector.broadcast %cst_17 : f32 to vector<1x16xf32>
    %85 = arith.divf %81, %84 : vector<1x16xf32>
    %86 = arith.mulf %83, %83 : vector<1x16xf32>
    %87 = arith.subf %85, %86 : vector<1x16xf32>
    %cst_18 = arith.constant 9.99999974E-6 : f32
    %88 = vector.broadcast %cst_18 : f32 to vector<1x16xf32>
    %89 = arith.addf %87, %88 : vector<1x16xf32>
    %90 = math.rsqrt %89 : vector<1x16xf32>
    %91 = tpu.concatenate %83, %83, %83, %83, %83, %83, %83, %83, %83, %83, %83, %83, %83, %83, %83, %83 in 1 : vector<1x16xf32>, vector<1x16xf32>, vector<1x16xf32>, vector<1x16xf32>, vector<1x16xf32>, vector<1x16xf32>, vector<1x16xf32>, vector<1x16xf32>, vector<1x16xf32>, vector<1x16xf32>, vector<1x16xf32>, vector<1x16xf32>, vector<1x16xf32>, vector<1x16xf32>, vector<1x16xf32>, vector<1x16xf32> -> vector<1x256xf32>
    %92 = tpu.concatenate %90, %90, %90, %90, %90, %90, %90, %90, %90, %90, %90, %90, %90, %90, %90, %90 in 1 : vector<1x16xf32>, vector<1x16xf32>, vector<1x16xf32>, vector<1x16xf32>, vector<1x16xf32>, vector<1x16xf32>, vector<1x16xf32>, vector<1x16xf32>, vector<1x16xf32>, vector<1x16xf32>, vector<1x16xf32>, vector<1x16xf32>, vector<1x16xf32>, vector<1x16xf32>, vector<1x16xf32>, vector<1x16xf32> -> vector<1x256xf32>
    %93 = vector.broadcast %91 : vector<1x256xf32> to vector<2x256xf32>
    %94 = arith.subf %12, %93 : vector<2x256xf32>
    %95 = vector.broadcast %92 : vector<1x256xf32> to vector<2x256xf32>
    %96 = arith.mulf %94, %95 : vector<2x256xf32>
    %97 = vector.broadcast %13 : vector<1x256xf32> to vector<2x256xf32>
    %98 = arith.mulf %96, %97 : vector<2x256xf32>
    %99 = vector.broadcast %14 : vector<1x256xf32> to vector<2x256xf32>
    %100 = arith.addf %98, %99 : vector<2x256xf32>
    %cst_19 = arith.constant 0.000000e+00 : f32
    %101 = vector.broadcast %cst_19 : f32 to vector<2x256xf32>
    %102 = arith.cmpf oge, %100, %101 : vector<2x256xf32>
    %cst_20 = arith.constant 0.00999999977 : f32
    %103 = vector.broadcast %cst_20 : f32 to vector<2x256xf32>
    %104 = arith.mulf %103, %100 : vector<2x256xf32>
    %105 = arith.select %102, %100, %104 : vector<2x256xi1>, vector<2x256xf32>
    %106 = arith.truncf %105 : vector<2x256xf32> to vector<2x256xbf16>
    %c0_21 = arith.constant 0 : index
    %c0_22 = arith.constant 0 : index
    %107 = vector.load %arg7[%c0_21, %c0_22] : memref<2x256xbf16, #tpu.memory_space<vmem>>, vector<2x256xbf16>
    tpu.vector_store %arg7[%c0_21, %c0_22], %106 {strides = array<i32>} : memref<2x256xbf16, #tpu.memory_space<vmem>>, vector<2x256xbf16>,
    return
  }
}

module attributes {stable_mosaic.version = 11 : i64} {
  func.func @_deconv_bn_lrelu_kernel(%arg0: memref<32x144xbf16, #tpu.memory_space<vmem>>, %arg1: memref<144x32xbf16, #tpu.memory_space<vmem>>, %arg2: memref<1x32xf32, #tpu.memory_space<vmem>>, %arg3: memref<1x32xf32, #tpu.memory_space<vmem>>, %arg4: memref<1x32xf32, #tpu.memory_space<vmem>>, %arg5: memref<32x32xbf16, #tpu.memory_space<vmem>>) attributes {dimension_semantics = [], scalar_prefetch = 0 : i64, scratch_operands = 0 : i64, tpu.core_type = #tpu.core_type<tc>} {
    %c0 = arith.constant 0 : index
    %c0_0 = arith.constant 0 : index
    %0 = vector.load %arg0[%c0, %c0_0] : memref<32x144xbf16, #tpu.memory_space<vmem>>, vector<32x144xbf16>
    %c0_1 = arith.constant 0 : index
    %c0_2 = arith.constant 0 : index
    %1 = vector.load %arg1[%c0_1, %c0_2] : memref<144x32xbf16, #tpu.memory_space<vmem>>, vector<144x32xbf16>
    %cst = arith.constant dense<0.000000e+00> : vector<32x32xf32>
    %2 = tpu.matmul %0, %1, %cst {dimension_numbers = #tpu.dot_dimension_numbers<[1], [0], [0], [1], [0, 0, 1, 1], [], []>} : vector<32x144xbf16>, vector<144x32xbf16>, vector<32x32xf32> -> vector<32x32xf32>
    %c0_3 = arith.constant 0 : index
    %c0_4 = arith.constant 0 : index
    %3 = vector.load %arg2[%c0_3, %c0_4] : memref<1x32xf32, #tpu.memory_space<vmem>>, vector<1x32xf32>
    %4 = vector.broadcast %3 : vector<1x32xf32> to vector<32x32xf32>
    %5 = arith.addf %2, %4 : vector<32x32xf32>
    %c0_5 = arith.constant 0 : index
    %c0_6 = arith.constant 0 : index
    %6 = vector.load %arg3[%c0_5, %c0_6] : memref<1x32xf32, #tpu.memory_space<vmem>>, vector<1x32xf32>
    %c0_7 = arith.constant 0 : index
    %c0_8 = arith.constant 0 : index
    %7 = vector.load %arg4[%c0_7, %c0_8] : memref<1x32xf32, #tpu.memory_space<vmem>>, vector<1x32xf32>
    %cst_9 = arith.constant dense<0.000000e+00> : vector<32xf32>
    %8 = vector.multi_reduction <add>, %5, %cst_9 [0] : vector<32x32xf32> to vector<32xf32>
    %9 = vector.shape_cast %8 : vector<32xf32> to vector<1x32xf32>
    %10 = arith.mulf %5, %5 : vector<32x32xf32>
    %cst_10 = arith.constant dense<0.000000e+00> : vector<32xf32>
    %11 = vector.multi_reduction <add>, %10, %cst_10 [0] : vector<32x32xf32> to vector<32xf32>
    %12 = vector.shape_cast %11 : vector<32xf32> to vector<1x32xf32>
    %13 = vector.extract_strided_slice %9 {offsets = [0, 0], sizes = [1, 8], strides = [1, 1]} : vector<1x32xf32> to vector<1x8xf32>
    %14 = vector.extract_strided_slice %12 {offsets = [0, 0], sizes = [1, 8], strides = [1, 1]} : vector<1x32xf32> to vector<1x8xf32>
    %15 = vector.extract_strided_slice %9 {offsets = [0, 8], sizes = [1, 8], strides = [1, 1]} : vector<1x32xf32> to vector<1x8xf32>
    %16 = arith.addf %13, %15 : vector<1x8xf32>
    %17 = vector.extract_strided_slice %12 {offsets = [0, 8], sizes = [1, 8], strides = [1, 1]} : vector<1x32xf32> to vector<1x8xf32>
    %18 = arith.addf %14, %17 : vector<1x8xf32>
    %19 = vector.extract_strided_slice %9 {offsets = [0, 16], sizes = [1, 8], strides = [1, 1]} : vector<1x32xf32> to vector<1x8xf32>
    %20 = arith.addf %16, %19 : vector<1x8xf32>
    %21 = vector.extract_strided_slice %12 {offsets = [0, 16], sizes = [1, 8], strides = [1, 1]} : vector<1x32xf32> to vector<1x8xf32>
    %22 = arith.addf %18, %21 : vector<1x8xf32>
    %23 = vector.extract_strided_slice %9 {offsets = [0, 24], sizes = [1, 8], strides = [1, 1]} : vector<1x32xf32> to vector<1x8xf32>
    %24 = arith.addf %20, %23 : vector<1x8xf32>
    %25 = vector.extract_strided_slice %12 {offsets = [0, 24], sizes = [1, 8], strides = [1, 1]} : vector<1x32xf32> to vector<1x8xf32>
    %26 = arith.addf %22, %25 : vector<1x8xf32>
    %cst_11 = arith.constant 1.280000e+02 : f32
    %27 = vector.broadcast %cst_11 : f32 to vector<1x8xf32>
    %28 = arith.divf %24, %27 : vector<1x8xf32>
    %cst_12 = arith.constant 1.280000e+02 : f32
    %29 = vector.broadcast %cst_12 : f32 to vector<1x8xf32>
    %30 = arith.divf %26, %29 : vector<1x8xf32>
    %31 = arith.mulf %28, %28 : vector<1x8xf32>
    %32 = arith.subf %30, %31 : vector<1x8xf32>
    %cst_13 = arith.constant 9.99999974E-6 : f32
    %33 = vector.broadcast %cst_13 : f32 to vector<1x8xf32>
    %34 = arith.addf %32, %33 : vector<1x8xf32>
    %35 = math.rsqrt %34 : vector<1x8xf32>
    %36 = tpu.concatenate %28, %28, %28, %28 in 1 : vector<1x8xf32>, vector<1x8xf32>, vector<1x8xf32>, vector<1x8xf32> -> vector<1x32xf32>
    %37 = tpu.concatenate %35, %35, %35, %35 in 1 : vector<1x8xf32>, vector<1x8xf32>, vector<1x8xf32>, vector<1x8xf32> -> vector<1x32xf32>
    %38 = vector.broadcast %36 : vector<1x32xf32> to vector<32x32xf32>
    %39 = arith.subf %5, %38 : vector<32x32xf32>
    %40 = vector.broadcast %37 : vector<1x32xf32> to vector<32x32xf32>
    %41 = arith.mulf %39, %40 : vector<32x32xf32>
    %42 = vector.broadcast %6 : vector<1x32xf32> to vector<32x32xf32>
    %43 = arith.mulf %41, %42 : vector<32x32xf32>
    %44 = vector.broadcast %7 : vector<1x32xf32> to vector<32x32xf32>
    %45 = arith.addf %43, %44 : vector<32x32xf32>
    %cst_14 = arith.constant 0.000000e+00 : f32
    %46 = vector.broadcast %cst_14 : f32 to vector<32x32xf32>
    %47 = arith.cmpf oge, %45, %46 : vector<32x32xf32>
    %cst_15 = arith.constant 0.00999999977 : f32
    %48 = vector.broadcast %cst_15 : f32 to vector<32x32xf32>
    %49 = arith.mulf %48, %45 : vector<32x32xf32>
    %50 = arith.select %47, %45, %49 : vector<32x32xi1>, vector<32x32xf32>
    %51 = arith.truncf %50 : vector<32x32xf32> to vector<32x32xbf16>
    %c0_16 = arith.constant 0 : index
    %c0_17 = arith.constant 0 : index
    %52 = vector.load %arg5[%c0_16, %c0_17] : memref<32x32xbf16, #tpu.memory_space<vmem>>, vector<32x32xbf16>
    tpu.vector_store %arg5[%c0_16, %c0_17], %51 {strides = array<i32>} : memref<32x32xbf16, #tpu.memory_space<vmem>>, vector<32x32xbf16>,
    return
  }
}

module attributes {stable_mosaic.version = 11 : i64} {
  func.func @_deconv_bn_lrelu_kernel(%arg0: memref<128x72xbf16, #tpu.memory_space<vmem>>, %arg1: memref<72x16xbf16, #tpu.memory_space<vmem>>, %arg2: memref<1x16xf32, #tpu.memory_space<vmem>>, %arg3: memref<1x16xf32, #tpu.memory_space<vmem>>, %arg4: memref<1x16xf32, #tpu.memory_space<vmem>>, %arg5: memref<128x16xbf16, #tpu.memory_space<vmem>>) attributes {dimension_semantics = [], scalar_prefetch = 0 : i64, scratch_operands = 0 : i64, tpu.core_type = #tpu.core_type<tc>} {
    %c0 = arith.constant 0 : index
    %c0_0 = arith.constant 0 : index
    %0 = vector.load %arg0[%c0, %c0_0] : memref<128x72xbf16, #tpu.memory_space<vmem>>, vector<128x72xbf16>
    %c0_1 = arith.constant 0 : index
    %c0_2 = arith.constant 0 : index
    %1 = vector.load %arg1[%c0_1, %c0_2] : memref<72x16xbf16, #tpu.memory_space<vmem>>, vector<72x16xbf16>
    %cst = arith.constant dense<0.000000e+00> : vector<128x16xf32>
    %2 = tpu.matmul %0, %1, %cst {dimension_numbers = #tpu.dot_dimension_numbers<[1], [0], [0], [1], [0, 0, 1, 1], [], []>} : vector<128x72xbf16>, vector<72x16xbf16>, vector<128x16xf32> -> vector<128x16xf32>
    %c0_3 = arith.constant 0 : index
    %c0_4 = arith.constant 0 : index
    %3 = vector.load %arg2[%c0_3, %c0_4] : memref<1x16xf32, #tpu.memory_space<vmem>>, vector<1x16xf32>
    %4 = vector.broadcast %3 : vector<1x16xf32> to vector<128x16xf32>
    %5 = arith.addf %2, %4 : vector<128x16xf32>
    %c0_5 = arith.constant 0 : index
    %c0_6 = arith.constant 0 : index
    %6 = vector.load %arg3[%c0_5, %c0_6] : memref<1x16xf32, #tpu.memory_space<vmem>>, vector<1x16xf32>
    %c0_7 = arith.constant 0 : index
    %c0_8 = arith.constant 0 : index
    %7 = vector.load %arg4[%c0_7, %c0_8] : memref<1x16xf32, #tpu.memory_space<vmem>>, vector<1x16xf32>
    %cst_9 = arith.constant dense<0.000000e+00> : vector<16xf32>
    %8 = vector.multi_reduction <add>, %5, %cst_9 [0] : vector<128x16xf32> to vector<16xf32>
    %9 = vector.shape_cast %8 : vector<16xf32> to vector<1x16xf32>
    %10 = arith.mulf %5, %5 : vector<128x16xf32>
    %cst_10 = arith.constant dense<0.000000e+00> : vector<16xf32>
    %11 = vector.multi_reduction <add>, %10, %cst_10 [0] : vector<128x16xf32> to vector<16xf32>
    %12 = vector.shape_cast %11 : vector<16xf32> to vector<1x16xf32>
    %13 = vector.extract_strided_slice %9 {offsets = [0, 0], sizes = [1, 4], strides = [1, 1]} : vector<1x16xf32> to vector<1x4xf32>
    %14 = vector.extract_strided_slice %12 {offsets = [0, 0], sizes = [1, 4], strides = [1, 1]} : vector<1x16xf32> to vector<1x4xf32>
    %15 = vector.extract_strided_slice %9 {offsets = [0, 4], sizes = [1, 4], strides = [1, 1]} : vector<1x16xf32> to vector<1x4xf32>
    %16 = arith.addf %13, %15 : vector<1x4xf32>
    %17 = vector.extract_strided_slice %12 {offsets = [0, 4], sizes = [1, 4], strides = [1, 1]} : vector<1x16xf32> to vector<1x4xf32>
    %18 = arith.addf %14, %17 : vector<1x4xf32>
    %19 = vector.extract_strided_slice %9 {offsets = [0, 8], sizes = [1, 4], strides = [1, 1]} : vector<1x16xf32> to vector<1x4xf32>
    %20 = arith.addf %16, %19 : vector<1x4xf32>
    %21 = vector.extract_strided_slice %12 {offsets = [0, 8], sizes = [1, 4], strides = [1, 1]} : vector<1x16xf32> to vector<1x4xf32>
    %22 = arith.addf %18, %21 : vector<1x4xf32>
    %23 = vector.extract_strided_slice %9 {offsets = [0, 12], sizes = [1, 4], strides = [1, 1]} : vector<1x16xf32> to vector<1x4xf32>
    %24 = arith.addf %20, %23 : vector<1x4xf32>
    %25 = vector.extract_strided_slice %12 {offsets = [0, 12], sizes = [1, 4], strides = [1, 1]} : vector<1x16xf32> to vector<1x4xf32>
    %26 = arith.addf %22, %25 : vector<1x4xf32>
    %cst_11 = arith.constant 5.120000e+02 : f32
    %27 = vector.broadcast %cst_11 : f32 to vector<1x4xf32>
    %28 = arith.divf %24, %27 : vector<1x4xf32>
    %cst_12 = arith.constant 5.120000e+02 : f32
    %29 = vector.broadcast %cst_12 : f32 to vector<1x4xf32>
    %30 = arith.divf %26, %29 : vector<1x4xf32>
    %31 = arith.mulf %28, %28 : vector<1x4xf32>
    %32 = arith.subf %30, %31 : vector<1x4xf32>
    %cst_13 = arith.constant 9.99999974E-6 : f32
    %33 = vector.broadcast %cst_13 : f32 to vector<1x4xf32>
    %34 = arith.addf %32, %33 : vector<1x4xf32>
    %35 = math.rsqrt %34 : vector<1x4xf32>
    %36 = tpu.concatenate %28, %28, %28, %28 in 1 : vector<1x4xf32>, vector<1x4xf32>, vector<1x4xf32>, vector<1x4xf32> -> vector<1x16xf32>
    %37 = tpu.concatenate %35, %35, %35, %35 in 1 : vector<1x4xf32>, vector<1x4xf32>, vector<1x4xf32>, vector<1x4xf32> -> vector<1x16xf32>
    %38 = vector.broadcast %36 : vector<1x16xf32> to vector<128x16xf32>
    %39 = arith.subf %5, %38 : vector<128x16xf32>
    %40 = vector.broadcast %37 : vector<1x16xf32> to vector<128x16xf32>
    %41 = arith.mulf %39, %40 : vector<128x16xf32>
    %42 = vector.broadcast %6 : vector<1x16xf32> to vector<128x16xf32>
    %43 = arith.mulf %41, %42 : vector<128x16xf32>
    %44 = vector.broadcast %7 : vector<1x16xf32> to vector<128x16xf32>
    %45 = arith.addf %43, %44 : vector<128x16xf32>
    %cst_14 = arith.constant 0.000000e+00 : f32
    %46 = vector.broadcast %cst_14 : f32 to vector<128x16xf32>
    %47 = arith.cmpf oge, %45, %46 : vector<128x16xf32>
    %cst_15 = arith.constant 0.00999999977 : f32
    %48 = vector.broadcast %cst_15 : f32 to vector<128x16xf32>
    %49 = arith.mulf %48, %45 : vector<128x16xf32>
    %50 = arith.select %47, %45, %49 : vector<128x16xi1>, vector<128x16xf32>
    %51 = arith.truncf %50 : vector<128x16xf32> to vector<128x16xbf16>
    %c0_16 = arith.constant 0 : index
    %c0_17 = arith.constant 0 : index
    %52 = vector.load %arg5[%c0_16, %c0_17] : memref<128x16xbf16, #tpu.memory_space<vmem>>, vector<128x16xbf16>
    tpu.vector_store %arg5[%c0_16, %c0_17], %51 {strides = array<i32>} : memref<128x16xbf16, #tpu.memory_space<vmem>>, vector<128x16xbf16>,
    return
  }
}

module attributes {stable_mosaic.version = 11 : i64} {
  func.func @_deconv_bn_lrelu_kernel(%arg0: memref<512x36xbf16, #tpu.memory_space<vmem>>, %arg1: memref<36x16xbf16, #tpu.memory_space<vmem>>, %arg2: memref<1x16xf32, #tpu.memory_space<vmem>>, %arg3: memref<1x16xf32, #tpu.memory_space<vmem>>, %arg4: memref<1x16xf32, #tpu.memory_space<vmem>>, %arg5: memref<512x16xbf16, #tpu.memory_space<vmem>>) attributes {dimension_semantics = [], scalar_prefetch = 0 : i64, scratch_operands = 0 : i64, tpu.core_type = #tpu.core_type<tc>} {
    %c0 = arith.constant 0 : index
    %c0_0 = arith.constant 0 : index
    %0 = vector.load %arg0[%c0, %c0_0] : memref<512x36xbf16, #tpu.memory_space<vmem>>, vector<512x36xbf16>
    %c0_1 = arith.constant 0 : index
    %c0_2 = arith.constant 0 : index
    %1 = vector.load %arg1[%c0_1, %c0_2] : memref<36x16xbf16, #tpu.memory_space<vmem>>, vector<36x16xbf16>
    %cst = arith.constant dense<0.000000e+00> : vector<512x16xf32>
    %2 = tpu.matmul %0, %1, %cst {dimension_numbers = #tpu.dot_dimension_numbers<[1], [0], [0], [1], [0, 0, 1, 1], [], []>} : vector<512x36xbf16>, vector<36x16xbf16>, vector<512x16xf32> -> vector<512x16xf32>
    %c0_3 = arith.constant 0 : index
    %c0_4 = arith.constant 0 : index
    %3 = vector.load %arg2[%c0_3, %c0_4] : memref<1x16xf32, #tpu.memory_space<vmem>>, vector<1x16xf32>
    %4 = vector.broadcast %3 : vector<1x16xf32> to vector<512x16xf32>
    %5 = arith.addf %2, %4 : vector<512x16xf32>
    %c0_5 = arith.constant 0 : index
    %c0_6 = arith.constant 0 : index
    %6 = vector.load %arg3[%c0_5, %c0_6] : memref<1x16xf32, #tpu.memory_space<vmem>>, vector<1x16xf32>
    %c0_7 = arith.constant 0 : index
    %c0_8 = arith.constant 0 : index
    %7 = vector.load %arg4[%c0_7, %c0_8] : memref<1x16xf32, #tpu.memory_space<vmem>>, vector<1x16xf32>
    %cst_9 = arith.constant dense<0.000000e+00> : vector<16xf32>
    %8 = vector.multi_reduction <add>, %5, %cst_9 [0] : vector<512x16xf32> to vector<16xf32>
    %9 = vector.shape_cast %8 : vector<16xf32> to vector<1x16xf32>
    %10 = arith.mulf %5, %5 : vector<512x16xf32>
    %cst_10 = arith.constant dense<0.000000e+00> : vector<16xf32>
    %11 = vector.multi_reduction <add>, %10, %cst_10 [0] : vector<512x16xf32> to vector<16xf32>
    %12 = vector.shape_cast %11 : vector<16xf32> to vector<1x16xf32>
    %13 = vector.extract_strided_slice %9 {offsets = [0, 0], sizes = [1, 4], strides = [1, 1]} : vector<1x16xf32> to vector<1x4xf32>
    %14 = vector.extract_strided_slice %12 {offsets = [0, 0], sizes = [1, 4], strides = [1, 1]} : vector<1x16xf32> to vector<1x4xf32>
    %15 = vector.extract_strided_slice %9 {offsets = [0, 4], sizes = [1, 4], strides = [1, 1]} : vector<1x16xf32> to vector<1x4xf32>
    %16 = arith.addf %13, %15 : vector<1x4xf32>
    %17 = vector.extract_strided_slice %12 {offsets = [0, 4], sizes = [1, 4], strides = [1, 1]} : vector<1x16xf32> to vector<1x4xf32>
    %18 = arith.addf %14, %17 : vector<1x4xf32>
    %19 = vector.extract_strided_slice %9 {offsets = [0, 8], sizes = [1, 4], strides = [1, 1]} : vector<1x16xf32> to vector<1x4xf32>
    %20 = arith.addf %16, %19 : vector<1x4xf32>
    %21 = vector.extract_strided_slice %12 {offsets = [0, 8], sizes = [1, 4], strides = [1, 1]} : vector<1x16xf32> to vector<1x4xf32>
    %22 = arith.addf %18, %21 : vector<1x4xf32>
    %23 = vector.extract_strided_slice %9 {offsets = [0, 12], sizes = [1, 4], strides = [1, 1]} : vector<1x16xf32> to vector<1x4xf32>
    %24 = arith.addf %20, %23 : vector<1x4xf32>
    %25 = vector.extract_strided_slice %12 {offsets = [0, 12], sizes = [1, 4], strides = [1, 1]} : vector<1x16xf32> to vector<1x4xf32>
    %26 = arith.addf %22, %25 : vector<1x4xf32>
    %cst_11 = arith.constant 2.048000e+03 : f32
    %27 = vector.broadcast %cst_11 : f32 to vector<1x4xf32>
    %28 = arith.divf %24, %27 : vector<1x4xf32>
    %cst_12 = arith.constant 2.048000e+03 : f32
    %29 = vector.broadcast %cst_12 : f32 to vector<1x4xf32>
    %30 = arith.divf %26, %29 : vector<1x4xf32>
    %31 = arith.mulf %28, %28 : vector<1x4xf32>
    %32 = arith.subf %30, %31 : vector<1x4xf32>
    %cst_13 = arith.constant 9.99999974E-6 : f32
    %33 = vector.broadcast %cst_13 : f32 to vector<1x4xf32>
    %34 = arith.addf %32, %33 : vector<1x4xf32>
    %35 = math.rsqrt %34 : vector<1x4xf32>
    %36 = tpu.concatenate %28, %28, %28, %28 in 1 : vector<1x4xf32>, vector<1x4xf32>, vector<1x4xf32>, vector<1x4xf32> -> vector<1x16xf32>
    %37 = tpu.concatenate %35, %35, %35, %35 in 1 : vector<1x4xf32>, vector<1x4xf32>, vector<1x4xf32>, vector<1x4xf32> -> vector<1x16xf32>
    %38 = vector.broadcast %36 : vector<1x16xf32> to vector<512x16xf32>
    %39 = arith.subf %5, %38 : vector<512x16xf32>
    %40 = vector.broadcast %37 : vector<1x16xf32> to vector<512x16xf32>
    %41 = arith.mulf %39, %40 : vector<512x16xf32>
    %42 = vector.broadcast %6 : vector<1x16xf32> to vector<512x16xf32>
    %43 = arith.mulf %41, %42 : vector<512x16xf32>
    %44 = vector.broadcast %7 : vector<1x16xf32> to vector<512x16xf32>
    %45 = arith.addf %43, %44 : vector<512x16xf32>
    %cst_14 = arith.constant 0.000000e+00 : f32
    %46 = vector.broadcast %cst_14 : f32 to vector<512x16xf32>
    %47 = arith.cmpf oge, %45, %46 : vector<512x16xf32>
    %cst_15 = arith.constant 0.00999999977 : f32
    %48 = vector.broadcast %cst_15 : f32 to vector<512x16xf32>
    %49 = arith.mulf %48, %45 : vector<512x16xf32>
    %50 = arith.select %47, %45, %49 : vector<512x16xi1>, vector<512x16xf32>
    %51 = arith.truncf %50 : vector<512x16xf32> to vector<512x16xbf16>
    %c0_16 = arith.constant 0 : index
    %c0_17 = arith.constant 0 : index
    %52 = vector.load %arg5[%c0_16, %c0_17] : memref<512x16xbf16, #tpu.memory_space<vmem>>, vector<512x16xbf16>
    tpu.vector_store %arg5[%c0_16, %c0_17], %51 {strides = array<i32>} : memref<512x16xbf16, #tpu.memory_space<vmem>>, vector<512x16xbf16>,
    return
  }
}

module attributes {stable_mosaic.version = 11 : i64} {
  func.func @_matmul_bias_tanh_kernel(%arg0: i32, %arg1: memref<1024x36xbf16, #tpu.memory_space<vmem>>, %arg2: memref<36x3xbf16, #tpu.memory_space<vmem>>, %arg3: memref<1x3xf32, #tpu.memory_space<vmem>>, %arg4: memref<1024x3xf32, #tpu.memory_space<vmem>>) attributes {dimension_semantics = [#tpu.dimension_semantics<parallel>], iteration_bounds = array<i64: 2>, scalar_prefetch = 0 : i64, scratch_operands = 0 : i64, tpu.core_type = #tpu.core_type<tc>, window_params = [{transform_indices = @transform_0, window_bounds = array<i64: 1024, 36>}, {pipeline_mode = #tpu.pipeline_mode<synchronous>, transform_indices = @transform_1, window_bounds = array<i64: 36, 3>}, {pipeline_mode = #tpu.pipeline_mode<synchronous>, transform_indices = @transform_2, window_bounds = array<i64: 1, 3>}, {transform_indices = @transform_3, window_bounds = array<i64: 1024, 3>}]} {
    %c0 = arith.constant 0 : index
    %c0_0 = arith.constant 0 : index
    %0 = vector.load %arg1[%c0, %c0_0] : memref<1024x36xbf16, #tpu.memory_space<vmem>>, vector<1024x36xbf16>
    %c0_1 = arith.constant 0 : index
    %c0_2 = arith.constant 0 : index
    %1 = vector.load %arg2[%c0_1, %c0_2] : memref<36x3xbf16, #tpu.memory_space<vmem>>, vector<36x3xbf16>
    %cst = arith.constant dense<0.000000e+00> : vector<1024x3xf32>
    %2 = tpu.matmul %0, %1, %cst {dimension_numbers = #tpu.dot_dimension_numbers<[1], [0], [0], [1], [0, 0, 1, 1], [], []>} : vector<1024x36xbf16>, vector<36x3xbf16>, vector<1024x3xf32> -> vector<1024x3xf32>
    %c0_3 = arith.constant 0 : index
    %c0_4 = arith.constant 0 : index
    %3 = vector.load %arg3[%c0_3, %c0_4] : memref<1x3xf32, #tpu.memory_space<vmem>>, vector<1x3xf32>
    %4 = vector.broadcast %3 : vector<1x3xf32> to vector<1024x3xf32>
    %5 = arith.addf %2, %4 : vector<1024x3xf32>
    %6 = math.tanh %5 : vector<1024x3xf32>
    %c0_5 = arith.constant 0 : index
    %c0_6 = arith.constant 0 : index
    %7 = vector.load %arg4[%c0_5, %c0_6] : memref<1024x3xf32, #tpu.memory_space<vmem>>, vector<1024x3xf32>
    tpu.vector_store %arg4[%c0_5, %c0_6], %6 {strides = array<i32>} : memref<1024x3xf32, #tpu.memory_space<vmem>>, vector<1024x3xf32>,
    return
  }
  func.func @transform_0(%arg0: i32) -> (i32, i32) {
    %c0_i32 = arith.constant 0 : i32
    %c0_i32_0 = arith.constant 0 : i32
    return %arg0, %c0_i32 : i32, i32
  }
  func.func @transform_1(%arg0: i32) -> (i32, i32) {
    %c0_i32 = arith.constant 0 : i32
    %c0_i32_0 = arith.constant 0 : i32
    %c0_i32_1 = arith.constant 0 : i32
    return %c0_i32, %c0_i32_0 : i32, i32
  }
  func.func @transform_2(%arg0: i32) -> (i32, i32) {
    %c0_i32 = arith.constant 0 : i32
    %c0_i32_0 = arith.constant 0 : i32
    %c0_i32_1 = arith.constant 0 : i32
    return %c0_i32, %c0_i32_0 : i32, i32
  }
  func.func @transform_3(%arg0: i32) -> (i32, i32) {
    %c0_i32 = arith.constant 0 : i32
    %c0_i32_0 = arith.constant 0 : i32
    return %arg0, %c0_i32 : i32, i32
  }
}

</mosaic_0001>

<llo_original>
// kernel: tiny_vae_forward.5
$region0: #{tiny_vae_forward.5}
  #allocation0 [shape = 'u32[]', space=smem, size = 0x4, offset = 0x4, fixed_abs, tag = 'smem constant byte address 0x4 - core index']
  #allocation1 [shape = 'u32[144,128]{1,0:T(1,128)}', space=vmem, size = 0x12000, scoped, tag = 'internal scratch']
  %s0 = inlined_call_operand.vmem [shape: f32[2,16], index: 0, kind: input, shape index: {}]
  %s1 = inlined_call_operand.vmem [shape: f32[2,16], index: 1, kind: input, shape index: {}]
  %s2 = inlined_call_operand.vmem [shape: f32[2,16], index: 2, kind: input, shape index: {}]
  %s3 = inlined_call_operand.vmem [shape: f32[16,256], index: 3, kind: input, shape index: {}]
  %s4 = inlined_call_operand.vmem [shape: f32[1,256], index: 4, kind: input, shape index: {}]
  %s5 = inlined_call_operand.vmem [shape: f32[1,256], index: 5, kind: input, shape index: {}]
  %s6 = inlined_call_operand.vmem [shape: f32[1,256], index: 6, kind: input, shape index: {}]
  %s7 = inlined_call_operand.vmem [shape: bf16[2,256], index: 7, kind: output, shape index: {}]
  %s8 = sld [smem:[#allocation0]]
  $region38: #{tiny_vae_forward.5} parent=0
    _
  %s10 = ssub.s32 1, %s8
  %s11 = scalar_select 0, %s10, %s8
  // Predicated region
  $region2: #{tiny_vae_forward.5} parent=0 // pred_check
    _
  $region3: #{tiny_vae_forward.5} parent=0 // pred_check_branch
    %13 = sbr.rel (0) target = $region5
  $region4: #{tiny_vae_forward.5} parent=0 // pred_region
    _
  $region5: #{tiny_vae_forward.5} parent=0 // pred_fallthru
    _
  // Predicated region
  $region6: #{tiny_vae_forward.5} parent=0 // pred_check
    _
  $region7: #{tiny_vae_forward.5} parent=0 // pred_check_branch
    %15 = sbr.rel (0) target = $region9
  $region8: #{tiny_vae_forward.5} parent=0 // pred_region
    _
  $region9: #{tiny_vae_forward.5} parent=0 // pred_fallthru
    _
  // Predicated region
  $region10: #{tiny_vae_forward.5} parent=0 // pred_check
    _
  $region11: #{tiny_vae_forward.5} parent=0 // pred_check_branch
    %17 = sbr.rel (0) target = $region13
  $region12: #{tiny_vae_forward.5} parent=0 // pred_region
    _
  $region13: #{tiny_vae_forward.5} parent=0 // pred_fallthru
    _
  // Predicated region
  $region14: #{tiny_vae_forward.5} parent=0 // pred_check
    _
  $region15: #{tiny_vae_forward.5} parent=0 // pred_check_branch
    %19 = sbr.rel (0) target = $region17
  $region16: #{tiny_vae_forward.5} parent=0 // pred_region
    _
  $region17: #{tiny_vae_forward.5} parent=0 // pred_fallthru
    _
  // Predicated region
  $region18: #{tiny_vae_forward.5} parent=0 // pred_check
    _
  $region19: #{tiny_vae_forward.5} parent=0 // pred_check_branch
    %21 = sbr.rel (0) target = $region21
  $region20: #{tiny_vae_forward.5} parent=0 // pred_region
    _
  $region21: #{tiny_vae_forward.5} parent=0 // pred_fallthru
    _
  // Predicated region
  $region22: #{tiny_vae_forward.5} parent=0 // pred_check
    _
  $region23: #{tiny_vae_forward.5} parent=0 // pred_check_branch
    %23 = sbr.rel (0) target = $region25
  $region24: #{tiny_vae_forward.5} parent=0 // pred_region
    _
  $region25: #{tiny_vae_forward.5} parent=0 // pred_fallthru
    _
  // Predicated region
  $region26: #{tiny_vae_forward.5} parent=0 // pred_check
    _
  $region27: #{tiny_vae_forward.5} parent=0 // pred_check_branch
    %25 = sbr.rel (0) target = $region29
  $region28: #{tiny_vae_forward.5} parent=0 // pred_region
    _
  $region29: #{tiny_vae_forward.5} parent=0 // pred_fallthru
    _
  %v26 = vld [vmem:[%s2] sm:$0x3]
  %v27 = vld [vmem:[%s1] sm:$0x3]
  %v28 = vmul.f32 %v27, 0.5
  %v29 = vmul.f32 %v28, 1.442695
  %v30 = vpow.pop %v29
  %v31 = vmul.f32 %v26, %v30
  %v32 = vld [vmem:[%s0] sm:$0x3]
  %v33 = vadd.f32 %v31, %v32
  %v34 = vld [vmem:[%s3] sm:$0xff]
  %v35 = vld [vmem:[%s3 + $0x8] sm:$0xff]
  %v36 = vld [vmem:[%s3 + $0x10] sm:$0xff]
  %v37 = vld [vmem:[%s3 + $0x18] sm:$0xff]
  %v38 = vld [vmem:[%s4] sm:$0x3]
  %v40 = vlaneseq
  %v41 = vshrl.u32 %v40, 7
  %v42 = vsub.s32 0, %v41
  %v43 = vrot.slane %v38, %v42
  %v44 = vlaneseq
  %v45 = vshrl.u32 %v44, 7
  %v46 = vsub.s32 1, %v45
  %v47 = vrot.slane %v38, %v46
  %vm50 = vcmask 130048
  %v52 = vsel %vm50, %v33, 0
  %54 = vmatprep.subr.mxu0 0.0
  %55 = vmatpush1.msra.mxu0 0.0
  %56 = vmatprep.subr.mxu0 0.0
  %57 = vmatpush1.msra.mxu0 0.0
  %58 = vmatprep.subr.mxu0 0.0
  %59 = vmatpush1.msra.mxu0 0.0
  %60 = vmatprep.subr.mxu0 0.0
  %61 = vmatpush1.msra.mxu0 0.0
  %62 = vmatprep.subr.mxu0 0.0
  %63 = vmatpush1.msra.mxu0 0.0
  %64 = vmatprep.subr.mxu0 0.0
  %65 = vmatpush1.msra.mxu0 0.0
  %66 = vmatprep.subr.mxu0 0.0
  %67 = vmatpush1.msra.mxu0 0.0
  %68 = vmatprep.subr.mxu0 0.0
  %69 = vmatpush1.msra.mxu0 0.0
  %70 = vmatprep.subr.mxu0 0.0
  %71 = vmatpush1.msra.mxu0 0.0
  %72 = vmatprep.subr.mxu0 0.0
  %73 = vmatpush1.msra.mxu0 0.0
  %74 = vmatprep.subr.mxu0 0.0
  %75 = vmatpush1.msra.mxu0 0.0
  %76 = vmatprep.subr.mxu0 0.0
  %77 = vmatpush1.msra.mxu0 0.0
  %78 = vmatprep.subr.mxu0 0.0
  %79 = vmatpush1.msra.mxu0 0.0
  %80 = vmatprep.subr.mxu0 0.0
  %81 = vmatpush1.msra.mxu0 0.0
  %82 = vmatprep.subr.mxu0 %v37
  %83 = vmatpush1.msra.mxu0 %v36
  %84 = vmatprep.subr.mxu0 %v35
  %85 = vmatpush1.msra.mxu0 %v34
  %86 = vmatprep.subr.mxu0 0.0
  %87 = vmatpush2.msra.mxu0 0.0
  %88 = vmatprep.subr.mxu0 0.0
  %89 = vmatpush2.msra.mxu0 0.0
  %90 = vmatprep.subr.mxu0 0.0
  %91 = vmatpush2.msra.mxu0 0.0
  %92 = vmatprep.subr.mxu0 0.0
  %93 = vmatpush2.msra.mxu0 0.0
  %94 = vmatprep.subr.mxu0 0.0
  %95 = vmatpush2.msra.mxu0 0.0
  %96 = vmatprep.subr.mxu0 0.0
  %97 = vmatpush2.msra.mxu0 0.0
  %98 = vmatprep.subr.mxu0 0.0
  %99 = vmatpush2.msra.mxu0 0.0
  %100 = vmatprep.subr.mxu0 0.0
  %101 = vmatpush2.msra.mxu0 0.0
  %102 = vmatprep.subr.mxu0 0.0
  %103 = vmatpush2.msra.mxu0 0.0
  %104 = vmatprep.subr.mxu0 0.0
  %105 = vmatpush2.msra.mxu0 0.0
  %106 = vmatprep.subr.mxu0 0.0
  %107 = vmatpush2.msra.mxu0 0.0
  %108 = vmatprep.subr.mxu0 0.0
  %109 = vmatpush2.msra.mxu0 0.0
  %110 = vmatprep.subr.mxu0 0.0
  %111 = vmatpush2.msra.mxu0 0.0
  %112 = vmatprep.subr.mxu0 0.0
  %113 = vmatpush2.msra.mxu0 0.0
  %114 = vmatprep.subr.mxu0 0.0
  %115 = vmatpush2.msra.mxu0 0.0
  %116 = vmatprep.subr.mxu0 0.0
  %117 = vmatpush2.msra.mxu0 0.0
  %118 = vmatprep.mubr.f32.mxu0 0.0
  %119 = vmatmul.mubr.f32.gmra.mxu0 %v52
  %v120 = vpop.f32.mrf.mxu0
  %v121 = vadd.f32 %v43, %v120
  %v122 = vpop.f32.mrf.mxu0
  %v123 = vadd.f32 %v47, %v122
  %124 = vdwg.mxu0
  %v125 = vld [vmem:[%s5] sm:$0x3]
  %v126 = vld [vmem:[%s6] sm:$0x3]
  %vm127 = vcmask 1041408
  %v128 = vsel %vm127, %v121, 0.0
  %v129 = vrot.slane %v128, 4
  %v130 = vadd.f32 %v128, %v129
  %v131 = vrot.slane %v130, 2
  %v132 = vadd.f32 %v130, %v131
  %v133 = vrot.slane %v132, 1
  %v134 = vadd.f32 %v132, %v133
  %v135 = vsel %vm127, %v123, 0.0
  %v136 = vrot.slane %v135, 4
  %v137 = vadd.f32 %v135, %v136
  %v138 = vrot.slane %v137, 2
  %v139 = vadd.f32 %v137, %v138
  %v140 = vrot.slane %v139, 1
  %v141 = vadd.f32 %v139, %v140
  %v142 = vmul.f32 %v121, %v121
  %v143 = vmul.f32 %v123, %v123
  %v144 = vsel %vm127, %v142, 0.0
  %v145 = vrot.slane %v144, 4
  %v146 = vadd.f32 %v144, %v145
  %v147 = vrot.slane %v146, 2
  %v148 = vadd.f32 %v146, %v147
  %v149 = vrot.slane %v148, 1
  %v150 = vadd.f32 %v148, %v149
  %v151 = vsel %vm127, %v143, 0.0
  %v152 = vrot.slane %v151, 4
  %v153 = vadd.f32 %v151, %v152
  %v154 = vrot.slane %v153, 2
  %v155 = vadd.f32 %v153, %v154
  %v156 = vrot.slane %v155, 1
  %v157 = vadd.f32 %v155, %v156
  %159 = vrot.lane.b32.xlu0 %v134, 112
  %v160 = vpop.permute.xlu0 %159
  %v162 = vadd.f32 %v134, %v160
  %164 = vrot.lane.b32.xlu0 %v150, 112
  %v165 = vpop.permute.xlu0 %164
  %v167 = vadd.f32 %v150, %v165
  %168 = vrot.lane.b32.xlu0 %v134, 96
  %v169 = vpop.permute.xlu0 %168
  %v171 = vadd.f32 %v162, %v169
  %172 = vrot.lane.b32.xlu0 %v150, 96
  %v173 = vpop.permute.xlu0 %172
  %v175 = vadd.f32 %v167, %v173
  %176 = vrot.lane.b32.xlu0 %v134, 80
  %v177 = vpop.permute.xlu0 %176
  %v179 = vadd.f32 %v171, %v177
  %180 = vrot.lane.b32.xlu0 %v150, 80
  %v181 = vpop.permute.xlu0 %180
  %v183 = vadd.f32 %v175, %v181
  %184 = vrot.lane.b32.xlu0 %v134, 64
  %v185 = vpop.permute.xlu0 %184
  %v187 = vadd.f32 %v179, %v185
  %188 = vrot.lane.b32.xlu0 %v150, 64
  %v189 = vpop.permute.xlu0 %188
  %v191 = vadd.f32 %v183, %v189
  %192 = vrot.lane.b32.xlu0 %v134, 48
  %v193 = vpop.permute.xlu0 %192
  %v195 = vadd.f32 %v187, %v193
  %196 = vrot.lane.b32.xlu0 %v150, 48
  %v197 = vpop.permute.xlu0 %196
  %v199 = vadd.f32 %v191, %v197
  %200 = vrot.lane.b32.xlu0 %v134, 32
  %v201 = vpop.permute.xlu0 %200
  %v203 = vadd.f32 %v195, %v201
  %204 = vrot.lane.b32.xlu0 %v150, 32
  %v205 = vpop.permute.xlu0 %204
  %v207 = vadd.f32 %v199, %v205
  %208 = vrot.lane.b32.xlu0 %v134, 16
  %v209 = vpop.permute.xlu0 %208
  %v211 = vadd.f32 %v203, %v209
  %212 = vrot.lane.b32.xlu0 %v150, 16
  %v213 = vpop.permute.xlu0 %212
  %v215 = vadd.f32 %v207, %v213
  %v216 = vadd.f32 %v211, %v141
  %v217 = vadd.f32 %v215, %v157
  %219 = vrot.lane.b32.xlu0 %v141, 112
  %v220 = vpop.permute.xlu0 %219
  %v222 = vadd.f32 %v216, %v220
  %224 = vrot.lane.b32.xlu0 %v157, 112
  %v225 = vpop.permute.xlu0 %224
  %v227 = vadd.f32 %v217, %v225
  %228 = vrot.lane.b32.xlu0 %v141, 96
  %v229 = vpop.permute.xlu0 %228
  %v231 = vadd.f32 %v222, %v229
  %232 = vrot.lane.b32.xlu0 %v157, 96
  %v233 = vpop.permute.xlu0 %232
  %v235 = vadd.f32 %v227, %v233
  %236 = vrot.lane.b32.xlu0 %v141, 80
  %v237 = vpop.permute.xlu0 %236
  %v239 = vadd.f32 %v231, %v237
  %240 = vrot.lane.b32.xlu0 %v157, 80
  %v241 = vpop.permute.xlu0 %240
  %v243 = vadd.f32 %v235, %v241
  %244 = vrot.lane.b32.xlu0 %v141, 64
  %v245 = vpop.permute.xlu0 %244
  %v247 = vadd.f32 %v239, %v245
  %248 = vrot.lane.b32.xlu0 %v157, 64
  %v249 = vpop.permute.xlu0 %248
  %v251 = vadd.f32 %v243, %v249
  %252 = vrot.lane.b32.xlu0 %v141, 48
  %v253 = vpop.permute.xlu0 %252
  %v255 = vadd.f32 %v247, %v253
  %256 = vrot.lane.b32.xlu0 %v157, 48
  %v257 = vpop.permute.xlu0 %256
  %v259 = vadd.f32 %v251, %v257
  %260 = vrot.lane.b32.xlu0 %v141, 32
  %v261 = vpop.permute.xlu0 %260
  %v263 = vadd.f32 %v255, %v261
  %264 = vrot.lane.b32.xlu0 %v157, 32
  %v265 = vpop.permute.xlu0 %264
  %v267 = vadd.f32 %v259, %v265
  %268 = vrot.lane.b32.xlu0 %v141, 16
  %v269 = vpop.permute.xlu0 %268
  %v271 = vadd.f32 %v263, %v269
  %272 = vrot.lane.b32.xlu0 %v157, 16
  %v273 = vpop.permute.xlu0 %272
  %v275 = vadd.f32 %v267, %v273
  %v276 = vrcp.pop 32.0
  %v277 = vmul.f32 %v271, %v276
  %v278 = vmul.f32 %v275, %v276
  %v279 = vmul.f32 %v277, %v277
  %v280 = vsub.f32 %v278, %v279
  %v281 = vadd.f32 %v280, 1e-05
  %v282 = vrsqrt.pop %v281
  %284 = vrot.lane.b32.xlu0 %v277, 16
  %v285 = vpop.permute.xlu0 %284
  %287 = vrot.lane.b32.xlu0 %v277, 32
  %v288 = vpop.permute.xlu0 %287
  %290 = vrot.lane.b32.xlu0 %v277, 48
  %v291 = vpop.permute.xlu0 %290
  %293 = vrot.lane.b32.xlu0 %v277, 64
  %v294 = vpop.permute.xlu0 %293
  %296 = vrot.lane.b32.xlu0 %v277, 80
  %v297 = vpop.permute.xlu0 %296
  %299 = vrot.lane.b32.xlu0 %v277, 96
  %v300 = vpop.permute.xlu0 %299
  %302 = vrot.lane.b32.xlu0 %v277, 112
  %v303 = vpop.permute.xlu0 %302
  %v305 = vsel %vm50, %v277, %v285
  %vm306 = vcmask 261120
  %v307 = vsel %vm306, %v305, %v288
  %vm308 = vcmask 392192
  %v309 = vsel %vm308, %v307, %v291
  %vm310 = vcmask 523264
  %v311 = vsel %vm310, %v309, %v294
  %vm312 = vcmask 654336
  %v313 = vsel %vm312, %v311, %v297
  %vm314 = vcmask 785408
  %v315 = vsel %vm314, %v313, %v300
  %vm316 = vcmask 916480
  %v317 = vsel %vm316, %v315, %v303
  %319 = vrot.lane.b32.xlu0 %v282, 16
  %v320 = vpop.permute.xlu0 %319
  %322 = vrot.lane.b32.xlu0 %v282, 32
  %v323 = vpop.permute.xlu0 %322
  %325 = vrot.lane.b32.xlu0 %v282, 48
  %v326 = vpop.permute.xlu0 %325
  %328 = vrot.lane.b32.xlu0 %v282, 64
  %v329 = vpop.permute.xlu0 %328
  %331 = vrot.lane.b32.xlu0 %v282, 80
  %v332 = vpop.permute.xlu0 %331
  %334 = vrot.lane.b32.xlu0 %v282, 96
  %v335 = vpop.permute.xlu0 %334
  %337 = vrot.lane.b32.xlu0 %v282, 112
  %v338 = vpop.permute.xlu0 %337
  %v340 = vsel %vm50, %v282, %v320
  %v341 = vsel %vm306, %v340, %v323
  %v342 = vsel %vm308, %v341, %v326
  %v343 = vsel %vm310, %v342, %v329
  %v344 = vsel %vm312, %v343, %v332
  %v345 = vsel %vm314, %v344, %v335
  %v346 = vsel %vm316, %v345, %v338
  %v347 = vlaneseq
  %v348 = vshrl.u32 %v347, 7
  %v349 = vsub.s32 0, %v348
  %v350 = vrot.slane %v317, %v349
  %v351 = vsub.f32 %v121, %v350
  %v352 = vsub.f32 %v123, %v350
  %v353 = vlaneseq
  %v354 = vshrl.u32 %v353, 7
  %v355 = vsub.s32 0, %v354
  %v356 = vrot.slane %v346, %v355
  %v357 = vmul.f32 %v351, %v356
  %v358 = vmul.f32 %v352, %v356
  %v360 = vlaneseq
  %v361 = vshrl.u32 %v360, 7
  %v362 = vsub.s32 0, %v361
  %v363 = vrot.slane %v125, %v362
  %v364 = vlaneseq
  %v365 = vshrl.u32 %v364, 7
  %v366 = vsub.s32 1, %v365
  %v367 = vrot.slane %v125, %v366
  %v370 = vmul.f32 %v357, %v363
  %v371 = vmul.f32 %v358, %v367
  %v373 = vlaneseq
  %v374 = vshrl.u32 %v373, 7
  %v375 = vsub.s32 0, %v374
  %v376 = vrot.slane %v126, %v375
  %v377 = vlaneseq
  %v378 = vshrl.u32 %v377, 7
  %v379 = vsub.s32 1, %v378
  %v380 = vrot.slane %v126, %v379
  %v383 = vadd.f32 %v370, %v376
  %v384 = vadd.f32 %v371, %v380
  %vm385 = vcmp.ge.f32.partialorder %v383, 0.0
  %vm386 = vcmp.ge.f32.partialorder %v384, 0.0
  %v387 = vmul.f32 %v383, 0.01
  %v388 = vmul.f32 %v384, 0.01
  %v389 = vsel %vm385, %v383, %v387
  %v390 = vsel %vm386, %v384, %v388
  %v391 = vpack.c.bf16 %v389, %v389
  %v392 = vpack.c.bf16 %v390, %v390
  %v395 = vcombine.low %v391, %v392
  %v397 = vunpack.c.l.s4 1966171168
  %v398 = vunpack.c.0.s8 %v397
  %v399 = vlaneseq
  %v400 = vshrl.u32 %v399, 7
  %v401 = vsub.s32 %v398, %v400
  %v402 = vrot.slane %v395, %v401
  %v404 = vunpack.c.l.s4 1966171168
  %v405 = vunpack.c.0.s8 %v404
  %v406 = vlaneseq
  %v407 = vshrl.u32 %v406, 7
  %v408 = vsub.s32 %v405, %v407
  %v409 = vrot.slane %v402, %v408
  %411 = vst [vmem:[%s7] sm:$0x3] %v409
  // Predicated region
  $region30: #{tiny_vae_forward.5} parent=0 // pred_check
    _
  $region31: #{tiny_vae_forward.5} parent=0 // pred_check_branch
    %413 = sbr.rel (0) target = $region33
  $region32: #{tiny_vae_forward.5} parent=0 // pred_region
    _
  $region33: #{tiny_vae_forward.5} parent=0 // pred_fallthru
    _
  // Predicated region
  $region34: #{tiny_vae_forward.5} parent=0 // pred_check
    _
  $region35: #{tiny_vae_forward.5} parent=0 // pred_check_branch
    %415 = sbr.rel (0) target = $region37
  $region36: #{tiny_vae_forward.5} parent=0 // pred_region
    _
  $region37: #{tiny_vae_forward.5} parent=0 // pred_fallthru
    _

// kernel: tiny_vae_forward.6
$region0: #{tiny_vae_forward.6}
  #allocation0 [shape = 'u32[]', space=smem, size = 0x4, offset = 0x4, fixed_abs, tag = 'smem constant byte address 0x4 - core index']
  #allocation1 [shape = 'u32[144,128]{1,0:T(1,128)}', space=vmem, size = 0x12000, scoped, tag = 'internal scratch']
  %s0 = inlined_call_operand.vmem [shape: bf16[32,144], index: 0, kind: input, shape index: {}]
  %s1 = inlined_call_operand.vmem [shape: bf16[144,32], index: 1, kind: input, shape index: {}]
  %s2 = inlined_call_operand.vmem [shape: f32[1,32], index: 2, kind: input, shape index: {}]
  %s3 = inlined_call_operand.vmem [shape: f32[1,32], index: 3, kind: input, shape index: {}]
  %s4 = inlined_call_operand.vmem [shape: f32[1,32], index: 4, kind: input, shape index: {}]
  %s5 = inlined_call_operand.vmem [shape: bf16[32,32], index: 5, kind: output, shape index: {}]
  %s6 = sld [smem:[#allocation0]]
  $region30: #{tiny_vae_forward.6} parent=0
    _
  %s8 = ssub.s32 1, %s6
  %s9 = scalar_select 0, %s8, %s6
  // Predicated region
  $region2: #{tiny_vae_forward.6} parent=0 // pred_check
    _
  $region3: #{tiny_vae_forward.6} parent=0 // pred_check_branch
    %11 = sbr.rel (0) target = $region5
  $region4: #{tiny_vae_forward.6} parent=0 // pred_region
    _
  $region5: #{tiny_vae_forward.6} parent=0 // pred_fallthru
    _
  // Predicated region
  $region6: #{tiny_vae_forward.6} parent=0 // pred_check
    _
  $region7: #{tiny_vae_forward.6} parent=0 // pred_check_branch
    %13 = sbr.rel (0) target = $region9
  $region8: #{tiny_vae_forward.6} parent=0 // pred_region
    _
  $region9: #{tiny_vae_forward.6} parent=0 // pred_fallthru
    _
  // Predicated region
  $region10: #{tiny_vae_forward.6} parent=0 // pred_check
    _
  $region11: #{tiny_vae_forward.6} parent=0 // pred_check_branch
    %15 = sbr.rel (0) target = $region13
  $region12: #{tiny_vae_forward.6} parent=0 // pred_region
    _
  $region13: #{tiny_vae_forward.6} parent=0 // pred_fallthru
    _
  // Predicated region
  $region14: #{tiny_vae_forward.6} parent=0 // pred_check
    _
  $region15: #{tiny_vae_forward.6} parent=0 // pred_check_branch
    %17 = sbr.rel (0) target = $region17
  $region16: #{tiny_vae_forward.6} parent=0 // pred_region
    _
  $region17: #{tiny_vae_forward.6} parent=0 // pred_fallthru
    _
  // Predicated region
  $region18: #{tiny_vae_forward.6} parent=0 // pred_check
    _
  $region19: #{tiny_vae_forward.6} parent=0 // pred_check_branch
    %19 = sbr.rel (0) target = $region21
  $region20: #{tiny_vae_forward.6} parent=0 // pred_region
    _
  $region21: #{tiny_vae_forward.6} parent=0 // pred_fallthru
    _
  %v21 = vld [vmem:[%s0] sm:$0xff]
  %v22 = vld [vmem:[%s0 + $0x8] sm:$0xff]
  %v23 = vld [vmem:[%s0 + $0x10] sm:$0xff]
  %v24 = vld [vmem:[%s0 + $0x18] sm:$0xff]
  %v25 = vld [vmem:[%s1] sm:$0xf]
  %v26 = vld [vmem:[%s1 + $0x4] sm:$0xf]
  %v27 = vld [vmem:[%s1 + $0x8] sm:$0xf]
  %v28 = vld [vmem:[%s1 + $0xc] sm:$0xf]
  %v29 = vld [vmem:[%s1 + $0x10] sm:$0xf]
  %v30 = vld [vmem:[%s1 + $0x14] sm:$0xf]
  %v31 = vld [vmem:[%s1 + $0x18] sm:$0xf]
  %v32 = vld [vmem:[%s1 + $0x1c] sm:$0xf]
  %v33 = vld [vmem:[%s1 + $0x20] sm:$0xf]
  %v34 = vld [vmem:[%s1 + $0x24] sm:$0xf]
  %v35 = vld [vmem:[%s1 + $0x28] sm:$0xf]
  %v36 = vld [vmem:[%s1 + $0x2c] sm:$0xf]
  %v37 = vld [vmem:[%s1 + $0x30] sm:$0xf]
  %v38 = vld [vmem:[%s1 + $0x34] sm:$0xf]
  %v39 = vld [vmem:[%s1 + $0x38] sm:$0xf]
  %v40 = vld [vmem:[%s1 + $0x3c] sm:$0xf]
  %v41 = vld [vmem:[%s1 + $0x40] sm:$0xf]
  %v42 = vld [vmem:[%s1 + $0x44] sm:$0xf]
  %v43 = vld [vmem:[%s2] sm:$0x1]
  %v45 = vlaneseq
  %v46 = vshrl.u32 %v45, 7
  %v47 = vsub.s32 0, %v46
  %v48 = vrot.slane %v43, %v47
  %v54 = vunpack.c.l.b16 %v21
  %v55 = vunpack.c.h.b16 %v21
  %v56 = vunpack.c.l.b16 %v22
  %v57 = vunpack.c.h.b16 %v22
  %v58 = vunpack.c.l.b16 %v23
  %v59 = vunpack.c.h.b16 %v23
  %v60 = vunpack.c.l.b16 %v24
  %v61 = vunpack.c.h.b16 %v24
  %v62 = vpack.c.b16 %v56, %v54
  %v63 = vpack.c.b16 %v57, %v55
  %v64 = vpack.c.b16 %v60, %v58
  %v65 = vpack.c.b16 %v61, %v59
  %v86 = vunpack.c.l.b16 %v25
  %v87 = vunpack.c.l.b16 %v26
  %v88 = vunpack.c.l.b16 %v27
  %v89 = vunpack.c.l.b16 %v28
  %v90 = vunpack.c.l.b16 %v29
  %v91 = vunpack.c.l.b16 %v30
  %v92 = vunpack.c.l.b16 %v31
  %v93 = vunpack.c.l.b16 %v32
  %v94 = vunpack.c.l.b16 %v33
  %v95 = vunpack.c.l.b16 %v34
  %v96 = vunpack.c.l.b16 %v35
  %v97 = vunpack.c.l.b16 %v36
  %v98 = vunpack.c.l.b16 %v37
  %v99 = vunpack.c.l.b16 %v38
  %v100 = vunpack.c.l.b16 %v39
  %v101 = vunpack.c.l.b16 %v40
  %v102 = vunpack.c.l.b16 %v41
  %v103 = vunpack.c.l.b16 %v42
  %v104 = vpack.c.b16 %v87, %v86
  %v105 = vpack.c.b16 %v89, %v88
  %v106 = vpack.c.b16 %v91, %v90
  %v107 = vpack.c.b16 %v93, %v92
  %v108 = vpack.c.b16 %v95, %v94
  %v109 = vpack.c.b16 %v97, %v96
  %v110 = vpack.c.b16 %v99, %v98
  %v111 = vpack.c.b16 %v101, %v100
  %v112 = vpack.c.b16 %v103, %v102
  %vm122 = vcmask 130048
  %v124 = vsel %vm122, %v63, 0
  %v127 = vsel %vm122, %v65, 0
  %129 = vmatprep.subr.bf16.mxu0 0
  %130 = vmatpush1.bf16.msra.mxu0 %v111
  %131 = vmatprep.subr.bf16.mxu0 0
  %132 = vmatpush1.bf16.msra.mxu0 %v110
  %133 = vmatprep.subr.bf16.mxu0 0
  %134 = vmatpush1.bf16.msra.mxu0 %v109
  %135 = vmatprep.subr.bf16.mxu0 0
  %136 = vmatpush1.bf16.msra.mxu0 %v108
  %137 = vmatprep.subr.bf16.mxu0 0
  %138 = vmatpush1.bf16.msra.mxu0 %v107
  %139 = vmatprep.subr.bf16.mxu0 0
  %140 = vmatpush1.bf16.msra.mxu0 %v106
  %141 = vmatprep.subr.bf16.mxu0 0
  %142 = vmatpush1.bf16.msra.mxu0 %v105
  %143 = vmatprep.subr.bf16.mxu0 0
  %144 = vmatpush1.bf16.msra.mxu0 %v104
  %145 = vmatprep.subr.bf16.mxu0 0
  %146 = vmatpush2.bf16.msra.mxu0 0
  %147 = vmatprep.subr.bf16.mxu0 0
  %148 = vmatpush2.bf16.msra.mxu0 0
  %149 = vmatprep.subr.bf16.mxu0 0
  %150 = vmatpush2.bf16.msra.mxu0 0
  %151 = vmatprep.subr.bf16.mxu0 0
  %152 = vmatpush2.bf16.msra.mxu0 0
  %153 = vmatprep.subr.bf16.mxu0 0
  %154 = vmatpush2.bf16.msra.mxu0 0
  %155 = vmatprep.subr.bf16.mxu0 0
  %156 = vmatpush2.bf16.msra.mxu0 0
  %157 = vmatprep.subr.bf16.mxu0 0
  %158 = vmatpush2.bf16.msra.mxu0 0
  %159 = vmatprep.subr.bf16.mxu0 0
  %160 = vmatpush2.bf16.msra.mxu0 %v112
  %161 = vmatprep.mubr.bf16.mxu0 %v124
  %162 = vmatmul.mubr.bf16.gmra.mxu0 %v62
  %v163 = vpop.f32.mrf.mxu0
  %v164 = vadd.f32 %v48, %v163
  %v165 = vpop.f32.mrf.mxu0
  %v166 = vpop.f32.mrf.mxu0
  %v167 = vadd.f32 %v48, %v166
  %v168 = vpop.f32.mrf.mxu0
  %169 = vmatprep.mubr.bf16.mxu0 %v127
  %170 = vmatmul.mubr.bf16.gmra.mxu0 %v64
  %v171 = vpop.f32.mrf.mxu0
  %v172 = vadd.f32 %v48, %v171
  %v173 = vpop.f32.mrf.mxu0
  %v174 = vpop.f32.mrf.mxu0
  %v175 = vadd.f32 %v48, %v174
  %v176 = vpop.f32.mrf.mxu0
  %177 = vdwg.mxu0
  %v178 = vld [vmem:[%s3] sm:$0x1]
  %v179 = vld [vmem:[%s4] sm:$0x1]
  %vm180 = vcmask 261120
  %v181 = vsel %vm180, %v164, 0.0
  %v182 = vsel %vm180, %v167, 0.0
  %v183 = vadd.f32 %v181, %v182
  %v184 = vsel %vm180, %v172, 0.0
  %v185 = vadd.f32 %v183, %v184
  %v186 = vsel %vm180, %v175, 0.0
  %v187 = vadd.f32 %v185, %v186
  %v188 = vrot.slane %v187, 4
  %v189 = vadd.f32 %v187, %v188
  %v190 = vrot.slane %v189, 2
  %v191 = vadd.f32 %v189, %v190
  %v192 = vrot.slane %v191, 1
  %v193 = vadd.f32 %v191, %v192
  %v194 = vmul.f32 %v164, %v164
  %v195 = vmul.f32 %v167, %v167
  %v196 = vmul.f32 %v172, %v172
  %v197 = vmul.f32 %v175, %v175
  %v198 = vsel %vm180, %v194, 0.0
  %v199 = vsel %vm180, %v195, 0.0
  %v200 = vadd.f32 %v198, %v199
  %v201 = vsel %vm180, %v196, 0.0
  %v202 = vadd.f32 %v200, %v201
  %v203 = vsel %vm180, %v197, 0.0
  %v204 = vadd.f32 %v202, %v203
  %v205 = vrot.slane %v204, 4
  %v206 = vadd.f32 %v204, %v205
  %v207 = vrot.slane %v206, 2
  %v208 = vadd.f32 %v206, %v207
  %v209 = vrot.slane %v208, 1
  %v210 = vadd.f32 %v208, %v209
  %212 = vrot.lane.b32.xlu0 %v193, 120
  %v213 = vpop.permute.xlu0 %212
  %v215 = vadd.f32 %v193, %v213
  %217 = vrot.lane.b32.xlu0 %v210, 120
  %v218 = vpop.permute.xlu0 %217
  %v220 = vadd.f32 %v210, %v218
  %221 = vrot.lane.b32.xlu0 %v193, 112
  %v222 = vpop.permute.xlu0 %221
  %v224 = vadd.f32 %v215, %v222
  %225 = vrot.lane.b32.xlu0 %v210, 112
  %v226 = vpop.permute.xlu0 %225
  %v228 = vadd.f32 %v220, %v226
  %229 = vrot.lane.b32.xlu0 %v193, 104
  %v230 = vpop.permute.xlu0 %229
  %v232 = vadd.f32 %v224, %v230
  %233 = vrot.lane.b32.xlu0 %v210, 104
  %v234 = vpop.permute.xlu0 %233
  %v236 = vadd.f32 %v228, %v234
  %v237 = vrcp.pop 128.0
  %v238 = vmul.f32 %v232, %v237
  %v239 = vmul.f32 %v236, %v237
  %v240 = vmul.f32 %v238, %v238
  %v241 = vsub.f32 %v239, %v240
  %v242 = vadd.f32 %v241, 1e-05
  %v243 = vrsqrt.pop %v242
  %245 = vrot.lane.b32.xlu0 %v238, 8
  %v246 = vpop.permute.xlu0 %245
  %248 = vrot.lane.b32.xlu0 %v238, 16
  %v249 = vpop.permute.xlu0 %248
  %251 = vrot.lane.b32.xlu0 %v238, 24
  %v252 = vpop.permute.xlu0 %251
  %vm254 = vcmask 64512
  %v255 = vsel %vm254, %v238, %v246
  %v256 = vsel %vm122, %v255, %v249
  %vm257 = vcmask 195584
  %v258 = vsel %vm257, %v256, %v252
  %260 = vrot.lane.b32.xlu0 %v243, 8
  %v261 = vpop.permute.xlu0 %260
  %263 = vrot.lane.b32.xlu0 %v243, 16
  %v264 = vpop.permute.xlu0 %263
  %266 = vrot.lane.b32.xlu0 %v243, 24
  %v267 = vpop.permute.xlu0 %266
  %v269 = vsel %vm254, %v243, %v261
  %v270 = vsel %vm122, %v269, %v264
  %v271 = vsel %vm257, %v270, %v267
  %v272 = vlaneseq
  %v273 = vshrl.u32 %v272, 7
  %v274 = vsub.s32 0, %v273
  %v275 = vrot.slane %v258, %v274
  %v276 = vsub.f32 %v164, %v275
  %v277 = vsub.f32 %v167, %v275
  %v278 = vsub.f32 %v172, %v275
  %v279 = vsub.f32 %v175, %v275
  %v280 = vlaneseq
  %v281 = vshrl.u32 %v280, 7
  %v282 = vsub.s32 0, %v281
  %v283 = vrot.slane %v271, %v282
  %v284 = vmul.f32 %v276, %v283
  %v285 = vmul.f32 %v277, %v283
  %v286 = vmul.f32 %v278, %v283
  %v287 = vmul.f32 %v279, %v283
  %v289 = vlaneseq
  %v290 = vshrl.u32 %v289, 7
  %v291 = vsub.s32 0, %v290
  %v292 = vrot.slane %v178, %v291
  %v294 = vmul.f32 %v284, %v292
  %v295 = vmul.f32 %v285, %v292
  %v296 = vmul.f32 %v286, %v292
  %v297 = vmul.f32 %v287, %v292
  %v299 = vlaneseq
  %v300 = vshrl.u32 %v299, 7
  %v301 = vsub.s32 0, %v300
  %v302 = vrot.slane %v179, %v301
  %v304 = vadd.f32 %v294, %v302
  %v305 = vadd.f32 %v295, %v302
  %v306 = vadd.f32 %v296, %v302
  %v307 = vadd.f32 %v297, %v302
  %vm308 = vcmp.ge.f32.partialorder %v304, 0.0
  %vm309 = vcmp.ge.f32.partialorder %v305, 0.0
  %vm310 = vcmp.ge.f32.partialorder %v306, 0.0
  %vm311 = vcmp.ge.f32.partialorder %v307, 0.0
  %v312 = vmul.f32 %v304, 0.01
  %v313 = vmul.f32 %v305, 0.01
  %v314 = vmul.f32 %v306, 0.01
  %v315 = vmul.f32 %v307, 0.01
  %v316 = vsel %vm308, %v304, %v312
  %v317 = vsel %vm309, %v305, %v313
  %v318 = vsel %vm310, %v306, %v314
  %v319 = vsel %vm311, %v307, %v315
  %v320 = vpack.c.bf16 %v317, %v316
  %v321 = vpack.c.bf16 %v319, %v318
  %v324 = vunpack.c.l.b16 %v320
  %v325 = vunpack.c.h.b16 %v320
  %v326 = vunpack.c.l.b16 %v321
  %v327 = vunpack.c.h.b16 %v321
  %v328 = vpack.c.b16 %v324, %v324
  %v329 = vpack.c.b16 %v325, %v325
  %v330 = vpack.c.b16 %v326, %v326
  %v331 = vpack.c.b16 %v327, %v327
  %vm336 = vcmask 257024
  %337 = vst.msk [vmem:[%s5] sm:$0xf] %vm336, %v328
  %338 = vst.msk [vmem:[%s5 + $0x4] sm:$0xf] %vm336, %v329
  %339 = vst.msk [vmem:[%s5 + $0x8] sm:$0xf] %vm336, %v330
  %340 = vst.msk [vmem:[%s5 + $0xc] sm:$0xf] %vm336, %v331
  // Predicated region
  $region22: #{tiny_vae_forward.6} parent=0 // pred_check
    _
  $region23: #{tiny_vae_forward.6} parent=0 // pred_check_branch
    %342 = sbr.rel (0) target = $region25
  $region24: #{tiny_vae_forward.6} parent=0 // pred_region
    _
  $region25: #{tiny_vae_forward.6} parent=0 // pred_fallthru
    _
  // Predicated region
  $region26: #{tiny_vae_forward.6} parent=0 // pred_check
    _
  $region27: #{tiny_vae_forward.6} parent=0 // pred_check_branch
    %344 = sbr.rel (0) target = $region29
  $region28: #{tiny_vae_forward.6} parent=0 // pred_region
    _
  $region29: #{tiny_vae_forward.6} parent=0 // pred_fallthru
    _

// kernel: tiny_vae_forward.7
$region0: #{tiny_vae_forward.7}
  #allocation0 [shape = 'u32[]', space=smem, size = 0x4, offset = 0x4, fixed_abs, tag = 'smem constant byte address 0x4 - core index']
  #allocation1 [shape = 'u32[144,128]{1,0:T(1,128)}', space=vmem, size = 0x12000, scoped, tag = 'internal scratch']
  %s0 = inlined_call_operand.vmem [shape: bf16[128,72], index: 0, kind: input, shape index: {}]
  %s1 = inlined_call_operand.vmem [shape: bf16[72,16], index: 1, kind: input, shape index: {}]
  %s2 = inlined_call_operand.vmem [shape: f32[1,16], index: 2, kind: input, shape index: {}]
  %s3 = inlined_call_operand.vmem [shape: f32[1,16], index: 3, kind: input, shape index: {}]
  %s4 = inlined_call_operand.vmem [shape: f32[1,16], index: 4, kind: input, shape index: {}]
  %s5 = inlined_call_operand.vmem [shape: bf16[128,16], index: 5, kind: output, shape index: {}]
  %s6 = sld [smem:[#allocation0]]
  $region30: #{tiny_vae_forward.7} parent=0
    _
  %s8 = ssub.s32 1, %s6
  %s9 = scalar_select 0, %s8, %s6
  // Predicated region
  $region2: #{tiny_vae_forward.7} parent=0 // pred_check
    _
  $region3: #{tiny_vae_forward.7} parent=0 // pred_check_branch
    %11 = sbr.rel (0) target = $region5
  $region4: #{tiny_vae_forward.7} parent=0 // pred_region
    _
  $region5: #{tiny_vae_forward.7} parent=0 // pred_fallthru
    _
  // Predicated region
  $region6: #{tiny_vae_forward.7} parent=0 // pred_check
    _
  $region7: #{tiny_vae_forward.7} parent=0 // pred_check_branch
    %13 = sbr.rel (0) target = $region9
  $region8: #{tiny_vae_forward.7} parent=0 // pred_region
    _
  $region9: #{tiny_vae_forward.7} parent=0 // pred_fallthru
    _
  // Predicated region
  $region10: #{tiny_vae_forward.7} parent=0 // pred_check
    _
  $region11: #{tiny_vae_forward.7} parent=0 // pred_check_branch
    %15 = sbr.rel (0) target = $region13
  $region12: #{tiny_vae_forward.7} parent=0 // pred_region
    _
  $region13: #{tiny_vae_forward.7} parent=0 // pred_fallthru
    _
  // Predicated region
  $region14: #{tiny_vae_forward.7} parent=0 // pred_check
    _
  $region15: #{tiny_vae_forward.7} parent=0 // pred_check_branch
    %17 = sbr.rel (0) target = $region17
  $region16: #{tiny_vae_forward.7} parent=0 // pred_region
    _
  $region17: #{tiny_vae_forward.7} parent=0 // pred_fallthru
    _
  // Predicated region
  $region18: #{tiny_vae_forward.7} parent=0 // pred_check
    _
  $region19: #{tiny_vae_forward.7} parent=0 // pred_check_branch
    %19 = sbr.rel (0) target = $region21
  $region20: #{tiny_vae_forward.7} parent=0 // pred_region
    _
  $region21: #{tiny_vae_forward.7} parent=0 // pred_fallthru
    _
  %v21 = vld [vmem:[%s0] sm:$0xf]
  %v22 = vld [vmem:[%s0 + $0x4] sm:$0xf]
  %v23 = vld [vmem:[%s0 + $0x8] sm:$0xf]
  %v24 = vld [vmem:[%s0 + $0xc] sm:$0xf]
  %v25 = vld [vmem:[%s0 + $0x10] sm:$0xf]
  %v26 = vld [vmem:[%s0 + $0x14] sm:$0xf]
  %v27 = vld [vmem:[%s0 + $0x18] sm:$0xf]
  %v28 = vld [vmem:[%s0 + $0x1c] sm:$0xf]
  %v29 = vld [vmem:[%s0 + $0x20] sm:$0xf]
  %v30 = vld [vmem:[%s0 + $0x24] sm:$0xf]
  %v31 = vld [vmem:[%s0 + $0x28] sm:$0xf]
  %v32 = vld [vmem:[%s0 + $0x2c] sm:$0xf]
  %v33 = vld [vmem:[%s0 + $0x30] sm:$0xf]
  %v34 = vld [vmem:[%s0 + $0x34] sm:$0xf]
  %v35 = vld [vmem:[%s0 + $0x38] sm:$0xf]
  %v36 = vld [vmem:[%s0 + $0x3c] sm:$0xf]
  %v37 = vld [vmem:[%s1] sm:$0xf]
  %v38 = vld [vmem:[%s1 + $0x4] sm:$0xf]
  %v39 = vld [vmem:[%s1 + $0x8] sm:$0xf]
  %v40 = vld [vmem:[%s1 + $0xc] sm:$0xf]
  %v41 = vld [vmem:[%s1 + $0x10] sm:$0xf]
  %v42 = vld [vmem:[%s1 + $0x14] sm:$0xf]
  %v43 = vld [vmem:[%s1 + $0x18] sm:$0xf]
  %v44 = vld [vmem:[%s1 + $0x1c] sm:$0xf]
  %v45 = vld [vmem:[%s1 + $0x20] sm:$0xf]
  %v46 = vld [vmem:[%s2] sm:$0x1]
  %v48 = vlaneseq
  %v49 = vshrl.u32 %v48, 7
  %v50 = vsub.s32 0, %v49
  %v51 = vrot.slane %v46, %v50
  %v69 = vunpack.c.l.b16 %v21
  %v70 = vunpack.c.l.b16 %v22
  %v71 = vunpack.c.l.b16 %v23
  %v72 = vunpack.c.l.b16 %v24
  %v73 = vunpack.c.l.b16 %v25
  %v74 = vunpack.c.l.b16 %v26
  %v75 = vunpack.c.l.b16 %v27
  %v76 = vunpack.c.l.b16 %v28
  %v77 = vunpack.c.l.b16 %v29
  %v78 = vunpack.c.l.b16 %v30
  %v79 = vunpack.c.l.b16 %v31
  %v80 = vunpack.c.l.b16 %v32
  %v81 = vunpack.c.l.b16 %v33
  %v82 = vunpack.c.l.b16 %v34
  %v83 = vunpack.c.l.b16 %v35
  %v84 = vunpack.c.l.b16 %v36
  %v85 = vpack.c.b16 %v70, %v69
  %v86 = vpack.c.b16 %v72, %v71
  %v87 = vpack.c.b16 %v74, %v73
  %v88 = vpack.c.b16 %v76, %v75
  %v89 = vpack.c.b16 %v78, %v77
  %v90 = vpack.c.b16 %v80, %v79
  %v91 = vpack.c.b16 %v82, %v81
  %v92 = vpack.c.b16 %v84, %v83
  %v102 = vunpack.c.l.b16 %v37
  %v103 = vunpack.c.l.b16 %v38
  %v104 = vunpack.c.l.b16 %v39
  %v105 = vunpack.c.l.b16 %v40
  %v106 = vunpack.c.l.b16 %v41
  %v107 = vunpack.c.l.b16 %v42
  %v108 = vunpack.c.l.b16 %v43
  %v109 = vunpack.c.l.b16 %v44
  %v110 = vunpack.c.l.b16 %v45
  %v111 = vpack.c.b16 %v103, %v102
  %v112 = vpack.c.b16 %v105, %v104
  %v113 = vpack.c.b16 %v107, %v106
  %v114 = vpack.c.b16 %v109, %v108
  %v115 = vpack.c.b16 %v110, %v110
  %vm120 = vcmask 588800
  %v122 = vsel %vm120, %v85, 0
  %v125 = vsel %vm120, %v86, 0
  %v128 = vsel %vm120, %v87, 0
  %v131 = vsel %vm120, %v88, 0
  %v134 = vsel %vm120, %v89, 0
  %v137 = vsel %vm120, %v90, 0
  %v140 = vsel %vm120, %v91, 0
  %v143 = vsel %vm120, %v92, 0
  %vm145 = vcmask 1043456
  %v147 = vsel %vm145, %v115, 0
  %149 = vmatprep.subr.bf16.mxu0 0
  %150 = vmatpush1.bf16.msra.mxu0 0
  %151 = vmatprep.subr.bf16.mxu0 0
  %152 = vmatpush1.bf16.msra.mxu0 0
  %153 = vmatprep.subr.bf16.mxu0 0
  %154 = vmatpush1.bf16.msra.mxu0 0
  %155 = vmatprep.subr.bf16.mxu0 0
  %156 = vmatpush1.bf16.msra.mxu0 %v147
  %157 = vmatprep.subr.bf16.mxu0 0
  %158 = vmatpush1.bf16.msra.mxu0 %v114
  %159 = vmatprep.subr.bf16.mxu0 0
  %160 = vmatpush1.bf16.msra.mxu0 %v113
  %161 = vmatprep.subr.bf16.mxu0 0
  %162 = vmatpush1.bf16.msra.mxu0 %v112
  %163 = vmatprep.subr.bf16.mxu0 0
  %164 = vmatpush1.bf16.msra.mxu0 %v111
  %165 = vmatprep.subr.bf16.mxu0 0
  %166 = vmatpush2.bf16.msra.mxu0 0
  %167 = vmatprep.subr.bf16.mxu0 0
  %168 = vmatpush2.bf16.msra.mxu0 0
  %169 = vmatprep.subr.bf16.mxu0 0
  %170 = vmatpush2.bf16.msra.mxu0 0
  %171 = vmatprep.subr.bf16.mxu0 0
  %172 = vmatpush2.bf16.msra.mxu0 0
  %173 = vmatprep.subr.bf16.mxu0 0
  %174 = vmatpush2.bf16.msra.mxu0 0
  %175 = vmatprep.subr.bf16.mxu0 0
  %176 = vmatpush2.bf16.msra.mxu0 0
  %177 = vmatprep.subr.bf16.mxu0 0
  %178 = vmatpush2.bf16.msra.mxu0 0
  %179 = vmatprep.subr.bf16.mxu0 0
  %180 = vmatpush2.bf16.msra.mxu0 0
  %181 = vmatprep.mubr.bf16.mxu0 0
  %182 = vmatmul.mubr.bf16.gmra.mxu0 %v122
  %v183 = vpop.f32.mrf.mxu0
  %v184 = vadd.f32 %v51, %v183
  %v185 = vpop.f32.mrf.mxu0
  %v186 = vpop.f32.mrf.mxu0
  %v187 = vadd.f32 %v51, %v186
  %v188 = vpop.f32.mrf.mxu0
  %189 = vmatprep.mubr.bf16.mxu0 0
  %190 = vmatmul.mubr.bf16.gmra.mxu0 %v125
  %v191 = vpop.f32.mrf.mxu0
  %v192 = vadd.f32 %v51, %v191
  %v193 = vpop.f32.mrf.mxu0
  %v194 = vpop.f32.mrf.mxu0
  %v195 = vadd.f32 %v51, %v194
  %v196 = vpop.f32.mrf.mxu0
  %197 = vmatprep.mubr.bf16.mxu0 0
  %198 = vmatmul.mubr.bf16.gmra.mxu0 %v128
  %v199 = vpop.f32.mrf.mxu0
  %v200 = vadd.f32 %v51, %v199
  %v201 = vpop.f32.mrf.mxu0
  %v202 = vpop.f32.mrf.mxu0
  %v203 = vadd.f32 %v51, %v202
  %v204 = vpop.f32.mrf.mxu0
  %205 = vmatprep.mubr.bf16.mxu0 0
  %206 = vmatmul.mubr.bf16.gmra.mxu0 %v131
  %v207 = vpop.f32.mrf.mxu0
  %v208 = vadd.f32 %v51, %v207
  %v209 = vpop.f32.mrf.mxu0
  %v210 = vpop.f32.mrf.mxu0
  %v211 = vadd.f32 %v51, %v210
  %v212 = vpop.f32.mrf.mxu0
  %213 = vmatprep.mubr.bf16.mxu0 0
  %214 = vmatmul.mubr.bf16.gmra.mxu0 %v134
  %v215 = vpop.f32.mrf.mxu0
  %v216 = vadd.f32 %v51, %v215
  %v217 = vpop.f32.mrf.mxu0
  %v218 = vpop.f32.mrf.mxu0
  %v219 = vadd.f32 %v51, %v218
  %v220 = vpop.f32.mrf.mxu0
  %221 = vmatprep.mubr.bf16.mxu0 0
  %222 = vmatmul.mubr.bf16.gmra.mxu0 %v137
  %v223 = vpop.f32.mrf.mxu0
  %v224 = vadd.f32 %v51, %v223
  %v225 = vpop.f32.mrf.mxu0
  %v226 = vpop.f32.mrf.mxu0
  %v227 = vadd.f32 %v51, %v226
  %v228 = vpop.f32.mrf.mxu0
  %229 = vmatprep.mubr.bf16.mxu0 0
  %230 = vmatmul.mubr.bf16.gmra.mxu0 %v140
  %v231 = vpop.f32.mrf.mxu0
  %v232 = vadd.f32 %v51, %v231
  %v233 = vpop.f32.mrf.mxu0
  %v234 = vpop.f32.mrf.mxu0
  %v235 = vadd.f32 %v51, %v234
  %v236 = vpop.f32.mrf.mxu0
  %237 = vmatprep.mubr.bf16.mxu0 0
  %238 = vmatmul.mubr.bf16.gmra.mxu0 %v143
  %v239 = vpop.f32.mrf.mxu0
  %v240 = vadd.f32 %v51, %v239
  %v241 = vpop.f32.mrf.mxu0
  %v242 = vpop.f32.mrf.mxu0
  %v243 = vadd.f32 %v51, %v242
  %v244 = vpop.f32.mrf.mxu0
  %245 = vdwg.mxu0
  %v246 = vld [vmem:[%s3] sm:$0x1]
  %v247 = vld [vmem:[%s4] sm:$0x1]
  %vm248 = vcmask 130048
  %v249 = vsel %vm248, %v184, 0.0
  %v250 = vsel %vm248, %v187, 0.0
  %v251 = vadd.f32 %v249, %v250
  %v252 = vsel %vm248, %v192, 0.0
  %v253 = vadd.f32 %v251, %v252
  %v254 = vsel %vm248, %v195, 0.0
  %v255 = vadd.f32 %v253, %v254
  %v256 = vsel %vm248, %v200, 0.0
  %v257 = vadd.f32 %v255, %v256
  %v258 = vsel %vm248, %v203, 0.0
  %v259 = vadd.f32 %v257, %v258
  %v260 = vsel %vm248, %v208, 0.0
  %v261 = vadd.f32 %v259, %v260
  %v262 = vsel %vm248, %v211, 0.0
  %v263 = vadd.f32 %v261, %v262
  %v264 = vsel %vm248, %v216, 0.0
  %v265 = vadd.f32 %v263, %v264
  %v266 = vsel %vm248, %v219, 0.0
  %v267 = vadd.f32 %v265, %v266
  %v268 = vsel %vm248, %v224, 0.0
  %v269 = vadd.f32 %v267, %v268
  %v270 = vsel %vm248, %v227, 0.0
  %v271 = vadd.f32 %v269, %v270
  %v272 = vsel %vm248, %v232, 0.0
  %v273 = vadd.f32 %v271, %v272
  %v274 = vsel %vm248, %v235, 0.0
  %v275 = vadd.f32 %v273, %v274
  %v276 = vsel %vm248, %v240, 0.0
  %v277 = vadd.f32 %v275, %v276
  %v278 = vsel %vm248, %v243, 0.0
  %v279 = vadd.f32 %v277, %v278
  %v280 = vrot.slane %v279, 4
  %v281 = vadd.f32 %v279, %v280
  %v282 = vrot.slane %v281, 2
  %v283 = vadd.f32 %v281, %v282
  %v284 = vrot.slane %v283, 1
  %v285 = vadd.f32 %v283, %v284
  %v286 = vmul.f32 %v184, %v184
  %v287 = vmul.f32 %v187, %v187
  %v288 = vmul.f32 %v192, %v192
  %v289 = vmul.f32 %v195, %v195
  %v290 = vmul.f32 %v200, %v200
  %v291 = vmul.f32 %v203, %v203
  %v292 = vmul.f32 %v208, %v208
  %v293 = vmul.f32 %v211, %v211
  %v294 = vmul.f32 %v216, %v216
  %v295 = vmul.f32 %v219, %v219
  %v296 = vmul.f32 %v224, %v224
  %v297 = vmul.f32 %v227, %v227
  %v298 = vmul.f32 %v232, %v232
  %v299 = vmul.f32 %v235, %v235
  %v300 = vmul.f32 %v240, %v240
  %v301 = vmul.f32 %v243, %v243
  %v302 = vsel %vm248, %v286, 0.0
  %v303 = vsel %vm248, %v287, 0.0
  %v304 = vadd.f32 %v302, %v303
  %v305 = vsel %vm248, %v288, 0.0
  %v306 = vadd.f32 %v304, %v305
  %v307 = vsel %vm248, %v289, 0.0
  %v308 = vadd.f32 %v306, %v307
  %v309 = vsel %vm248, %v290, 0.0
  %v310 = vadd.f32 %v308, %v309
  %v311 = vsel %vm248, %v291, 0.0
  %v312 = vadd.f32 %v310, %v311
  %v313 = vsel %vm248, %v292, 0.0
  %v314 = vadd.f32 %v312, %v313
  %v315 = vsel %vm248, %v293, 0.0
  %v316 = vadd.f32 %v314, %v315
  %v317 = vsel %vm248, %v294, 0.0
  %v318 = vadd.f32 %v316, %v317
  %v319 = vsel %vm248, %v295, 0.0
  %v320 = vadd.f32 %v318, %v319
  %v321 = vsel %vm248, %v296, 0.0
  %v322 = vadd.f32 %v320, %v321
  %v323 = vsel %vm248, %v297, 0.0
  %v324 = vadd.f32 %v322, %v323
  %v325 = vsel %vm248, %v298, 0.0
  %v326 = vadd.f32 %v324, %v325
  %v327 = vsel %vm248, %v299, 0.0
  %v328 = vadd.f32 %v326, %v327
  %v329 = vsel %vm248, %v300, 0.0
  %v330 = vadd.f32 %v328, %v329
  %v331 = vsel %vm248, %v301, 0.0
  %v332 = vadd.f32 %v330, %v331
  %v333 = vrot.slane %v332, 4
  %v334 = vadd.f32 %v332, %v333
  %v335 = vrot.slane %v334, 2
  %v336 = vadd.f32 %v334, %v335
  %v337 = vrot.slane %v336, 1
  %v338 = vadd.f32 %v336, %v337
  %340 = vrot.lane.b32.xlu0 %v285, 124
  %v341 = vpop.permute.xlu0 %340
  %v343 = vadd.f32 %v285, %v341
  %345 = vrot.lane.b32.xlu0 %v338, 124
  %v346 = vpop.permute.xlu0 %345
  %v348 = vadd.f32 %v338, %v346
  %349 = vrot.lane.b32.xlu0 %v285, 120
  %v350 = vpop.permute.xlu0 %349
  %v352 = vadd.f32 %v343, %v350
  %353 = vrot.lane.b32.xlu0 %v338, 120
  %v354 = vpop.permute.xlu0 %353
  %v356 = vadd.f32 %v348, %v354
  %357 = vrot.lane.b32.xlu0 %v285, 116
  %v358 = vpop.permute.xlu0 %357
  %v360 = vadd.f32 %v352, %v358
  %361 = vrot.lane.b32.xlu0 %v338, 116
  %v362 = vpop.permute.xlu0 %361
  %v364 = vadd.f32 %v356, %v362
  %v365 = vrcp.pop 512.0
  %v366 = vmul.f32 %v360, %v365
  %v367 = vmul.f32 %v364, %v365
  %v368 = vmul.f32 %v366, %v366
  %v369 = vsub.f32 %v367, %v368
  %v370 = vadd.f32 %v369, 1e-05
  %v371 = vrsqrt.pop %v370
  %373 = vrot.lane.b32.xlu0 %v366, 4
  %v374 = vpop.permute.xlu0 %373
  %376 = vrot.lane.b32.xlu0 %v366, 8
  %v377 = vpop.permute.xlu0 %376
  %379 = vrot.lane.b32.xlu0 %v366, 12
  %v380 = vpop.permute.xlu0 %379
  %vm382 = vcmask 31744
  %v383 = vsel %vm382, %v366, %v374
  %vm384 = vcmask 64512
  %v385 = vsel %vm384, %v383, %v377
  %vm386 = vcmask 97280
  %v387 = vsel %vm386, %v385, %v380
  %389 = vrot.lane.b32.xlu0 %v371, 4
  %v390 = vpop.permute.xlu0 %389
  %392 = vrot.lane.b32.xlu0 %v371, 8
  %v393 = vpop.permute.xlu0 %392
  %395 = vrot.lane.b32.xlu0 %v371, 12
  %v396 = vpop.permute.xlu0 %395
  %v398 = vsel %vm382, %v371, %v390
  %v399 = vsel %vm384, %v398, %v393
  %v400 = vsel %vm386, %v399, %v396
  %v401 = vlaneseq
  %v402 = vshrl.u32 %v401, 7
  %v403 = vsub.s32 0, %v402
  %v404 = vrot.slane %v387, %v403
  %v405 = vsub.f32 %v184, %v404
  %v406 = vsub.f32 %v187, %v404
  %v407 = vsub.f32 %v192, %v404
  %v408 = vsub.f32 %v195, %v404
  %v409 = vsub.f32 %v200, %v404
  %v410 = vsub.f32 %v203, %v404
  %v411 = vsub.f32 %v208, %v404
  %v412 = vsub.f32 %v211, %v404
  %v413 = vsub.f32 %v216, %v404
  %v414 = vsub.f32 %v219, %v404
  %v415 = vsub.f32 %v224, %v404
  %v416 = vsub.f32 %v227, %v404
  %v417 = vsub.f32 %v232, %v404
  %v418 = vsub.f32 %v235, %v404
  %v419 = vsub.f32 %v240, %v404
  %v420 = vsub.f32 %v243, %v404
  %v421 = vlaneseq
  %v422 = vshrl.u32 %v421, 7
  %v423 = vsub.s32 0, %v422
  %v424 = vrot.slane %v400, %v423
  %v425 = vmul.f32 %v405, %v424
  %v426 = vmul.f32 %v406, %v424
  %v427 = vmul.f32 %v407, %v424
  %v428 = vmul.f32 %v408, %v424
  %v429 = vmul.f32 %v409, %v424
  %v430 = vmul.f32 %v410, %v424
  %v431 = vmul.f32 %v411, %v424
  %v432 = vmul.f32 %v412, %v424
  %v433 = vmul.f32 %v413, %v424
  %v434 = vmul.f32 %v414, %v424
  %v435 = vmul.f32 %v415, %v424
  %v436 = vmul.f32 %v416, %v424
  %v437 = vmul.f32 %v417, %v424
  %v438 = vmul.f32 %v418, %v424
  %v439 = vmul.f32 %v419, %v424
  %v440 = vmul.f32 %v420, %v424
  %v442 = vlaneseq
  %v443 = vshrl.u32 %v442, 7
  %v444 = vsub.s32 0, %v443
  %v445 = vrot.slane %v246, %v444
  %v447 = vmul.f32 %v425, %v445
  %v448 = vmul.f32 %v426, %v445
  %v449 = vmul.f32 %v427, %v445
  %v450 = vmul.f32 %v428, %v445
  %v451 = vmul.f32 %v429, %v445
  %v452 = vmul.f32 %v430, %v445
  %v453 = vmul.f32 %v431, %v445
  %v454 = vmul.f32 %v432, %v445
  %v455 = vmul.f32 %v433, %v445
  %v456 = vmul.f32 %v434, %v445
  %v457 = vmul.f32 %v435, %v445
  %v458 = vmul.f32 %v436, %v445
  %v459 = vmul.f32 %v437, %v445
  %v460 = vmul.f32 %v438, %v445
  %v461 = vmul.f32 %v439, %v445
  %v462 = vmul.f32 %v440, %v445
  %v464 = vlaneseq
  %v465 = vshrl.u32 %v464, 7
  %v466 = vsub.s32 0, %v465
  %v467 = vrot.slane %v247, %v466
  %v469 = vadd.f32 %v447, %v467
  %v470 = vadd.f32 %v448, %v467
  %v471 = vadd.f32 %v449, %v467
  %v472 = vadd.f32 %v450, %v467
  %v473 = vadd.f32 %v451, %v467
  %v474 = vadd.f32 %v452, %v467
  %v475 = vadd.f32 %v453, %v467
  %v476 = vadd.f32 %v454, %v467
  %v477 = vadd.f32 %v455, %v467
  %v478 = vadd.f32 %v456, %v467
  %v479 = vadd.f32 %v457, %v467
  %v480 = vadd.f32 %v458, %v467
  %v481 = vadd.f32 %v459, %v467
  %v482 = vadd.f32 %v460, %v467
  %v483 = vadd.f32 %v461, %v467
  %v484 = vadd.f32 %v462, %v467
  %vm485 = vcmp.ge.f32.partialorder %v469, 0.0
  %vm486 = vcmp.ge.f32.partialorder %v470, 0.0
  %vm487 = vcmp.ge.f32.partialorder %v471, 0.0
  %vm488 = vcmp.ge.f32.partialorder %v472, 0.0
  %vm489 = vcmp.ge.f32.partialorder %v473, 0.0
  %vm490 = vcmp.ge.f32.partialorder %v474, 0.0
  %vm491 = vcmp.ge.f32.partialorder %v475, 0.0
  %vm492 = vcmp.ge.f32.partialorder %v476, 0.0
  %vm493 = vcmp.ge.f32.partialorder %v477, 0.0
  %vm494 = vcmp.ge.f32.partialorder %v478, 0.0
  %vm495 = vcmp.ge.f32.partialorder %v479, 0.0
  %vm496 = vcmp.ge.f32.partialorder %v480, 0.0
  %vm497 = vcmp.ge.f32.partialorder %v481, 0.0
  %vm498 = vcmp.ge.f32.partialorder %v482, 0.0
  %vm499 = vcmp.ge.f32.partialorder %v483, 0.0
  %vm500 = vcmp.ge.f32.partialorder %v484, 0.0
  %v501 = vmul.f32 %v469, 0.01
  %v502 = vmul.f32 %v470, 0.01
  %v503 = vmul.f32 %v471, 0.01
  %v504 = vmul.f32 %v472, 0.01
  %v505 = vmul.f32 %v473, 0.01
  %v506 = vmul.f32 %v474, 0.01
  %v507 = vmul.f32 %v475, 0.01
  %v508 = vmul.f32 %v476, 0.01
  %v509 = vmul.f32 %v477, 0.01
  %v510 = vmul.f32 %v478, 0.01
  %v511 = vmul.f32 %v479, 0.01
  %v512 = vmul.f32 %v480, 0.01
  %v513 = vmul.f32 %v481, 0.01
  %v514 = vmul.f32 %v482, 0.01
  %v515 = vmul.f32 %v483, 0.01
  %v516 = vmul.f32 %v484, 0.01
  %v517 = vsel %vm485, %v469, %v501
  %v518 = vsel %vm486, %v470, %v502
  %v519 = vsel %vm487, %v471, %v503
  %v520 = vsel %vm488, %v472, %v504
  %v521 = vsel %vm489, %v473, %v505
  %v522 = vsel %vm490, %v474, %v506
  %v523 = vsel %vm491, %v475, %v507
  %v524 = vsel %vm492, %v476, %v508
  %v525 = vsel %vm493, %v477, %v509
  %v526 = vsel %vm494, %v478, %v510
  %v527 = vsel %vm495, %v479, %v511
  %v528 = vsel %vm496, %v480, %v512
  %v529 = vsel %vm497, %v481, %v513
  %v530 = vsel %vm498, %v482, %v514
  %v531 = vsel %vm499, %v483, %v515
  %v532 = vsel %vm500, %v484, %v516
  %v533 = vpack.c.bf16 %v518, %v517
  %v534 = vpack.c.bf16 %v520, %v519
  %v535 = vpack.c.bf16 %v522, %v521
  %v536 = vpack.c.bf16 %v524, %v523
  %v537 = vpack.c.bf16 %v526, %v525
  %v538 = vpack.c.bf16 %v528, %v527
  %v539 = vpack.c.bf16 %v530, %v529
  %v540 = vpack.c.bf16 %v532, %v531
  %v549 = vunpack.c.l.b16 %v533
  %v550 = vunpack.c.h.b16 %v533
  %v551 = vunpack.c.l.b16 %v534
  %v552 = vunpack.c.h.b16 %v534
  %v553 = vunpack.c.l.b16 %v535
  %v554 = vunpack.c.h.b16 %v535
  %v555 = vunpack.c.l.b16 %v536
  %v556 = vunpack.c.h.b16 %v536
  %v557 = vunpack.c.l.b16 %v537
  %v558 = vunpack.c.h.b16 %v537
  %v559 = vunpack.c.l.b16 %v538
  %v560 = vunpack.c.h.b16 %v538
  %v561 = vunpack.c.l.b16 %v539
  %v562 = vunpack.c.h.b16 %v539
  %v563 = vunpack.c.l.b16 %v540
  %v564 = vunpack.c.h.b16 %v540
  %v565 = vpack.c.b16 %v549, %v549
  %v566 = vpack.c.b16 %v550, %v550
  %v567 = vpack.c.b16 %v551, %v551
  %v568 = vpack.c.b16 %v552, %v552
  %v569 = vpack.c.b16 %v553, %v553
  %v570 = vpack.c.b16 %v554, %v554
  %v571 = vpack.c.b16 %v555, %v555
  %v572 = vpack.c.b16 %v556, %v556
  %v573 = vpack.c.b16 %v557, %v557
  %v574 = vpack.c.b16 %v558, %v558
  %v575 = vpack.c.b16 %v559, %v559
  %v576 = vpack.c.b16 %v560, %v560
  %v577 = vpack.c.b16 %v561, %v561
  %v578 = vpack.c.b16 %v562, %v562
  %v579 = vpack.c.b16 %v563, %v563
  %v580 = vpack.c.b16 %v564, %v564
  %vm597 = vcmask 125952
  %598 = vst.msk [vmem:[%s5] sm:$0xf] %vm597, %v565
  %599 = vst.msk [vmem:[%s5 + $0x4] sm:$0xf] %vm597, %v566
  %600 = vst.msk [vmem:[%s5 + $0x8] sm:$0xf] %vm597, %v567
  %601 = vst.msk [vmem:[%s5 + $0xc] sm:$0xf] %vm597, %v568
  %602 = vst.msk [vmem:[%s5 + $0x10] sm:$0xf] %vm597, %v569
  %603 = vst.msk [vmem:[%s5 + $0x14] sm:$0xf] %vm597, %v570
  %604 = vst.msk [vmem:[%s5 + $0x18] sm:$0xf] %vm597, %v571
  %605 = vst.msk [vmem:[%s5 + $0x1c] sm:$0xf] %vm597, %v572
  %606 = vst.msk [vmem:[%s5 + $0x20] sm:$0xf] %vm597, %v573
  %607 = vst.msk [vmem:[%s5 + $0x24] sm:$0xf] %vm597, %v574
  %608 = vst.msk [vmem:[%s5 + $0x28] sm:$0xf] %vm597, %v575
  %609 = vst.msk [vmem:[%s5 + $0x2c] sm:$0xf] %vm597, %v576
  %610 = vst.msk [vmem:[%s5 + $0x30] sm:$0xf] %vm597, %v577
  %611 = vst.msk [vmem:[%s5 + $0x34] sm:$0xf] %vm597, %v578
  %612 = vst.msk [vmem:[%s5 + $0x38] sm:$0xf] %vm597, %v579
  %613 = vst.msk [vmem:[%s5 + $0x3c] sm:$0xf] %vm597, %v580
  // Predicated region
  $region22: #{tiny_vae_forward.7} parent=0 // pred_check
    _
  $region23: #{tiny_vae_forward.7} parent=0 // pred_check_branch
    %615 = sbr.rel (0) target = $region25
  $region24: #{tiny_vae_forward.7} parent=0 // pred_region
    _
  $region25: #{tiny_vae_forward.7} parent=0 // pred_fallthru
    _
  // Predicated region
  $region26: #{tiny_vae_forward.7} parent=0 // pred_check
    _
  $region27: #{tiny_vae_forward.7} parent=0 // pred_check_branch
    %617 = sbr.rel (0) target = $region29
  $region28: #{tiny_vae_forward.7} parent=0 // pred_region
    _
  $region29: #{tiny_vae_forward.7} parent=0 // pred_fallthru
    _

// kernel: tiny_vae_forward.8
$region0: #{tiny_vae_forward.8}
  #allocation0 [shape = 'u32[]', space=smem, size = 0x4, offset = 0x4, fixed_abs, tag = 'smem constant byte address 0x4 - core index']
  #allocation1 [shape = 'u32[144,128]{1,0:T(1,128)}', space=vmem, size = 0x12000, scoped, tag = 'internal scratch']
  %s0 = inlined_call_operand.vmem [shape: bf16[512,36], index: 0, kind: input, shape index: {}]
  %s1 = inlined_call_operand.vmem [shape: bf16[36,16], index: 1, kind: input, shape index: {}]
  %s2 = inlined_call_operand.vmem [shape: f32[1,16], index: 2, kind: input, shape index: {}]
  %s3 = inlined_call_operand.vmem [shape: f32[1,16], index: 3, kind: input, shape index: {}]
  %s4 = inlined_call_operand.vmem [shape: f32[1,16], index: 4, kind: input, shape index: {}]
  %s5 = inlined_call_operand.vmem [shape: bf16[512,16], index: 5, kind: output, shape index: {}]
  %s6 = sld [smem:[#allocation0]]
  $region30: #{tiny_vae_forward.8} parent=0
    _
  %s8 = ssub.s32 1, %s6
  %s9 = scalar_select 0, %s8, %s6
  // Predicated region
  $region2: #{tiny_vae_forward.8} parent=0 // pred_check
    _
  $region3: #{tiny_vae_forward.8} parent=0 // pred_check_branch
    %11 = sbr.rel (0) target = $region5
  $region4: #{tiny_vae_forward.8} parent=0 // pred_region
    _
  $region5: #{tiny_vae_forward.8} parent=0 // pred_fallthru
    _
  // Predicated region
  $region6: #{tiny_vae_forward.8} parent=0 // pred_check
    _
  $region7: #{tiny_vae_forward.8} parent=0 // pred_check_branch
    %13 = sbr.rel (0) target = $region9
  $region8: #{tiny_vae_forward.8} parent=0 // pred_region
    _
  $region9: #{tiny_vae_forward.8} parent=0 // pred_fallthru
    _
  // Predicated region
  $region10: #{tiny_vae_forward.8} parent=0 // pred_check
    _
  $region11: #{tiny_vae_forward.8} parent=0 // pred_check_branch
    %15 = sbr.rel (0) target = $region13
  $region12: #{tiny_vae_forward.8} parent=0 // pred_region
    _
  $region13: #{tiny_vae_forward.8} parent=0 // pred_fallthru
    _
  // Predicated region
  $region14: #{tiny_vae_forward.8} parent=0 // pred_check
    _
  $region15: #{tiny_vae_forward.8} parent=0 // pred_check_branch
    %17 = sbr.rel (0) target = $region17
  $region16: #{tiny_vae_forward.8} parent=0 // pred_region
    _
  $region17: #{tiny_vae_forward.8} parent=0 // pred_fallthru
    _
  // Predicated region
  $region18: #{tiny_vae_forward.8} parent=0 // pred_check
    _
  $region19: #{tiny_vae_forward.8} parent=0 // pred_check_branch
    %19 = sbr.rel (0) target = $region21
  $region20: #{tiny_vae_forward.8} parent=0 // pred_region
    _
  $region21: #{tiny_vae_forward.8} parent=0 // pred_fallthru
    _
  %v21 = vld [vmem:[%s0] sm:$0xf]
  %v22 = vld [vmem:[%s0 + $0x4] sm:$0xf]
  %v23 = vld [vmem:[%s0 + $0x8] sm:$0xf]
  %v24 = vld [vmem:[%s0 + $0xc] sm:$0xf]
  %v25 = vld [vmem:[%s0 + $0x10] sm:$0xf]
  %v26 = vld [vmem:[%s0 + $0x14] sm:$0xf]
  %v27 = vld [vmem:[%s0 + $0x18] sm:$0xf]
  %v28 = vld [vmem:[%s0 + $0x1c] sm:$0xf]
  %v29 = vld [vmem:[%s0 + $0x20] sm:$0xf]
  %v30 = vld [vmem:[%s0 + $0x24] sm:$0xf]
  %v31 = vld [vmem:[%s0 + $0x28] sm:$0xf]
  %v32 = vld [vmem:[%s0 + $0x2c] sm:$0xf]
  %v33 = vld [vmem:[%s0 + $0x30] sm:$0xf]
  %v34 = vld [vmem:[%s0 + $0x34] sm:$0xf]
  %v35 = vld [vmem:[%s0 + $0x38] sm:$0xf]
  %v36 = vld [vmem:[%s0 + $0x3c] sm:$0xf]
  %v37 = vld [vmem:[%s0 + $0x40] sm:$0xf]
  %v38 = vld [vmem:[%s0 + $0x44] sm:$0xf]
  %v39 = vld [vmem:[%s0 + $0x48] sm:$0xf]
  %v40 = vld [vmem:[%s0 + $0x4c] sm:$0xf]
  %v41 = vld [vmem:[%s0 + $0x50] sm:$0xf]
  %v42 = vld [vmem:[%s0 + $0x54] sm:$0xf]
  %v43 = vld [vmem:[%s0 + $0x58] sm:$0xf]
  %v44 = vld [vmem:[%s0 + $0x5c] sm:$0xf]
  %v45 = vld [vmem:[%s0 + $0x60] sm:$0xf]
  %v46 = vld [vmem:[%s0 + $0x64] sm:$0xf]
  %v47 = vld [vmem:[%s0 + $0x68] sm:$0xf]
  %v48 = vld [vmem:[%s0 + $0x6c] sm:$0xf]
  %v49 = vld [vmem:[%s0 + $0x70] sm:$0xf]
  %v50 = vld [vmem:[%s0 + $0x74] sm:$0xf]
  %v51 = vld [vmem:[%s0 + $0x78] sm:$0xf]
  %v52 = vld [vmem:[%s0 + $0x7c] sm:$0xf]
  %v53 = vld [vmem:[%s0 + $0x80] sm:$0xf]
  %v54 = vld [vmem:[%s0 + $0x84] sm:$0xf]
  %v55 = vld [vmem:[%s0 + $0x88] sm:$0xf]
  %v56 = vld [vmem:[%s0 + $0x8c] sm:$0xf]
  %v57 = vld [vmem:[%s0 + $0x90] sm:$0xf]
  %v58 = vld [vmem:[%s0 + $0x94] sm:$0xf]
  %v59 = vld [vmem:[%s0 + $0x98] sm:$0xf]
  %v60 = vld [vmem:[%s0 + $0x9c] sm:$0xf]
  %v61 = vld [vmem:[%s0 + $0xa0] sm:$0xf]
  %v62 = vld [vmem:[%s0 + $0xa4] sm:$0xf]
  %v63 = vld [vmem:[%s0 + $0xa8] sm:$0xf]
  %v64 = vld [vmem:[%s0 + $0xac] sm:$0xf]
  %v65 = vld [vmem:[%s0 + $0xb0] sm:$0xf]
  %v66 = vld [vmem:[%s0 + $0xb4] sm:$0xf]
  %v67 = vld [vmem:[%s0 + $0xb8] sm:$0xf]
  %v68 = vld [vmem:[%s0 + $0xbc] sm:$0xf]
  %v69 = vld [vmem:[%s0 + $0xc0] sm:$0xf]
  %v70 = vld [vmem:[%s0 + $0xc4] sm:$0xf]
  %v71 = vld [vmem:[%s0 + $0xc8] sm:$0xf]
  %v72 = vld [vmem:[%s0 + $0xcc] sm:$0xf]
  %v73 = vld [vmem:[%s0 + $0xd0] sm:$0xf]
  %v74 = vld [vmem:[%s0 + $0xd4] sm:$0xf]
  %v75 = vld [vmem:[%s0 + $0xd8] sm:$0xf]
  %v76 = vld [vmem:[%s0 + $0xdc] sm:$0xf]
  %v77 = vld [vmem:[%s0 + $0xe0] sm:$0xf]
  %v78 = vld [vmem:[%s0 + $0xe4] sm:$0xf]
  %v79 = vld [vmem:[%s0 + $0xe8] sm:$0xf]
  %v80 = vld [vmem:[%s0 + $0xec] sm:$0xf]
  %v81 = vld [vmem:[%s0 + $0xf0] sm:$0xf]
  %v82 = vld [vmem:[%s0 + $0xf4] sm:$0xf]
  %v83 = vld [vmem:[%s0 + $0xf8] sm:$0xf]
  %v84 = vld [vmem:[%s0 + $0xfc] sm:$0xf]
  %v85 = vld [vmem:[%s1] sm:$0xf]
  %v86 = vld [vmem:[%s1 + $0x4] sm:$0xf]
  %v87 = vld [vmem:[%s1 + $0x8] sm:$0xf]
  %v88 = vld [vmem:[%s1 + $0xc] sm:$0xf]
  %v89 = vld [vmem:[%s1 + $0x10] sm:$0x3]
  %v90 = vld [vmem:[%s2] sm:$0x1]
  %v92 = vlaneseq
  %v93 = vshrl.u32 %v92, 7
  %v94 = vsub.s32 0, %v93
  %v95 = vrot.slane %v90, %v94
  %v161 = vunpack.c.l.b16 %v21
  %v162 = vunpack.c.l.b16 %v22
  %v163 = vunpack.c.l.b16 %v23
  %v164 = vunpack.c.l.b16 %v24
  %v165 = vunpack.c.l.b16 %v25
  %v166 = vunpack.c.l.b16 %v26
  %v167 = vunpack.c.l.b16 %v27
  %v168 = vunpack.c.l.b16 %v28
  %v169 = vunpack.c.l.b16 %v29
  %v170 = vunpack.c.l.b16 %v30
  %v171 = vunpack.c.l.b16 %v31
  %v172 = vunpack.c.l.b16 %v32
  %v173 = vunpack.c.l.b16 %v33
  %v174 = vunpack.c.l.b16 %v34
  %v175 = vunpack.c.l.b16 %v35
  %v176 = vunpack.c.l.b16 %v36
  %v177 = vunpack.c.l.b16 %v37
  %v178 = vunpack.c.l.b16 %v38
  %v179 = vunpack.c.l.b16 %v39
  %v180 = vunpack.c.l.b16 %v40
  %v181 = vunpack.c.l.b16 %v41
  %v182 = vunpack.c.l.b16 %v42
  %v183 = vunpack.c.l.b16 %v43
  %v184 = vunpack.c.l.b16 %v44
  %v185 = vunpack.c.l.b16 %v45
  %v186 = vunpack.c.l.b16 %v46
  %v187 = vunpack.c.l.b16 %v47
  %v188 = vunpack.c.l.b16 %v48
  %v189 = vunpack.c.l.b16 %v49
  %v190 = vunpack.c.l.b16 %v50
  %v191 = vunpack.c.l.b16 %v51
  %v192 = vunpack.c.l.b16 %v52
  %v193 = vunpack.c.l.b16 %v53
  %v194 = vunpack.c.l.b16 %v54
  %v195 = vunpack.c.l.b16 %v55
  %v196 = vunpack.c.l.b16 %v56
  %v197 = vunpack.c.l.b16 %v57
  %v198 = vunpack.c.l.b16 %v58
  %v199 = vunpack.c.l.b16 %v59
  %v200 = vunpack.c.l.b16 %v60
  %v201 = vunpack.c.l.b16 %v61
  %v202 = vunpack.c.l.b16 %v62
  %v203 = vunpack.c.l.b16 %v63
  %v204 = vunpack.c.l.b16 %v64
  %v205 = vunpack.c.l.b16 %v65
  %v206 = vunpack.c.l.b16 %v66
  %v207 = vunpack.c.l.b16 %v67
  %v208 = vunpack.c.l.b16 %v68
  %v209 = vunpack.c.l.b16 %v69
  %v210 = vunpack.c.l.b16 %v70
  %v211 = vunpack.c.l.b16 %v71
  %v212 = vunpack.c.l.b16 %v72
  %v213 = vunpack.c.l.b16 %v73
  %v214 = vunpack.c.l.b16 %v74
  %v215 = vunpack.c.l.b16 %v75
  %v216 = vunpack.c.l.b16 %v76
  %v217 = vunpack.c.l.b16 %v77
  %v218 = vunpack.c.l.b16 %v78
  %v219 = vunpack.c.l.b16 %v79
  %v220 = vunpack.c.l.b16 %v80
  %v221 = vunpack.c.l.b16 %v81
  %v222 = vunpack.c.l.b16 %v82
  %v223 = vunpack.c.l.b16 %v83
  %v224 = vunpack.c.l.b16 %v84
  %v225 = vpack.c.b16 %v162, %v161
  %v226 = vpack.c.b16 %v164, %v163
  %v227 = vpack.c.b16 %v166, %v165
  %v228 = vpack.c.b16 %v168, %v167
  %v229 = vpack.c.b16 %v170, %v169
  %v230 = vpack.c.b16 %v172, %v171
  %v231 = vpack.c.b16 %v174, %v173
  %v232 = vpack.c.b16 %v176, %v175
  %v233 = vpack.c.b16 %v178, %v177
  %v234 = vpack.c.b16 %v180, %v179
  %v235 = vpack.c.b16 %v182, %v181
  %v236 = vpack.c.b16 %v184, %v183
  %v237 = vpack.c.b16 %v186, %v185
  %v238 = vpack.c.b16 %v188, %v187
  %v239 = vpack.c.b16 %v190, %v189
  %v240 = vpack.c.b16 %v192, %v191
  %v241 = vpack.c.b16 %v194, %v193
  %v242 = vpack.c.b16 %v196, %v195
  %v243 = vpack.c.b16 %v198, %v197
  %v244 = vpack.c.b16 %v200, %v199
  %v245 = vpack.c.b16 %v202, %v201
  %v246 = vpack.c.b16 %v204, %v203
  %v247 = vpack.c.b16 %v206, %v205
  %v248 = vpack.c.b16 %v208, %v207
  %v249 = vpack.c.b16 %v210, %v209
  %v250 = vpack.c.b16 %v212, %v211
  %v251 = vpack.c.b16 %v214, %v213
  %v252 = vpack.c.b16 %v216, %v215
  %v253 = vpack.c.b16 %v218, %v217
  %v254 = vpack.c.b16 %v220, %v219
  %v255 = vpack.c.b16 %v222, %v221
  %v256 = vpack.c.b16 %v224, %v223
  %v262 = vunpack.c.l.b16 %v85
  %v263 = vunpack.c.l.b16 %v86
  %v264 = vunpack.c.l.b16 %v87
  %v265 = vunpack.c.l.b16 %v88
  %v266 = vunpack.c.l.b16 %v89
  %v267 = vpack.c.b16 %v263, %v262
  %v268 = vpack.c.b16 %v265, %v264
  %v269 = vpack.c.b16 %v266, %v266
  %vm272 = vcmask 293888
  %v274 = vsel %vm272, %v225, 0
  %v277 = vsel %vm272, %v226, 0
  %v280 = vsel %vm272, %v227, 0
  %v283 = vsel %vm272, %v228, 0
  %v286 = vsel %vm272, %v229, 0
  %v289 = vsel %vm272, %v230, 0
  %v292 = vsel %vm272, %v231, 0
  %v295 = vsel %vm272, %v232, 0
  %v298 = vsel %vm272, %v233, 0
  %v301 = vsel %vm272, %v234, 0
  %v304 = vsel %vm272, %v235, 0
  %v307 = vsel %vm272, %v236, 0
  %v310 = vsel %vm272, %v237, 0
  %v313 = vsel %vm272, %v238, 0
  %v316 = vsel %vm272, %v239, 0
  %v319 = vsel %vm272, %v240, 0
  %v322 = vsel %vm272, %v241, 0
  %v325 = vsel %vm272, %v242, 0
  %v328 = vsel %vm272, %v243, 0
  %v331 = vsel %vm272, %v244, 0
  %v334 = vsel %vm272, %v245, 0
  %v337 = vsel %vm272, %v246, 0
  %v340 = vsel %vm272, %v247, 0
  %v343 = vsel %vm272, %v248, 0
  %v346 = vsel %vm272, %v249, 0
  %v349 = vsel %vm272, %v250, 0
  %v352 = vsel %vm272, %v251, 0
  %v355 = vsel %vm272, %v252, 0
  %v358 = vsel %vm272, %v253, 0
  %v361 = vsel %vm272, %v254, 0
  %v364 = vsel %vm272, %v255, 0
  %v367 = vsel %vm272, %v256, 0
  %vm369 = vcmask 1041408
  %v371 = vsel %vm369, %v269, 0
  %373 = vmatprep.subr.bf16.mxu0 0
  %374 = vmatpush1.bf16.msra.mxu0 0
  %375 = vmatprep.subr.bf16.mxu0 0
  %376 = vmatpush1.bf16.msra.mxu0 0
  %377 = vmatprep.subr.bf16.mxu0 0
  %378 = vmatpush1.bf16.msra.mxu0 0
  %379 = vmatprep.subr.bf16.mxu0 0
  %380 = vmatpush1.bf16.msra.mxu0 0
  %381 = vmatprep.subr.bf16.mxu0 0
  %382 = vmatpush1.bf16.msra.mxu0 0
  %383 = vmatprep.subr.bf16.mxu0 0
  %384 = vmatpush1.bf16.msra.mxu0 %v371
  %385 = vmatprep.subr.bf16.mxu0 0
  %386 = vmatpush1.bf16.msra.mxu0 %v268
  %387 = vmatprep.subr.bf16.mxu0 0
  %388 = vmatpush1.bf16.msra.mxu0 %v267
  %389 = vmatprep.subr.bf16.mxu0 0
  %390 = vmatpush2.bf16.msra.mxu0 0
  %391 = vmatprep.subr.bf16.mxu0 0
  %392 = vmatpush2.bf16.msra.mxu0 0
  %393 = vmatprep.subr.bf16.mxu0 0
  %394 = vmatpush2.bf16.msra.mxu0 0
  %395 = vmatprep.subr.bf16.mxu0 0
  %396 = vmatpush2.bf16.msra.mxu0 0
  %397 = vmatprep.subr.bf16.mxu0 0
  %398 = vmatpush2.bf16.msra.mxu0 0
  %399 = vmatprep.subr.bf16.mxu0 0
  %400 = vmatpush2.bf16.msra.mxu0 0
  %401 = vmatprep.subr.bf16.mxu0 0
  %402 = vmatpush2.bf16.msra.mxu0 0
  %403 = vmatprep.subr.bf16.mxu0 0
  %404 = vmatpush2.bf16.msra.mxu0 0
  %405 = vmatprep.mubr.bf16.mxu0 0
  %406 = vmatmul.mubr.bf16.gmra.mxu0 %v274
  %v407 = vpop.f32.mrf.mxu0
  %v408 = vadd.f32 %v95, %v407
  %v409 = vpop.f32.mrf.mxu0
  %v410 = vpop.f32.mrf.mxu0
  %v411 = vadd.f32 %v95, %v410
  %v412 = vpop.f32.mrf.mxu0
  %413 = vmatprep.mubr.bf16.mxu0 0
  %414 = vmatmul.mubr.bf16.gmra.mxu0 %v277
  %v415 = vpop.f32.mrf.mxu0
  %v416 = vadd.f32 %v95, %v415
  %v417 = vpop.f32.mrf.mxu0
  %v418 = vpop.f32.mrf.mxu0
  %v419 = vadd.f32 %v95, %v418
  %v420 = vpop.f32.mrf.mxu0
  %421 = vmatprep.mubr.bf16.mxu0 0
  %422 = vmatmul.mubr.bf16.gmra.mxu0 %v280
  %v423 = vpop.f32.mrf.mxu0
  %v424 = vadd.f32 %v95, %v423
  %v425 = vpop.f32.mrf.mxu0
  %v426 = vpop.f32.mrf.mxu0
  %v427 = vadd.f32 %v95, %v426
  %v428 = vpop.f32.mrf.mxu0
  %429 = vmatprep.mubr.bf16.mxu0 0
  %430 = vmatmul.mubr.bf16.gmra.mxu0 %v283
  %v431 = vpop.f32.mrf.mxu0
  %v432 = vadd.f32 %v95, %v431
  %v433 = vpop.f32.mrf.mxu0
  %v434 = vpop.f32.mrf.mxu0
  %v435 = vadd.f32 %v95, %v434
  %v436 = vpop.f32.mrf.mxu0
  %437 = vmatprep.mubr.bf16.mxu0 0
  %438 = vmatmul.mubr.bf16.gmra.mxu0 %v286
  %v439 = vpop.f32.mrf.mxu0
  %v440 = vadd.f32 %v95, %v439
  %v441 = vpop.f32.mrf.mxu0
  %v442 = vpop.f32.mrf.mxu0
  %v443 = vadd.f32 %v95, %v442
  %v444 = vpop.f32.mrf.mxu0
  %445 = vmatprep.mubr.bf16.mxu0 0
  %446 = vmatmul.mubr.bf16.gmra.mxu0 %v289
  %v447 = vpop.f32.mrf.mxu0
  %v448 = vadd.f32 %v95, %v447
  %v449 = vpop.f32.mrf.mxu0
  %v450 = vpop.f32.mrf.mxu0
  %v451 = vadd.f32 %v95, %v450
  %v452 = vpop.f32.mrf.mxu0
  %453 = vmatprep.mubr.bf16.mxu0 0
  %454 = vmatmul.mubr.bf16.gmra.mxu0 %v292
  %v455 = vpop.f32.mrf.mxu0
  %v456 = vadd.f32 %v95, %v455
  %v457 = vpop.f32.mrf.mxu0
  %v458 = vpop.f32.mrf.mxu0
  %v459 = vadd.f32 %v95, %v458
  %v460 = vpop.f32.mrf.mxu0
  %461 = vmatprep.mubr.bf16.mxu0 0
  %462 = vmatmul.mubr.bf16.gmra.mxu0 %v295
  %v463 = vpop.f32.mrf.mxu0
  %v464 = vadd.f32 %v95, %v463
  %v465 = vpop.f32.mrf.mxu0
  %v466 = vpop.f32.mrf.mxu0
  %v467 = vadd.f32 %v95, %v466
  %v468 = vpop.f32.mrf.mxu0
  %469 = vmatprep.mubr.bf16.mxu0 0
  %470 = vmatmul.mubr.bf16.gmra.mxu0 %v298
  %v471 = vpop.f32.mrf.mxu0
  %v472 = vadd.f32 %v95, %v471
  %v473 = vpop.f32.mrf.mxu0
  %v474 = vpop.f32.mrf.mxu0
  %v475 = vadd.f32 %v95, %v474
  %v476 = vpop.f32.mrf.mxu0
  %477 = vmatprep.mubr.bf16.mxu0 0
  %478 = vmatmul.mubr.bf16.gmra.mxu0 %v301
  %v479 = vpop.f32.mrf.mxu0
  %v480 = vadd.f32 %v95, %v479
  %v481 = vpop.f32.mrf.mxu0
  %v482 = vpop.f32.mrf.mxu0
  %v483 = vadd.f32 %v95, %v482
  %v484 = vpop.f32.mrf.mxu0
  %485 = vmatprep.mubr.bf16.mxu0 0
  %486 = vmatmul.mubr.bf16.gmra.mxu0 %v304
  %v487 = vpop.f32.mrf.mxu0
  %v488 = vadd.f32 %v95, %v487
  %v489 = vpop.f32.mrf.mxu0
  %v490 = vpop.f32.mrf.mxu0
  %v491 = vadd.f32 %v95, %v490
  %v492 = vpop.f32.mrf.mxu0
  %493 = vmatprep.mubr.bf16.mxu0 0
  %494 = vmatmul.mubr.bf16.gmra.mxu0 %v307
  %v495 = vpop.f32.mrf.mxu0
  %v496 = vadd.f32 %v95, %v495
  %v497 = vpop.f32.mrf.mxu0
  %v498 = vpop.f32.mrf.mxu0
  %v499 = vadd.f32 %v95, %v498
  %v500 = vpop.f32.mrf.mxu0
  %501 = vmatprep.mubr.bf16.mxu0 0
  %502 = vmatmul.mubr.bf16.gmra.mxu0 %v310
  %v503 = vpop.f32.mrf.mxu0
  %v504 = vadd.f32 %v95, %v503
  %v505 = vpop.f32.mrf.mxu0
  %v506 = vpop.f32.mrf.mxu0
  %v507 = vadd.f32 %v95, %v506
  %v508 = vpop.f32.mrf.mxu0
  %509 = vmatprep.mubr.bf16.mxu0 0
  %510 = vmatmul.mubr.bf16.gmra.mxu0 %v313
  %v511 = vpop.f32.mrf.mxu0
  %v512 = vadd.f32 %v95, %v511
  %v513 = vpop.f32.mrf.mxu0
  %v514 = vpop.f32.mrf.mxu0
  %v515 = vadd.f32 %v95, %v514
  %v516 = vpop.f32.mrf.mxu0
  %517 = vmatprep.mubr.bf16.mxu0 0
  %518 = vmatmul.mubr.bf16.gmra.mxu0 %v316
  %v519 = vpop.f32.mrf.mxu0
  %v520 = vadd.f32 %v95, %v519
  %v521 = vpop.f32.mrf.mxu0
  %v522 = vpop.f32.mrf.mxu0
  %v523 = vadd.f32 %v95, %v522
  %v524 = vpop.f32.mrf.mxu0
  %525 = vmatprep.mubr.bf16.mxu0 0
  %526 = vmatmul.mubr.bf16.gmra.mxu0 %v319
  %v527 = vpop.f32.mrf.mxu0
  %v528 = vadd.f32 %v95, %v527
  %v529 = vpop.f32.mrf.mxu0
  %v530 = vpop.f32.mrf.mxu0
  %v531 = vadd.f32 %v95, %v530
  %v532 = vpop.f32.mrf.mxu0
  %533 = vmatprep.mubr.bf16.mxu0 0
  %534 = vmatmul.mubr.bf16.gmra.mxu0 %v322
  %v535 = vpop.f32.mrf.mxu0
  %v536 = vadd.f32 %v95, %v535
  %v537 = vpop.f32.mrf.mxu0
  %v538 = vpop.f32.mrf.mxu0
  %v539 = vadd.f32 %v95, %v538
  %v540 = vpop.f32.mrf.mxu0
  %541 = vmatprep.mubr.bf16.mxu0 0
  %542 = vmatmul.mubr.bf16.gmra.mxu0 %v325
  %v543 = vpop.f32.mrf.mxu0
  %v544 = vadd.f32 %v95, %v543
  %v545 = vpop.f32.mrf.mxu0
  %v546 = vpop.f32.mrf.mxu0
  %v547 = vadd.f32 %v95, %v546
  %v548 = vpop.f32.mrf.mxu0
  %549 = vmatprep.mubr.bf16.mxu0 0
  %550 = vmatmul.mubr.bf16.gmra.mxu0 %v328
  %v551 = vpop.f32.mrf.mxu0
  %v552 = vadd.f32 %v95, %v551
  %v553 = vpop.f32.mrf.mxu0
  %v554 = vpop.f32.mrf.mxu0
  %v555 = vadd.f32 %v95, %v554
  %v556 = vpop.f32.mrf.mxu0
  %557 = vmatprep.mubr.bf16.mxu0 0
  %558 = vmatmul.mubr.bf16.gmra.mxu0 %v331
  %v559 = vpop.f32.mrf.mxu0
  %v560 = vadd.f32 %v95, %v559
  %v561 = vpop.f32.mrf.mxu0
  %v562 = vpop.f32.mrf.mxu0
  %v563 = vadd.f32 %v95, %v562
  %v564 = vpop.f32.mrf.mxu0
  %565 = vmatprep.mubr.bf16.mxu0 0
  %566 = vmatmul.mubr.bf16.gmra.mxu0 %v334
  %v567 = vpop.f32.mrf.mxu0
  %v568 = vadd.f32 %v95, %v567
  %v569 = vpop.f32.mrf.mxu0
  %v570 = vpop.f32.mrf.mxu0
  %v571 = vadd.f32 %v95, %v570
  %v572 = vpop.f32.mrf.mxu0
  %573 = vmatprep.mubr.bf16.mxu0 0
  %574 = vmatmul.mubr.bf16.gmra.mxu0 %v337
  %v575 = vpop.f32.mrf.mxu0
  %v576 = vadd.f32 %v95, %v575
  %v577 = vpop.f32.mrf.mxu0
  %v578 = vpop.f32.mrf.mxu0
  %v579 = vadd.f32 %v95, %v578
  %v580 = vpop.f32.mrf.mxu0
  %581 = vmatprep.mubr.bf16.mxu0 0
  %582 = vmatmul.mubr.bf16.gmra.mxu0 %v340
  %v583 = vpop.f32.mrf.mxu0
  %v584 = vadd.f32 %v95, %v583
  %v585 = vpop.f32.mrf.mxu0
  %v586 = vpop.f32.mrf.mxu0
  %v587 = vadd.f32 %v95, %v586
  %v588 = vpop.f32.mrf.mxu0
  %589 = vmatprep.mubr.bf16.mxu0 0
  %590 = vmatmul.mubr.bf16.gmra.mxu0 %v343
  %v591 = vpop.f32.mrf.mxu0
  %v592 = vadd.f32 %v95, %v591
  %v593 = vpop.f32.mrf.mxu0
  %v594 = vpop.f32.mrf.mxu0
  %v595 = vadd.f32 %v95, %v594
  %v596 = vpop.f32.mrf.mxu0
  %597 = vmatprep.mubr.bf16.mxu0 0
  %598 = vmatmul.mubr.bf16.gmra.mxu0 %v346
  %v599 = vpop.f32.mrf.mxu0
  %v600 = vadd.f32 %v95, %v599
  %v601 = vpop.f32.mrf.mxu0
  %v602 = vpop.f32.mrf.mxu0
  %v603 = vadd.f32 %v95, %v602
  %v604 = vpop.f32.mrf.mxu0
  %605 = vmatprep.mubr.bf16.mxu0 0
  %606 = vmatmul.mubr.bf16.gmra.mxu0 %v349
  %v607 = vpop.f32.mrf.mxu0
  %v608 = vadd.f32 %v95, %v607
  %v609 = vpop.f32.mrf.mxu0
  %v610 = vpop.f32.mrf.mxu0
  %v611 = vadd.f32 %v95, %v610
  %v612 = vpop.f32.mrf.mxu0
  %613 = vmatprep.mubr.bf16.mxu0 0
  %614 = vmatmul.mubr.bf16.gmra.mxu0 %v352
  %v615 = vpop.f32.mrf.mxu0
  %v616 = vadd.f32 %v95, %v615
  %v617 = vpop.f32.mrf.mxu0
  %v618 = vpop.f32.mrf.mxu0
  %v619 = vadd.f32 %v95, %v618
  %v620 = vpop.f32.mrf.mxu0
  %621 = vmatprep.mubr.bf16.mxu0 0
  %622 = vmatmul.mubr.bf16.gmra.mxu0 %v355
  %v623 = vpop.f32.mrf.mxu0
  %v624 = vadd.f32 %v95, %v623
  %v625 = vpop.f32.mrf.mxu0
  %v626 = vpop.f32.mrf.mxu0
  %v627 = vadd.f32 %v95, %v626
  %v628 = vpop.f32.mrf.mxu0
  %629 = vmatprep.mubr.bf16.mxu0 0
  %630 = vmatmul.mubr.bf16.gmra.mxu0 %v358
  %v631 = vpop.f32.mrf.mxu0
  %v632 = vadd.f32 %v95, %v631
  %v633 = vpop.f32.mrf.mxu0
  %v634 = vpop.f32.mrf.mxu0
  %v635 = vadd.f32 %v95, %v634
  %v636 = vpop.f32.mrf.mxu0
  %637 = vmatprep.mubr.bf16.mxu0 0
  %638 = vmatmul.mubr.bf16.gmra.mxu0 %v361
  %v639 = vpop.f32.mrf.mxu0
  %v640 = vadd.f32 %v95, %v639
  %v641 = vpop.f32.mrf.mxu0
  %v642 = vpop.f32.mrf.mxu0
  %v643 = vadd.f32 %v95, %v642
  %v644 = vpop.f32.mrf.mxu0
  %645 = vmatprep.mubr.bf16.mxu0 0
  %646 = vmatmul.mubr.bf16.gmra.mxu0 %v364
  %v647 = vpop.f32.mrf.mxu0
  %v648 = vadd.f32 %v95, %v647
  %v649 = vpop.f32.mrf.mxu0
  %v650 = vpop.f32.mrf.mxu0
  %v651 = vadd.f32 %v95, %v650
  %v652 = vpop.f32.mrf.mxu0
  %653 = vmatprep.mubr.bf16.mxu0 0
  %654 = vmatmul.mubr.bf16.gmra.mxu0 %v367
  %v655 = vpop.f32.mrf.mxu0
  %v656 = vadd.f32 %v95, %v655
  %v657 = vpop.f32.mrf.mxu0
  %v658 = vpop.f32.mrf.mxu0
  %v659 = vadd.f32 %v95, %v658
  %v660 = vpop.f32.mrf.mxu0
  %661 = vdwg.mxu0
  %v662 = vld [vmem:[%s3] sm:$0x1]
  %v663 = vld [vmem:[%s4] sm:$0x1]
  %vm664 = vcmask 130048
  %v665 = vsel %vm664, %v408, 0.0
  %v666 = vsel %vm664, %v411, 0.0
  %v667 = vadd.f32 %v665, %v666
  %v668 = vsel %vm664, %v416, 0.0
  %v669 = vadd.f32 %v667, %v668
  %v670 = vsel %vm664, %v419, 0.0
  %v671 = vadd.f32 %v669, %v670
  %v672 = vsel %vm664, %v424, 0.0
  %v673 = vadd.f32 %v671, %v672
  %v674 = vsel %vm664, %v427, 0.0
  %v675 = vadd.f32 %v673, %v674
  %v676 = vsel %vm664, %v432, 0.0
  %v677 = vadd.f32 %v675, %v676
  %v678 = vsel %vm664, %v435, 0.0
  %v679 = vadd.f32 %v677, %v678
  %v680 = vsel %vm664, %v440, 0.0
  %v681 = vadd.f32 %v679, %v680
  %v682 = vsel %vm664, %v443, 0.0
  %v683 = vadd.f32 %v681, %v682
  %v684 = vsel %vm664, %v448, 0.0
  %v685 = vadd.f32 %v683, %v684
  %v686 = vsel %vm664, %v451, 0.0
  %v687 = vadd.f32 %v685, %v686
  %v688 = vsel %vm664, %v456, 0.0
  %v689 = vadd.f32 %v687, %v688
  %v690 = vsel %vm664, %v459, 0.0
  %v691 = vadd.f32 %v689, %v690
  %v692 = vsel %vm664, %v464, 0.0
  %v693 = vadd.f32 %v691, %v692
  %v694 = vsel %vm664, %v467, 0.0
  %v695 = vadd.f32 %v693, %v694
  %v696 = vsel %vm664, %v472, 0.0
  %v697 = vadd.f32 %v695, %v696
  %v698 = vsel %vm664, %v475, 0.0
  %v699 = vadd.f32 %v697, %v698
  %v700 = vsel %vm664, %v480, 0.0
  %v701 = vadd.f32 %v699, %v700
  %v702 = vsel %vm664, %v483, 0.0
  %v703 = vadd.f32 %v701, %v702
  %v704 = vsel %vm664, %v488, 0.0
  %v705 = vadd.f32 %v703, %v704
  %v706 = vsel %vm664, %v491, 0.0
  %v707 = vadd.f32 %v705, %v706
  %v708 = vsel %vm664, %v496, 0.0
  %v709 = vadd.f32 %v707, %v708
  %v710 = vsel %vm664, %v499, 0.0
  %v711 = vadd.f32 %v709, %v710
  %v712 = vsel %vm664, %v504, 0.0
  %v713 = vadd.f32 %v711, %v712
  %v714 = vsel %vm664, %v507, 0.0
  %v715 = vadd.f32 %v713, %v714
  %v716 = vsel %vm664, %v512, 0.0
  %v717 = vadd.f32 %v715, %v716
  %v718 = vsel %vm664, %v515, 0.0
  %v719 = vadd.f32 %v717, %v718
  %v720 = vsel %vm664, %v520, 0.0
  %v721 = vadd.f32 %v719, %v720
  %v722 = vsel %vm664, %v523, 0.0
  %v723 = vadd.f32 %v721, %v722
  %v724 = vsel %vm664, %v528, 0.0
  %v725 = vadd.f32 %v723, %v724
  %v726 = vsel %vm664, %v531, 0.0
  %v727 = vadd.f32 %v725, %v726
  %v728 = vsel %vm664, %v536, 0.0
  %v729 = vadd.f32 %v727, %v728
  %v730 = vsel %vm664, %v539, 0.0
  %v731 = vadd.f32 %v729, %v730
  %v732 = vsel %vm664, %v544, 0.0
  %v733 = vadd.f32 %v731, %v732
  %v734 = vsel %vm664, %v547, 0.0
  %v735 = vadd.f32 %v733, %v734
  %v736 = vsel %vm664, %v552, 0.0
  %v737 = vadd.f32 %v735, %v736
  %v738 = vsel %vm664, %v555, 0.0
  %v739 = vadd.f32 %v737, %v738
  %v740 = vsel %vm664, %v560, 0.0
  %v741 = vadd.f32 %v739, %v740
  %v742 = vsel %vm664, %v563, 0.0
  %v743 = vadd.f32 %v741, %v742
  %v744 = vsel %vm664, %v568, 0.0
  %v745 = vadd.f32 %v743, %v744
  %v746 = vsel %vm664, %v571, 0.0
  %v747 = vadd.f32 %v745, %v746
  %v748 = vsel %vm664, %v576, 0.0
  %v749 = vadd.f32 %v747, %v748
  %v750 = vsel %vm664, %v579, 0.0
  %v751 = vadd.f32 %v749, %v750
  %v752 = vsel %vm664, %v584, 0.0
  %v753 = vadd.f32 %v751, %v752
  %v754 = vsel %vm664, %v587, 0.0
  %v755 = vadd.f32 %v753, %v754
  %v756 = vsel %vm664, %v592, 0.0
  %v757 = vadd.f32 %v755, %v756
  %v758 = vsel %vm664, %v595, 0.0
  %v759 = vadd.f32 %v757, %v758
  %v760 = vsel %vm664, %v600, 0.0
  %v761 = vadd.f32 %v759, %v760
  %v762 = vsel %vm664, %v603, 0.0
  %v763 = vadd.f32 %v761, %v762
  %v764 = vsel %vm664, %v608, 0.0
  %v765 = vadd.f32 %v763, %v764
  %v766 = vsel %vm664, %v611, 0.0
  %v767 = vadd.f32 %v765, %v766
  %v768 = vsel %vm664, %v616, 0.0
  %v769 = vadd.f32 %v767, %v768
  %v770 = vsel %vm664, %v619, 0.0
  %v771 = vadd.f32 %v769, %v770
  %v772 = vsel %vm664, %v624, 0.0
  %v773 = vadd.f32 %v771, %v772
  %v774 = vsel %vm664, %v627, 0.0
  %v775 = vadd.f32 %v773, %v774
  %v776 = vsel %vm664, %v632, 0.0
  %v777 = vadd.f32 %v775, %v776
  %v778 = vsel %vm664, %v635, 0.0
  %v779 = vadd.f32 %v777, %v778
  %v780 = vsel %vm664, %v640, 0.0
  %v781 = vadd.f32 %v779, %v780
  %v782 = vsel %vm664, %v643, 0.0
  %v783 = vadd.f32 %v781, %v782
  %v784 = vsel %vm664, %v648, 0.0
  %v785 = vadd.f32 %v783, %v784
  %v786 = vsel %vm664, %v651, 0.0
  %v787 = vadd.f32 %v785, %v786
  %v788 = vsel %vm664, %v656, 0.0
  %v789 = vadd.f32 %v787, %v788
  %v790 = vsel %vm664, %v659, 0.0
  %v791 = vadd.f32 %v789, %v790
  %v792 = vrot.slane %v791, 4
  %v793 = vadd.f32 %v791, %v792
  %v794 = vrot.slane %v793, 2
  %v795 = vadd.f32 %v793, %v794
  %v796 = vrot.slane %v795, 1
  %v797 = vadd.f32 %v795, %v796
  %v798 = vmul.f32 %v408, %v408
  %v799 = vmul.f32 %v411, %v411
  %v800 = vmul.f32 %v416, %v416
  %v801 = vmul.f32 %v419, %v419
  %v802 = vmul.f32 %v424, %v424
  %v803 = vmul.f32 %v427, %v427
  %v804 = vmul.f32 %v432, %v432
  %v805 = vmul.f32 %v435, %v435
  %v806 = vmul.f32 %v440, %v440
  %v807 = vmul.f32 %v443, %v443
  %v808 = vmul.f32 %v448, %v448
  %v809 = vmul.f32 %v451, %v451
  %v810 = vmul.f32 %v456, %v456
  %v811 = vmul.f32 %v459, %v459
  %v812 = vmul.f32 %v464, %v464
  %v813 = vmul.f32 %v467, %v467
  %v814 = vmul.f32 %v472, %v472
  %v815 = vmul.f32 %v475, %v475
  %v816 = vmul.f32 %v480, %v480
  %v817 = vmul.f32 %v483, %v483
  %v818 = vmul.f32 %v488, %v488
  %v819 = vmul.f32 %v491, %v491
  %v820 = vmul.f32 %v496, %v496
  %v821 = vmul.f32 %v499, %v499
  %v822 = vmul.f32 %v504, %v504
  %v823 = vmul.f32 %v507, %v507
  %v824 = vmul.f32 %v512, %v512
  %v825 = vmul.f32 %v515, %v515
  %v826 = vmul.f32 %v520, %v520
  %v827 = vmul.f32 %v523, %v523
  %v828 = vmul.f32 %v528, %v528
  %v829 = vmul.f32 %v531, %v531
  %v830 = vmul.f32 %v536, %v536
  %v831 = vmul.f32 %v539, %v539
  %v832 = vmul.f32 %v544, %v544
  %v833 = vmul.f32 %v547, %v547
  %v834 = vmul.f32 %v552, %v552
  %v835 = vmul.f32 %v555, %v555
  %v836 = vmul.f32 %v560, %v560
  %v837 = vmul.f32 %v563, %v563
  %v838 = vmul.f32 %v568, %v568
  %v839 = vmul.f32 %v571, %v571
  %v840 = vmul.f32 %v576, %v576
  %v841 = vmul.f32 %v579, %v579
  %v842 = vmul.f32 %v584, %v584
  %v843 = vmul.f32 %v587, %v587
  %v844 = vmul.f32 %v592, %v592
  %v845 = vmul.f32 %v595, %v595
  %v846 = vmul.f32 %v600, %v600
  %v847 = vmul.f32 %v603, %v603
  %v848 = vmul.f32 %v608, %v608
  %v849 = vmul.f32 %v611, %v611
  %v850 = vmul.f32 %v616, %v616
  %v851 = vmul.f32 %v619, %v619
  %v852 = vmul.f32 %v624, %v624
  %v853 = vmul.f32 %v627, %v627
  %v854 = vmul.f32 %v632, %v632
  %v855 = vmul.f32 %v635, %v635
  %v856 = vmul.f32 %v640, %v640
  %v857 = vmul.f32 %v643, %v643
  %v858 = vmul.f32 %v648, %v648
  %v859 = vmul.f32 %v651, %v651
  %v860 = vmul.f32 %v656, %v656
  %v861 = vmul.f32 %v659, %v659
  %v862 = vsel %vm664, %v798, 0.0
  %v863 = vsel %vm664, %v799, 0.0
  %v864 = vadd.f32 %v862, %v863
  %v865 = vsel %vm664, %v800, 0.0
  %v866 = vadd.f32 %v864, %v865
  %v867 = vsel %vm664, %v801, 0.0
  %v868 = vadd.f32 %v866, %v867
  %v869 = vsel %vm664, %v802, 0.0
  %v870 = vadd.f32 %v868, %v869
  %v871 = vsel %vm664, %v803, 0.0
  %v872 = vadd.f32 %v870, %v871
  %v873 = vsel %vm664, %v804, 0.0
  %v874 = vadd.f32 %v872, %v873
  %v875 = vsel %vm664, %v805, 0.0
  %v876 = vadd.f32 %v874, %v875
  %v877 = vsel %vm664, %v806, 0.0
  %v878 = vadd.f32 %v876, %v877
  %v879 = vsel %vm664, %v807, 0.0
  %v880 = vadd.f32 %v878, %v879
  %v881 = vsel %vm664, %v808, 0.0
  %v882 = vadd.f32 %v880, %v881
  %v883 = vsel %vm664, %v809, 0.0
  %v884 = vadd.f32 %v882, %v883
  %v885 = vsel %vm664, %v810, 0.0
  %v886 = vadd.f32 %v884, %v885
  %v887 = vsel %vm664, %v811, 0.0
  %v888 = vadd.f32 %v886, %v887
  %v889 = vsel %vm664, %v812, 0.0
  %v890 = vadd.f32 %v888, %v889
  %v891 = vsel %vm664, %v813, 0.0
  %v892 = vadd.f32 %v890, %v891
  %v893 = vsel %vm664, %v814, 0.0
  %v894 = vadd.f32 %v892, %v893
  %v895 = vsel %vm664, %v815, 0.0
  %v896 = vadd.f32 %v894, %v895
  %v897 = vsel %vm664, %v816, 0.0
  %v898 = vadd.f32 %v896, %v897
  %v899 = vsel %vm664, %v817, 0.0
  %v900 = vadd.f32 %v898, %v899
  %v901 = vsel %vm664, %v818, 0.0
  %v902 = vadd.f32 %v900, %v901
  %v903 = vsel %vm664, %v819, 0.0
  %v904 = vadd.f32 %v902, %v903
  %v905 = vsel %vm664, %v820, 0.0
  %v906 = vadd.f32 %v904, %v905
  %v907 = vsel %vm664, %v821, 0.0
  %v908 = vadd.f32 %v906, %v907
  %v909 = vsel %vm664, %v822, 0.0
  %v910 = vadd.f32 %v908, %v909
  %v911 = vsel %vm664, %v823, 0.0
  %v912 = vadd.f32 %v910, %v911
  %v913 = vsel %vm664, %v824, 0.0
  %v914 = vadd.f32 %v912, %v913
  %v915 = vsel %vm664, %v825, 0.0
  %v916 = vadd.f32 %v914, %v915
  %v917 = vsel %vm664, %v826, 0.0
  %v918 = vadd.f32 %v916, %v917
  %v919 = vsel %vm664, %v827, 0.0
  %v920 = vadd.f32 %v918, %v919
  %v921 = vsel %vm664, %v828, 0.0
  %v922 = vadd.f32 %v920, %v921
  %v923 = vsel %vm664, %v829, 0.0
  %v924 = vadd.f32 %v922, %v923
  %v925 = vsel %vm664, %v830, 0.0
  %v926 = vadd.f32 %v924, %v925
  %v927 = vsel %vm664, %v831, 0.0
  %v928 = vadd.f32 %v926, %v927
  %v929 = vsel %vm664, %v832, 0.0
  %v930 = vadd.f32 %v928, %v929
  %v931 = vsel %vm664, %v833, 0.0
  %v932 = vadd.f32 %v930, %v931
  %v933 = vsel %vm664, %v834, 0.0
  %v934 = vadd.f32 %v932, %v933
  %v935 = vsel %vm664, %v835, 0.0
  %v936 = vadd.f32 %v934, %v935
  %v937 = vsel %vm664, %v836, 0.0
  %v938 = vadd.f32 %v936, %v937
  %v939 = vsel %vm664, %v837, 0.0
  %v940 = vadd.f32 %v938, %v939
  %v941 = vsel %vm664, %v838, 0.0
  %v942 = vadd.f32 %v940, %v941
  %v943 = vsel %vm664, %v839, 0.0
  %v944 = vadd.f32 %v942, %v943
  %v945 = vsel %vm664, %v840, 0.0
  %v946 = vadd.f32 %v944, %v945
  %v947 = vsel %vm664, %v841, 0.0
  %v948 = vadd.f32 %v946, %v947
  %v949 = vsel %vm664, %v842, 0.0
  %v950 = vadd.f32 %v948, %v949
  %v951 = vsel %vm664, %v843, 0.0
  %v952 = vadd.f32 %v950, %v951
  %v953 = vsel %vm664, %v844, 0.0
  %v954 = vadd.f32 %v952, %v953
  %v955 = vsel %vm664, %v845, 0.0
  %v956 = vadd.f32 %v954, %v955
  %v957 = vsel %vm664, %v846, 0.0
  %v958 = vadd.f32 %v956, %v957
  %v959 = vsel %vm664, %v847, 0.0
  %v960 = vadd.f32 %v958, %v959
  %v961 = vsel %vm664, %v848, 0.0
  %v962 = vadd.f32 %v960, %v961
  %v963 = vsel %vm664, %v849, 0.0
  %v964 = vadd.f32 %v962, %v963
  %v965 = vsel %vm664, %v850, 0.0
  %v966 = vadd.f32 %v964, %v965
  %v967 = vsel %vm664, %v851, 0.0
  %v968 = vadd.f32 %v966, %v967
  %v969 = vsel %vm664, %v852, 0.0
  %v970 = vadd.f32 %v968, %v969
  %v971 = vsel %vm664, %v853, 0.0
  %v972 = vadd.f32 %v970, %v971
  %v973 = vsel %vm664, %v854, 0.0
  %v974 = vadd.f32 %v972, %v973
  %v975 = vsel %vm664, %v855, 0.0
  %v976 = vadd.f32 %v974, %v975
  %v977 = vsel %vm664, %v856, 0.0
  %v978 = vadd.f32 %v976, %v977
  %v979 = vsel %vm664, %v857, 0.0
  %v980 = vadd.f32 %v978, %v979
  %v981 = vsel %vm664, %v858, 0.0
  %v982 = vadd.f32 %v980, %v981
  %v983 = vsel %vm664, %v859, 0.0
  %v984 = vadd.f32 %v982, %v983
  %v985 = vsel %vm664, %v860, 0.0
  %v986 = vadd.f32 %v984, %v985
  %v987 = vsel %vm664, %v861, 0.0
  %v988 = vadd.f32 %v986, %v987
  %v989 = vrot.slane %v988, 4
  %v990 = vadd.f32 %v988, %v989
  %v991 = vrot.slane %v990, 2
  %v992 = vadd.f32 %v990, %v991
  %v993 = vrot.slane %v992, 1
  %v994 = vadd.f32 %v992, %v993
  %996 = vrot.lane.b32.xlu0 %v797, 124
  %v997 = vpop.permute.xlu0 %996
  %v999 = vadd.f32 %v797, %v997
  %1001 = vrot.lane.b32.xlu0 %v994, 124
  %v1002 = vpop.permute.xlu0 %1001
  %v1004 = vadd.f32 %v994, %v1002
  %1005 = vrot.lane.b32.xlu0 %v797, 120
  %v1006 = vpop.permute.xlu0 %1005
  %v1008 = vadd.f32 %v999, %v1006
  %1009 = vrot.lane.b32.xlu0 %v994, 120
  %v1010 = vpop.permute.xlu0 %1009
  %v1012 = vadd.f32 %v1004, %v1010
  %1013 = vrot.lane.b32.xlu0 %v797, 116
  %v1014 = vpop.permute.xlu0 %1013
  %v1016 = vadd.f32 %v1008, %v1014
  %1017 = vrot.lane.b32.xlu0 %v994, 116
  %v1018 = vpop.permute.xlu0 %1017
  %v1020 = vadd.f32 %v1012, %v1018
  %v1021 = vrcp.pop 2048.0
  %v1022 = vmul.f32 %v1016, %v1021
  %v1023 = vmul.f32 %v1020, %v1021
  %v1024 = vmul.f32 %v1022, %v1022
  %v1025 = vsub.f32 %v1023, %v1024
  %v1026 = vadd.f32 %v1025, 1e-05
  %v1027 = vrsqrt.pop %v1026
  %1029 = vrot.lane.b32.xlu0 %v1022, 4
  %v1030 = vpop.permute.xlu0 %1029
  %1032 = vrot.lane.b32.xlu0 %v1022, 8
  %v1033 = vpop.permute.xlu0 %1032
  %1035 = vrot.lane.b32.xlu0 %v1022, 12
  %v1036 = vpop.permute.xlu0 %1035
  %vm1038 = vcmask 31744
  %v1039 = vsel %vm1038, %v1022, %v1030
  %vm1040 = vcmask 64512
  %v1041 = vsel %vm1040, %v1039, %v1033
  %vm1042 = vcmask 97280
  %v1043 = vsel %vm1042, %v1041, %v1036
  %1045 = vrot.lane.b32.xlu0 %v1027, 4
  %v1046 = vpop.permute.xlu0 %1045
  %1048 = vrot.lane.b32.xlu0 %v1027, 8
  %v1049 = vpop.permute.xlu0 %1048
  %1051 = vrot.lane.b32.xlu0 %v1027, 12
  %v1052 = vpop.permute.xlu0 %1051
  %v1054 = vsel %vm1038, %v1027, %v1046
  %v1055 = vsel %vm1040, %v1054, %v1049
  %v1056 = vsel %vm1042, %v1055, %v1052
  %v1057 = vlaneseq
  %v1058 = vshrl.u32 %v1057, 7
  %v1059 = vsub.s32 0, %v1058
  %v1060 = vrot.slane %v1043, %v1059
  %v1061 = vsub.f32 %v408, %v1060
  %v1062 = vsub.f32 %v411, %v1060
  %v1063 = vsub.f32 %v416, %v1060
  %v1064 = vsub.f32 %v419, %v1060
  %v1065 = vsub.f32 %v424, %v1060
  %v1066 = vsub.f32 %v427, %v1060
  %v1067 = vsub.f32 %v432, %v1060
  %v1068 = vsub.f32 %v435, %v1060
  %v1069 = vsub.f32 %v440, %v1060
  %v1070 = vsub.f32 %v443, %v1060
  %v1071 = vsub.f32 %v448, %v1060
  %v1072 = vsub.f32 %v451, %v1060
  %v1073 = vsub.f32 %v456, %v1060
  %v1074 = vsub.f32 %v459, %v1060
  %v1075 = vsub.f32 %v464, %v1060
  %v1076 = vsub.f32 %v467, %v1060
  %v1077 = vsub.f32 %v472, %v1060
  %v1078 = vsub.f32 %v475, %v1060
  %v1079 = vsub.f32 %v480, %v1060
  %v1080 = vsub.f32 %v483, %v1060
  %v1081 = vsub.f32 %v488, %v1060
  %v1082 = vsub.f32 %v491, %v1060
  %v1083 = vsub.f32 %v496, %v1060
  %v1084 = vsub.f32 %v499, %v1060
  %v1085 = vsub.f32 %v504, %v1060
  %v1086 = vsub.f32 %v507, %v1060
  %v1087 = vsub.f32 %v512, %v1060
  %v1088 = vsub.f32 %v515, %v1060
  %v1089 = vsub.f32 %v520, %v1060
  %v1090 = vsub.f32 %v523, %v1060
  %v1091 = vsub.f32 %v528, %v1060
  %v1092 = vsub.f32 %v531, %v1060
  %v1093 = vsub.f32 %v536, %v1060
  %v1094 = vsub.f32 %v539, %v1060
  %v1095 = vsub.f32 %v544, %v1060
  %v1096 = vsub.f32 %v547, %v1060
  %v1097 = vsub.f32 %v552, %v1060
  %v1098 = vsub.f32 %v555, %v1060
  %v1099 = vsub.f32 %v560, %v1060
  %v1100 = vsub.f32 %v563, %v1060
  %v1101 = vsub.f32 %v568, %v1060
  %v1102 = vsub.f32 %v571, %v1060
  %v1103 = vsub.f32 %v576, %v1060
  %v1104 = vsub.f32 %v579, %v1060
  %v1105 = vsub.f32 %v584, %v1060
  %v1106 = vsub.f32 %v587, %v1060
  %v1107 = vsub.f32 %v592, %v1060
  %v1108 = vsub.f32 %v595, %v1060
  %v1109 = vsub.f32 %v600, %v1060
  %v1110 = vsub.f32 %v603, %v1060
  %v1111 = vsub.f32 %v608, %v1060
  %v1112 = vsub.f32 %v611, %v1060
  %v1113 = vsub.f32 %v616, %v1060
  %v1114 = vsub.f32 %v619, %v1060
  %v1115 = vsub.f32 %v624, %v1060
  %v1116 = vsub.f32 %v627, %v1060
  %v1117 = vsub.f32 %v632, %v1060
  %v1118 = vsub.f32 %v635, %v1060
  %v1119 = vsub.f32 %v640, %v1060
  %v1120 = vsub.f32 %v643, %v1060
  %v1121 = vsub.f32 %v648, %v1060
  %v1122 = vsub.f32 %v651, %v1060
  %v1123 = vsub.f32 %v656, %v1060
  %v1124 = vsub.f32 %v659, %v1060
  %v1125 = vlaneseq
  %v1126 = vshrl.u32 %v1125, 7
  %v1127 = vsub.s32 0, %v1126
  %v1128 = vrot.slane %v1056, %v1127
  %v1129 = vmul.f32 %v1061, %v1128
  %v1130 = vmul.f32 %v1062, %v1128
  %v1131 = vmul.f32 %v1063, %v1128
  %v1132 = vmul.f32 %v1064, %v1128
  %v1133 = vmul.f32 %v1065, %v1128
  %v1134 = vmul.f32 %v1066, %v1128
  %v1135 = vmul.f32 %v1067, %v1128
  %v1136 = vmul.f32 %v1068, %v1128
  %v1137 = vmul.f32 %v1069, %v1128
  %v1138 = vmul.f32 %v1070, %v1128
  %v1139 = vmul.f32 %v1071, %v1128
  %v1140 = vmul.f32 %v1072, %v1128
  %v1141 = vmul.f32 %v1073, %v1128
  %v1142 = vmul.f32 %v1074, %v1128
  %v1143 = vmul.f32 %v1075, %v1128
  %v1144 = vmul.f32 %v1076, %v1128
  %v1145 = vmul.f32 %v1077, %v1128
  %v1146 = vmul.f32 %v1078, %v1128
  %v1147 = vmul.f32 %v1079, %v1128
  %v1148 = vmul.f32 %v1080, %v1128
  %v1149 = vmul.f32 %v1081, %v1128
  %v1150 = vmul.f32 %v1082, %v1128
  %v1151 = vmul.f32 %v1083, %v1128
  %v1152 = vmul.f32 %v1084, %v1128
  %v1153 = vmul.f32 %v1085, %v1128
  %v1154 = vmul.f32 %v1086, %v1128
  %v1155 = vmul.f32 %v1087, %v1128
  %v1156 = vmul.f32 %v1088, %v1128
  %v1157 = vmul.f32 %v1089, %v1128
  %v1158 = vmul.f32 %v1090, %v1128
  %v1159 = vmul.f32 %v1091, %v1128
  %v1160 = vmul.f32 %v1092, %v1128
  %v1161 = vmul.f32 %v1093, %v1128
  %v1162 = vmul.f32 %v1094, %v1128
  %v1163 = vmul.f32 %v1095, %v1128
  %v1164 = vmul.f32 %v1096, %v1128
  %v1165 = vmul.f32 %v1097, %v1128
  %v1166 = vmul.f32 %v1098, %v1128
  %v1167 = vmul.f32 %v1099, %v1128
  %v1168 = vmul.f32 %v1100, %v1128
  %v1169 = vmul.f32 %v1101, %v1128
  %v1170 = vmul.f32 %v1102, %v1128
  %v1171 = vmul.f32 %v1103, %v1128
  %v1172 = vmul.f32 %v1104, %v1128
  %v1173 = vmul.f32 %v1105, %v1128
  %v1174 = vmul.f32 %v1106, %v1128
  %v1175 = vmul.f32 %v1107, %v1128
  %v1176 = vmul.f32 %v1108, %v1128
  %v1177 = vmul.f32 %v1109, %v1128
  %v1178 = vmul.f32 %v1110, %v1128
  %v1179 = vmul.f32 %v1111, %v1128
  %v1180 = vmul.f32 %v1112, %v1128
  %v1181 = vmul.f32 %v1113, %v1128
  %v1182 = vmul.f32 %v1114, %v1128
  %v1183 = vmul.f32 %v1115, %v1128
  %v1184 = vmul.f32 %v1116, %v1128
  %v1185 = vmul.f32 %v1117, %v1128
  %v1186 = vmul.f32 %v1118, %v1128
  %v1187 = vmul.f32 %v1119, %v1128
  %v1188 = vmul.f32 %v1120, %v1128
  %v1189 = vmul.f32 %v1121, %v1128
  %v1190 = vmul.f32 %v1122, %v1128
  %v1191 = vmul.f32 %v1123, %v1128
  %v1192 = vmul.f32 %v1124, %v1128
  %v1194 = vlaneseq
  %v1195 = vshrl.u32 %v1194, 7
  %v1196 = vsub.s32 0, %v1195
  %v1197 = vrot.slane %v662, %v1196
  %v1199 = vmul.f32 %v1129, %v1197
  %v1200 = vmul.f32 %v1130, %v1197
  %v1201 = vmul.f32 %v1131, %v1197
  %v1202 = vmul.f32 %v1132, %v1197
  %v1203 = vmul.f32 %v1133, %v1197
  %v1204 = vmul.f32 %v1134, %v1197
  %v1205 = vmul.f32 %v1135, %v1197
  %v1206 = vmul.f32 %v1136, %v1197
  %v1207 = vmul.f32 %v1137, %v1197
  %v1208 = vmul.f32 %v1138, %v1197
  %v1209 = vmul.f32 %v1139, %v1197
  %v1210 = vmul.f32 %v1140, %v1197
  %v1211 = vmul.f32 %v1141, %v1197
  %v1212 = vmul.f32 %v1142, %v1197
  %v1213 = vmul.f32 %v1143, %v1197
  %v1214 = vmul.f32 %v1144, %v1197
  %v1215 = vmul.f32 %v1145, %v1197
  %v1216 = vmul.f32 %v1146, %v1197
  %v1217 = vmul.f32 %v1147, %v1197
  %v1218 = vmul.f32 %v1148, %v1197
  %v1219 = vmul.f32 %v1149, %v1197
  %v1220 = vmul.f32 %v1150, %v1197
  %v1221 = vmul.f32 %v1151, %v1197
  %v1222 = vmul.f32 %v1152, %v1197
  %v1223 = vmul.f32 %v1153, %v1197
  %v1224 = vmul.f32 %v1154, %v1197
  %v1225 = vmul.f32 %v1155, %v1197
  %v1226 = vmul.f32 %v1156, %v1197
  %v1227 = vmul.f32 %v1157, %v1197
  %v1228 = vmul.f32 %v1158, %v1197
  %v1229 = vmul.f32 %v1159, %v1197
  %v1230 = vmul.f32 %v1160, %v1197
  %v1231 = vmul.f32 %v1161, %v1197
  %v1232 = vmul.f32 %v1162, %v1197
  %v1233 = vmul.f32 %v1163, %v1197
  %v1234 = vmul.f32 %v1164, %v1197
  %v1235 = vmul.f32 %v1165, %v1197
  %v1236 = vmul.f32 %v1166, %v1197
  %v1237 = vmul.f32 %v1167, %v1197
  %v1238 = vmul.f32 %v1168, %v1197
  %v1239 = vmul.f32 %v1169, %v1197
  %v1240 = vmul.f32 %v1170, %v1197
  %v1241 = vmul.f32 %v1171, %v1197
  %v1242 = vmul.f32 %v1172, %v1197
  %v1243 = vmul.f32 %v1173, %v1197
  %v1244 = vmul.f32 %v1174, %v1197
  %v1245 = vmul.f32 %v1175, %v1197
  %v1246 = vmul.f32 %v1176, %v1197
  %v1247 = vmul.f32 %v1177, %v1197
  %v1248 = vmul.f32 %v1178, %v1197
  %v1249 = vmul.f32 %v1179, %v1197
  %v1250 = vmul.f32 %v1180, %v1197
  %v1251 = vmul.f32 %v1181, %v1197
  %v1252 = vmul.f32 %v1182, %v1197
  %v1253 = vmul.f32 %v1183, %v1197
  %v1254 = vmul.f32 %v1184, %v1197
  %v1255 = vmul.f32 %v1185, %v1197
  %v1256 = vmul.f32 %v1186, %v1197
  %v1257 = vmul.f32 %v1187, %v1197
  %v1258 = vmul.f32 %v1188, %v1197
  %v1259 = vmul.f32 %v1189, %v1197
  %v1260 = vmul.f32 %v1190, %v1197
  %v1261 = vmul.f32 %v1191, %v1197
  %v1262 = vmul.f32 %v1192, %v1197
  %v1264 = vlaneseq
  %v1265 = vshrl.u32 %v1264, 7
  %v1266 = vsub.s32 0, %v1265
  %v1267 = vrot.slane %v663, %v1266
  %v1269 = vadd.f32 %v1199, %v1267
  %v1270 = vadd.f32 %v1200, %v1267
  %v1271 = vadd.f32 %v1201, %v1267
  %v1272 = vadd.f32 %v1202, %v1267
  %v1273 = vadd.f32 %v1203, %v1267
  %v1274 = vadd.f32 %v1204, %v1267
  %v1275 = vadd.f32 %v1205, %v1267
  %v1276 = vadd.f32 %v1206, %v1267
  %v1277 = vadd.f32 %v1207, %v1267
  %v1278 = vadd.f32 %v1208, %v1267
  %v1279 = vadd.f32 %v1209, %v1267
  %v1280 = vadd.f32 %v1210, %v1267
  %v1281 = vadd.f32 %v1211, %v1267
  %v1282 = vadd.f32 %v1212, %v1267
  %v1283 = vadd.f32 %v1213, %v1267
  %v1284 = vadd.f32 %v1214, %v1267
  %v1285 = vadd.f32 %v1215, %v1267
  %v1286 = vadd.f32 %v1216, %v1267
  %v1287 = vadd.f32 %v1217, %v1267
  %v1288 = vadd.f32 %v1218, %v1267
  %v1289 = vadd.f32 %v1219, %v1267
  %v1290 = vadd.f32 %v1220, %v1267
  %v1291 = vadd.f32 %v1221, %v1267
  %v1292 = vadd.f32 %v1222, %v1267
  %v1293 = vadd.f32 %v1223, %v1267
  %v1294 = vadd.f32 %v1224, %v1267
  %v1295 = vadd.f32 %v1225, %v1267
  %v1296 = vadd.f32 %v1226, %v1267
  %v1297 = vadd.f32 %v1227, %v1267
  %v1298 = vadd.f32 %v1228, %v1267
  %v1299 = vadd.f32 %v1229, %v1267
  %v1300 = vadd.f32 %v1230, %v1267
  %v1301 = vadd.f32 %v1231, %v1267
  %v1302 = vadd.f32 %v1232, %v1267
  %v1303 = vadd.f32 %v1233, %v1267
  %v1304 = vadd.f32 %v1234, %v1267
  %v1305 = vadd.f32 %v1235, %v1267
  %v1306 = vadd.f32 %v1236, %v1267
  %v1307 = vadd.f32 %v1237, %v1267
  %v1308 = vadd.f32 %v1238, %v1267
  %v1309 = vadd.f32 %v1239, %v1267
  %v1310 = vadd.f32 %v1240, %v1267
  %v1311 = vadd.f32 %v1241, %v1267
  %v1312 = vadd.f32 %v1242, %v1267
  %v1313 = vadd.f32 %v1243, %v1267
  %v1314 = vadd.f32 %v1244, %v1267
  %v1315 = vadd.f32 %v1245, %v1267
  %v1316 = vadd.f32 %v1246, %v1267
  %v1317 = vadd.f32 %v1247, %v1267
  %v1318 = vadd.f32 %v1248, %v1267
  %v1319 = vadd.f32 %v1249, %v1267
  %v1320 = vadd.f32 %v1250, %v1267
  %v1321 = vadd.f32 %v1251, %v1267
  %v1322 = vadd.f32 %v1252, %v1267
  %v1323 = vadd.f32 %v1253, %v1267
  %v1324 = vadd.f32 %v1254, %v1267
  %v1325 = vadd.f32 %v1255, %v1267
  %v1326 = vadd.f32 %v1256, %v1267
  %v1327 = vadd.f32 %v1257, %v1267
  %v1328 = vadd.f32 %v1258, %v1267
  %v1329 = vadd.f32 %v1259, %v1267
  %v1330 = vadd.f32 %v1260, %v1267
  %v1331 = vadd.f32 %v1261, %v1267
  %v1332 = vadd.f32 %v1262, %v1267
  %vm1333 = vcmp.ge.f32.partialorder %v1269, 0.0
  %vm1334 = vcmp.ge.f32.partialorder %v1270, 0.0
  %vm1335 = vcmp.ge.f32.partialorder %v1271, 0.0
  %vm1336 = vcmp.ge.f32.partialorder %v1272, 0.0
  %vm1337 = vcmp.ge.f32.partialorder %v1273, 0.0
  %vm1338 = vcmp.ge.f32.partialorder %v1274, 0.0
  %vm1339 = vcmp.ge.f32.partialorder %v1275, 0.0
  %vm1340 = vcmp.ge.f32.partialorder %v1276, 0.0
  %vm1341 = vcmp.ge.f32.partialorder %v1277, 0.0
  %vm1342 = vcmp.ge.f32.partialorder %v1278, 0.0
  %vm1343 = vcmp.ge.f32.partialorder %v1279, 0.0
  %vm1344 = vcmp.ge.f32.partialorder %v1280, 0.0
  %vm1345 = vcmp.ge.f32.partialorder %v1281, 0.0
  %vm1346 = vcmp.ge.f32.partialorder %v1282, 0.0
  %vm1347 = vcmp.ge.f32.partialorder %v1283, 0.0
  %vm1348 = vcmp.ge.f32.partialorder %v1284, 0.0
  %vm1349 = vcmp.ge.f32.partialorder %v1285, 0.0
  %vm1350 = vcmp.ge.f32.partialorder %v1286, 0.0
  %vm1351 = vcmp.ge.f32.partialorder %v1287, 0.0
  %vm1352 = vcmp.ge.f32.partialorder %v1288, 0.0
  %vm1353 = vcmp.ge.f32.partialorder %v1289, 0.0
  %vm1354 = vcmp.ge.f32.partialorder %v1290, 0.0
  %vm1355 = vcmp.ge.f32.partialorder %v1291, 0.0
  %vm1356 = vcmp.ge.f32.partialorder %v1292, 0.0
  %vm1357 = vcmp.ge.f32.partialorder %v1293, 0.0
  %vm1358 = vcmp.ge.f32.partialorder %v1294, 0.0
  %vm1359 = vcmp.ge.f32.partialorder %v1295, 0.0
  %vm1360 = vcmp.ge.f32.partialorder %v1296, 0.0
  %vm1361 = vcmp.ge.f32.partialorder %v1297, 0.0
  %vm1362 = vcmp.ge.f32.partialorder %v1298, 0.0
  %vm1363 = vcmp.ge.f32.partialorder %v1299, 0.0
  %vm1364 = vcmp.ge.f32.partialorder %v1300, 0.0
  %vm1365 = vcmp.ge.f32.partialorder %v1301, 0.0
  %vm1366 = vcmp.ge.f32.partialorder %v1302, 0.0
  %vm1367 = vcmp.ge.f32.partialorder %v1303, 0.0
  %vm1368 = vcmp.ge.f32.partialorder %v1304, 0.0
  %vm1369 = vcmp.ge.f32.partialorder %v1305, 0.0
  %vm1370 = vcmp.ge.f32.partialorder %v1306, 0.0
  %vm1371 = vcmp.ge.f32.partialorder %v1307, 0.0
  %vm1372 = vcmp.ge.f32.partialorder %v1308, 0.0
  %vm1373 = vcmp.ge.f32.partialorder %v1309, 0.0
  %vm1374 = vcmp.ge.f32.partialorder %v1310, 0.0
  %vm1375 = vcmp.ge.f32.partialorder %v1311, 0.0
  %vm1376 = vcmp.ge.f32.partialorder %v1312, 0.0
  %vm1377 = vcmp.ge.f32.partialorder %v1313, 0.0
  %vm1378 = vcmp.ge.f32.partialorder %v1314, 0.0
  %vm1379 = vcmp.ge.f32.partialorder %v1315, 0.0
  %vm1380 = vcmp.ge.f32.partialorder %v1316, 0.0
  %vm1381 = vcmp.ge.f32.partialorder %v1317, 0.0
  %vm1382 = vcmp.ge.f32.partialorder %v1318, 0.0
  %vm1383 = vcmp.ge.f32.partialorder %v1319, 0.0
  %vm1384 = vcmp.ge.f32.partialorder %v1320, 0.0
  %vm1385 = vcmp.ge.f32.partialorder %v1321, 0.0
  %vm1386 = vcmp.ge.f32.partialorder %v1322, 0.0
  %vm1387 = vcmp.ge.f32.partialorder %v1323, 0.0
  %vm1388 = vcmp.ge.f32.partialorder %v1324, 0.0
  %vm1389 = vcmp.ge.f32.partialorder %v1325, 0.0
  %vm1390 = vcmp.ge.f32.partialorder %v1326, 0.0
  %vm1391 = vcmp.ge.f32.partialorder %v1327, 0.0
  %vm1392 = vcmp.ge.f32.partialorder %v1328, 0.0
  %vm1393 = vcmp.ge.f32.partialorder %v1329, 0.0
  %vm1394 = vcmp.ge.f32.partialorder %v1330, 0.0
  %vm1395 = vcmp.ge.f32.partialorder %v1331, 0.0
  %vm1396 = vcmp.ge.f32.partialorder %v1332, 0.0
  %v1397 = vmul.f32 %v1269, 0.01
  %v1398 = vmul.f32 %v1270, 0.01
  %v1399 = vmul.f32 %v1271, 0.01
  %v1400 = vmul.f32 %v1272, 0.01
  %v1401 = vmul.f32 %v1273, 0.01
  %v1402 = vmul.f32 %v1274, 0.01
  %v1403 = vmul.f32 %v1275, 0.01
  %v1404 = vmul.f32 %v1276, 0.01
  %v1405 = vmul.f32 %v1277, 0.01
  %v1406 = vmul.f32 %v1278, 0.01
  %v1407 = vmul.f32 %v1279, 0.01
  %v1408 = vmul.f32 %v1280, 0.01
  %v1409 = vmul.f32 %v1281, 0.01
  %v1410 = vmul.f32 %v1282, 0.01
  %v1411 = vmul.f32 %v1283, 0.01
  %v1412 = vmul.f32 %v1284, 0.01
  %v1413 = vmul.f32 %v1285, 0.01
  %v1414 = vmul.f32 %v1286, 0.01
  %v1415 = vmul.f32 %v1287, 0.01
  %v1416 = vmul.f32 %v1288, 0.01
  %v1417 = vmul.f32 %v1289, 0.01
  %v1418 = vmul.f32 %v1290, 0.01
  %v1419 = vmul.f32 %v1291, 0.01
  %v1420 = vmul.f32 %v1292, 0.01
  %v1421 = vmul.f32 %v1293, 0.01
  %v1422 = vmul.f32 %v1294, 0.01
  %v1423 = vmul.f32 %v1295, 0.01
  %v1424 = vmul.f32 %v1296, 0.01
  %v1425 = vmul.f32 %v1297, 0.01
  %v1426 = vmul.f32 %v1298, 0.01
  %v1427 = vmul.f32 %v1299, 0.01
  %v1428 = vmul.f32 %v1300, 0.01
  %v1429 = vmul.f32 %v1301, 0.01
  %v1430 = vmul.f32 %v1302, 0.01
  %v1431 = vmul.f32 %v1303, 0.01
  %v1432 = vmul.f32 %v1304, 0.01
  %v1433 = vmul.f32 %v1305, 0.01
  %v1434 = vmul.f32 %v1306, 0.01
  %v1435 = vmul.f32 %v1307, 0.01
  %v1436 = vmul.f32 %v1308, 0.01
  %v1437 = vmul.f32 %v1309, 0.01
  %v1438 = vmul.f32 %v1310, 0.01
  %v1439 = vmul.f32 %v1311, 0.01
  %v1440 = vmul.f32 %v1312, 0.01
  %v1441 = vmul.f32 %v1313, 0.01
  %v1442 = vmul.f32 %v1314, 0.01
  %v1443 = vmul.f32 %v1315, 0.01
  %v1444 = vmul.f32 %v1316, 0.01
  %v1445 = vmul.f32 %v1317, 0.01
  %v1446 = vmul.f32 %v1318, 0.01
  %v1447 = vmul.f32 %v1319, 0.01
  %v1448 = vmul.f32 %v1320, 0.01
  %v1449 = vmul.f32 %v1321, 0.01
  %v1450 = vmul.f32 %v1322, 0.01
  %v1451 = vmul.f32 %v1323, 0.01
  %v1452 = vmul.f32 %v1324, 0.01
  %v1453 = vmul.f32 %v1325, 0.01
  %v1454 = vmul.f32 %v1326, 0.01
  %v1455 = vmul.f32 %v1327, 0.01
  %v1456 = vmul.f32 %v1328, 0.01
  %v1457 = vmul.f32 %v1329, 0.01
  %v1458 = vmul.f32 %v1330, 0.01
  %v1459 = vmul.f32 %v1331, 0.01
  %v1460 = vmul.f32 %v1332, 0.01
  %v1461 = vsel %vm1333, %v1269, %v1397
  %v1462 = vsel %vm1334, %v1270, %v1398
  %v1463 = vsel %vm1335, %v1271, %v1399
  %v1464 = vsel %vm1336, %v1272, %v1400
  %v1465 = vsel %vm1337, %v1273, %v1401
  %v1466 = vsel %vm1338, %v1274, %v1402
  %v1467 = vsel %vm1339, %v1275, %v1403
  %v1468 = vsel %vm1340, %v1276, %v1404
  %v1469 = vsel %vm1341, %v1277, %v1405
  %v1470 = vsel %vm1342, %v1278, %v1406
  %v1471 = vsel %vm1343, %v1279, %v1407
  %v1472 = vsel %vm1344, %v1280, %v1408
  %v1473 = vsel %vm1345, %v1281, %v1409
  %v1474 = vsel %vm1346, %v1282, %v1410
  %v1475 = vsel %vm1347, %v1283, %v1411
  %v1476 = vsel %vm1348, %v1284, %v1412
  %v1477 = vsel %vm1349, %v1285, %v1413
  %v1478 = vsel %vm1350, %v1286, %v1414
  %v1479 = vsel %vm1351, %v1287, %v1415
  %v1480 = vsel %vm1352, %v1288, %v1416
  %v1481 = vsel %vm1353, %v1289, %v1417
  %v1482 = vsel %vm1354, %v1290, %v1418
  %v1483 = vsel %vm1355, %v1291, %v1419
  %v1484 = vsel %vm1356, %v1292, %v1420
  %v1485 = vsel %vm1357, %v1293, %v1421
  %v1486 = vsel %vm1358, %v1294, %v1422
  %v1487 = vsel %vm1359, %v1295, %v1423
  %v1488 = vsel %vm1360, %v1296, %v1424
  %v1489 = vsel %vm1361, %v1297, %v1425
  %v1490 = vsel %vm1362, %v1298, %v1426
  %v1491 = vsel %vm1363, %v1299, %v1427
  %v1492 = vsel %vm1364, %v1300, %v1428
  %v1493 = vsel %vm1365, %v1301, %v1429
  %v1494 = vsel %vm1366, %v1302, %v1430
  %v1495 = vsel %vm1367, %v1303, %v1431
  %v1496 = vsel %vm1368, %v1304, %v1432
  %v1497 = vsel %vm1369, %v1305, %v1433
  %v1498 = vsel %vm1370, %v1306, %v1434
  %v1499 = vsel %vm1371, %v1307, %v1435
  %v1500 = vsel %vm1372, %v1308, %v1436
  %v1501 = vsel %vm1373, %v1309, %v1437
  %v1502 = vsel %vm1374, %v1310, %v1438
  %v1503 = vsel %vm1375, %v1311, %v1439
  %v1504 = vsel %vm1376, %v1312, %v1440
  %v1505 = vsel %vm1377, %v1313, %v1441
  %v1506 = vsel %vm1378, %v1314, %v1442
  %v1507 = vsel %vm1379, %v1315, %v1443
  %v1508 = vsel %vm1380, %v1316, %v1444
  %v1509 = vsel %vm1381, %v1317, %v1445
  %v1510 = vsel %vm1382, %v1318, %v1446
  %v1511 = vsel %vm1383, %v1319, %v1447
  %v1512 = vsel %vm1384, %v1320, %v1448
  %v1513 = vsel %vm1385, %v1321, %v1449
  %v1514 = vsel %vm1386, %v1322, %v1450
  %v1515 = vsel %vm1387, %v1323, %v1451
  %v1516 = vsel %vm1388, %v1324, %v1452
  %v1517 = vsel %vm1389, %v1325, %v1453
  %v1518 = vsel %vm1390, %v1326, %v1454
  %v1519 = vsel %vm1391, %v1327, %v1455
  %v1520 = vsel %vm1392, %v1328, %v1456
  %v1521 = vsel %vm1393, %v1329, %v1457
  %v1522 = vsel %vm1394, %v1330, %v1458
  %v1523 = vsel %vm1395, %v1331, %v1459
  %v1524 = vsel %vm1396, %v1332, %v1460
  %v1525 = vpack.c.bf16 %v1462, %v1461
  %v1526 = vpack.c.bf16 %v1464, %v1463
  %v1527 = vpack.c.bf16 %v1466, %v1465
  %v1528 = vpack.c.bf16 %v1468, %v1467
  %v1529 = vpack.c.bf16 %v1470, %v1469
  %v1530 = vpack.c.bf16 %v1472, %v1471
  %v1531 = vpack.c.bf16 %v1474, %v1473
  %v1532 = vpack.c.bf16 %v1476, %v1475
  %v1533 = vpack.c.bf16 %v1478, %v1477
  %v1534 = vpack.c.bf16 %v1480, %v1479
  %v1535 = vpack.c.bf16 %v1482, %v1481
  %v1536 = vpack.c.bf16 %v1484, %v1483
  %v1537 = vpack.c.bf16 %v1486, %v1485
  %v1538 = vpack.c.bf16 %v1488, %v1487
  %v1539 = vpack.c.bf16 %v1490, %v1489
  %v1540 = vpack.c.bf16 %v1492, %v1491
  %v1541 = vpack.c.bf16 %v1494, %v1493
  %v1542 = vpack.c.bf16 %v1496, %v1495
  %v1543 = vpack.c.bf16 %v1498, %v1497
  %v1544 = vpack.c.bf16 %v1500, %v1499
  %v1545 = vpack.c.bf16 %v1502, %v1501
  %v1546 = vpack.c.bf16 %v1504, %v1503
  %v1547 = vpack.c.bf16 %v1506, %v1505
  %v1548 = vpack.c.bf16 %v1508, %v1507
  %v1549 = vpack.c.bf16 %v1510, %v1509
  %v1550 = vpack.c.bf16 %v1512, %v1511
  %v1551 = vpack.c.bf16 %v1514, %v1513
  %v1552 = vpack.c.bf16 %v1516, %v1515
  %v1553 = vpack.c.bf16 %v1518, %v1517
  %v1554 = vpack.c.bf16 %v1520, %v1519
  %v1555 = vpack.c.bf16 %v1522, %v1521
  %v1556 = vpack.c.bf16 %v1524, %v1523
  %v1589 = vunpack.c.l.b16 %v1525
  %v1590 = vunpack.c.h.b16 %v1525
  %v1591 = vunpack.c.l.b16 %v1526
  %v1592 = vunpack.c.h.b16 %v1526
  %v1593 = vunpack.c.l.b16 %v1527
  %v1594 = vunpack.c.h.b16 %v1527
  %v1595 = vunpack.c.l.b16 %v1528
  %v1596 = vunpack.c.h.b16 %v1528
  %v1597 = vunpack.c.l.b16 %v1529
  %v1598 = vunpack.c.h.b16 %v1529
  %v1599 = vunpack.c.l.b16 %v1530
  %v1600 = vunpack.c.h.b16 %v1530
  %v1601 = vunpack.c.l.b16 %v1531
  %v1602 = vunpack.c.h.b16 %v1531
  %v1603 = vunpack.c.l.b16 %v1532
  %v1604 = vunpack.c.h.b16 %v1532
  %v1605 = vunpack.c.l.b16 %v1533
  %v1606 = vunpack.c.h.b16 %v1533
  %v1607 = vunpack.c.l.b16 %v1534
  %v1608 = vunpack.c.h.b16 %v1534
  %v1609 = vunpack.c.l.b16 %v1535
  %v1610 = vunpack.c.h.b16 %v1535
  %v1611 = vunpack.c.l.b16 %v1536
  %v1612 = vunpack.c.h.b16 %v1536
  %v1613 = vunpack.c.l.b16 %v1537
  %v1614 = vunpack.c.h.b16 %v1537
  %v1615 = vunpack.c.l.b16 %v1538
  %v1616 = vunpack.c.h.b16 %v1538
  %v1617 = vunpack.c.l.b16 %v1539
  %v1618 = vunpack.c.h.b16 %v1539
  %v1619 = vunpack.c.l.b16 %v1540
  %v1620 = vunpack.c.h.b16 %v1540
  %v1621 = vunpack.c.l.b16 %v1541
  %v1622 = vunpack.c.h.b16 %v1541
  %v1623 = vunpack.c.l.b16 %v1542
  %v1624 = vunpack.c.h.b16 %v1542
  %v1625 = vunpack.c.l.b16 %v1543
  %v1626 = vunpack.c.h.b16 %v1543
  %v1627 = vunpack.c.l.b16 %v1544
  %v1628 = vunpack.c.h.b16 %v1544
  %v1629 = vunpack.c.l.b16 %v1545
  %v1630 = vunpack.c.h.b16 %v1545
  %v1631 = vunpack.c.l.b16 %v1546
  %v1632 = vunpack.c.h.b16 %v1546
  %v1633 = vunpack.c.l.b16 %v1547
  %v1634 = vunpack.c.h.b16 %v1547
  %v1635 = vunpack.c.l.b16 %v1548
  %v1636 = vunpack.c.h.b16 %v1548
  %v1637 = vunpack.c.l.b16 %v1549
  %v1638 = vunpack.c.h.b16 %v1549
  %v1639 = vunpack.c.l.b16 %v1550
  %v1640 = vunpack.c.h.b16 %v1550
  %v1641 = vunpack.c.l.b16 %v1551
  %v1642 = vunpack.c.h.b16 %v1551
  %v1643 = vunpack.c.l.b16 %v1552
  %v1644 = vunpack.c.h.b16 %v1552
  %v1645 = vunpack.c.l.b16 %v1553
  %v1646 = vunpack.c.h.b16 %v1553
  %v1647 = vunpack.c.l.b16 %v1554
  %v1648 = vunpack.c.h.b16 %v1554
  %v1649 = vunpack.c.l.b16 %v1555
  %v1650 = vunpack.c.h.b16 %v1555
  %v1651 = vunpack.c.l.b16 %v1556
  %v1652 = vunpack.c.h.b16 %v1556
  %v1653 = vpack.c.b16 %v1589, %v1589
  %v1654 = vpack.c.b16 %v1590, %v1590
  %v1655 = vpack.c.b16 %v1591, %v1591
  %v1656 = vpack.c.b16 %v1592, %v1592
  %v1657 = vpack.c.b16 %v1593, %v1593
  %v1658 = vpack.c.b16 %v1594, %v1594
  %v1659 = vpack.c.b16 %v1595, %v1595
  %v1660 = vpack.c.b16 %v1596, %v1596
  %v1661 = vpack.c.b16 %v1597, %v1597
  %v1662 = vpack.c.b16 %v1598, %v1598
  %v1663 = vpack.c.b16 %v1599, %v1599
  %v1664 = vpack.c.b16 %v1600, %v1600
  %v1665 = vpack.c.b16 %v1601, %v1601
  %v1666 = vpack.c.b16 %v1602, %v1602
  %v1667 = vpack.c.b16 %v1603, %v1603
  %v1668 = vpack.c.b16 %v1604, %v1604
  %v1669 = vpack.c.b16 %v1605, %v1605
  %v1670 = vpack.c.b16 %v1606, %v1606
  %v1671 = vpack.c.b16 %v1607, %v1607
  %v1672 = vpack.c.b16 %v1608, %v1608
  %v1673 = vpack.c.b16 %v1609, %v1609
  %v1674 = vpack.c.b16 %v1610, %v1610
  %v1675 = vpack.c.b16 %v1611, %v1611
  %v1676 = vpack.c.b16 %v1612, %v1612
  %v1677 = vpack.c.b16 %v1613, %v1613
  %v1678 = vpack.c.b16 %v1614, %v1614
  %v1679 = vpack.c.b16 %v1615, %v1615
  %v1680 = vpack.c.b16 %v1616, %v1616
  %v1681 = vpack.c.b16 %v1617, %v1617
  %v1682 = vpack.c.b16 %v1618, %v1618
  %v1683 = vpack.c.b16 %v1619, %v1619
  %v1684 = vpack.c.b16 %v1620, %v1620
  %v1685 = vpack.c.b16 %v1621, %v1621
  %v1686 = vpack.c.b16 %v1622, %v1622
  %v1687 = vpack.c.b16 %v1623, %v1623
  %v1688 = vpack.c.b16 %v1624, %v1624
  %v1689 = vpack.c.b16 %v1625, %v1625
  %v1690 = vpack.c.b16 %v1626, %v1626
  %v1691 = vpack.c.b16 %v1627, %v1627
  %v1692 = vpack.c.b16 %v1628, %v1628
  %v1693 = vpack.c.b16 %v1629, %v1629
  %v1694 = vpack.c.b16 %v1630, %v1630
  %v1695 = vpack.c.b16 %v1631, %v1631
  %v1696 = vpack.c.b16 %v1632, %v1632
  %v1697 = vpack.c.b16 %v1633, %v1633
  %v1698 = vpack.c.b16 %v1634, %v1634
  %v1699 = vpack.c.b16 %v1635, %v1635
  %v1700 = vpack.c.b16 %v1636, %v1636
  %v1701 = vpack.c.b16 %v1637, %v1637
  %v1702 = vpack.c.b16 %v1638, %v1638
  %v1703 = vpack.c.b16 %v1639, %v1639
  %v1704 = vpack.c.b16 %v1640, %v1640
  %v1705 = vpack.c.b16 %v1641, %v1641
  %v1706 = vpack.c.b16 %v1642, %v1642
  %v1707 = vpack.c.b16 %v1643, %v1643
  %v1708 = vpack.c.b16 %v1644, %v1644
  %v1709 = vpack.c.b16 %v1645, %v1645
  %v1710 = vpack.c.b16 %v1646, %v1646
  %v1711 = vpack.c.b16 %v1647, %v1647
  %v1712 = vpack.c.b16 %v1648, %v1648
  %v1713 = vpack.c.b16 %v1649, %v1649
  %v1714 = vpack.c.b16 %v1650, %v1650
  %v1715 = vpack.c.b16 %v1651, %v1651
  %v1716 = vpack.c.b16 %v1652, %v1652
  %vm1781 = vcmask 125952
  %1782 = vst.msk [vmem:[%s5] sm:$0xf] %vm1781, %v1653
  %1783 = vst.msk [vmem:[%s5 + $0x4] sm:$0xf] %vm1781, %v1654
  %1784 = vst.msk [vmem:[%s5 + $0x8] sm:$0xf] %vm1781, %v1655
  %1785 = vst.msk [vmem:[%s5 + $0xc] sm:$0xf] %vm1781, %v1656
  %1786 = vst.msk [vmem:[%s5 + $0x10] sm:$0xf] %vm1781, %v1657
  %1787 = vst.msk [vmem:[%s5 + $0x14] sm:$0xf] %vm1781, %v1658
  %1788 = vst.msk [vmem:[%s5 + $0x18] sm:$0xf] %vm1781, %v1659
  %1789 = vst.msk [vmem:[%s5 + $0x1c] sm:$0xf] %vm1781, %v1660
  %1790 = vst.msk [vmem:[%s5 + $0x20] sm:$0xf] %vm1781, %v1661
  %1791 = vst.msk [vmem:[%s5 + $0x24] sm:$0xf] %vm1781, %v1662
  %1792 = vst.msk [vmem:[%s5 + $0x28] sm:$0xf] %vm1781, %v1663
  %1793 = vst.msk [vmem:[%s5 + $0x2c] sm:$0xf] %vm1781, %v1664
  %1794 = vst.msk [vmem:[%s5 + $0x30] sm:$0xf] %vm1781, %v1665
  %1795 = vst.msk [vmem:[%s5 + $0x34] sm:$0xf] %vm1781, %v1666
  %1796 = vst.msk [vmem:[%s5 + $0x38] sm:$0xf] %vm1781, %v1667
  %1797 = vst.msk [vmem:[%s5 + $0x3c] sm:$0xf] %vm1781, %v1668
  %1798 = vst.msk [vmem:[%s5 + $0x40] sm:$0xf] %vm1781, %v1669
  %1799 = vst.msk [vmem:[%s5 + $0x44] sm:$0xf] %vm1781, %v1670
  %1800 = vst.msk [vmem:[%s5 + $0x48] sm:$0xf] %vm1781, %v1671
  %1801 = vst.msk [vmem:[%s5 + $0x4c] sm:$0xf] %vm1781, %v1672
  %1802 = vst.msk [vmem:[%s5 + $0x50] sm:$0xf] %vm1781, %v1673
  %1803 = vst.msk [vmem:[%s5 + $0x54] sm:$0xf] %vm1781, %v1674
  %1804 = vst.msk [vmem:[%s5 + $0x58] sm:$0xf] %vm1781, %v1675
  %1805 = vst.msk [vmem:[%s5 + $0x5c] sm:$0xf] %vm1781, %v1676
  %1806 = vst.msk [vmem:[%s5 + $0x60] sm:$0xf] %vm1781, %v1677
  %1807 = vst.msk [vmem:[%s5 + $0x64] sm:$0xf] %vm1781, %v1678
  %1808 = vst.msk [vmem:[%s5 + $0x68] sm:$0xf] %vm1781, %v1679
  %1809 = vst.msk [vmem:[%s5 + $0x6c] sm:$0xf] %vm1781, %v1680
  %1810 = vst.msk [vmem:[%s5 + $0x70] sm:$0xf] %vm1781, %v1681
  %1811 = vst.msk [vmem:[%s5 + $0x74] sm:$0xf] %vm1781, %v1682
  %1812 = vst.msk [vmem:[%s5 + $0x78] sm:$0xf] %vm1781, %v1683
  %1813 = vst.msk [vmem:[%s5 + $0x7c] sm:$0xf] %vm1781, %v1684
  %1814 = vst.msk [vmem:[%s5 + $0x80] sm:$0xf] %vm1781, %v1685
  %1815 = vst.msk [vmem:[%s5 + $0x84] sm:$0xf] %vm1781, %v1686
  %1816 = vst.msk [vmem:[%s5 + $0x88] sm:$0xf] %vm1781, %v1687
  %1817 = vst.msk [vmem:[%s5 + $0x8c] sm:$0xf] %vm1781, %v1688
  %1818 = vst.msk [vmem:[%s5 + $0x90] sm:$0xf] %vm1781, %v1689
  %1819 = vst.msk [vmem:[%s5 + $0x94] sm:$0xf] %vm1781, %v1690
  %1820 = vst.msk [vmem:[%s5 + $0x98] sm:$0xf] %vm1781, %v1691
  %1821 = vst.msk [vmem:[%s5 + $0x9c] sm:$0xf] %vm1781, %v1692
  %1822 = vst.msk [vmem:[%s5 + $0xa0] sm:$0xf] %vm1781, %v1693
  %1823 = vst.msk [vmem:[%s5 + $0xa4] sm:$0xf] %vm1781, %v1694
  %1824 = vst.msk [vmem:[%s5 + $0xa8] sm:$0xf] %vm1781, %v1695
  %1825 = vst.msk [vmem:[%s5 + $0xac] sm:$0xf] %vm1781, %v1696
  %1826 = vst.msk [vmem:[%s5 + $0xb0] sm:$0xf] %vm1781, %v1697
  %1827 = vst.msk [vmem:[%s5 + $0xb4] sm:$0xf] %vm1781, %v1698
  %1828 = vst.msk [vmem:[%s5 + $0xb8] sm:$0xf] %vm1781, %v1699
  %1829 = vst.msk [vmem:[%s5 + $0xbc] sm:$0xf] %vm1781, %v1700
  %1830 = vst.msk [vmem:[%s5 + $0xc0] sm:$0xf] %vm1781, %v1701
  %1831 = vst.msk [vmem:[%s5 + $0xc4] sm:$0xf] %vm1781, %v1702
  %1832 = vst.msk [vmem:[%s5 + $0xc8] sm:$0xf] %vm1781, %v1703
  %1833 = vst.msk [vmem:[%s5 + $0xcc] sm:$0xf] %vm1781, %v1704
  %1834 = vst.msk [vmem:[%s5 + $0xd0] sm:$0xf] %vm1781, %v1705
  %1835 = vst.msk [vmem:[%s5 + $0xd4] sm:$0xf] %vm1781, %v1706
  %1836 = vst.msk [vmem:[%s5 + $0xd8] sm:$0xf] %vm1781, %v1707
  %1837 = vst.msk [vmem:[%s5 + $0xdc] sm:$0xf] %vm1781, %v1708
  %1838 = vst.msk [vmem:[%s5 + $0xe0] sm:$0xf] %vm1781, %v1709
  %1839 = vst.msk [vmem:[%s5 + $0xe4] sm:$0xf] %vm1781, %v1710
  %1840 = vst.msk [vmem:[%s5 + $0xe8] sm:$0xf] %vm1781, %v1711
  %1841 = vst.msk [vmem:[%s5 + $0xec] sm:$0xf] %vm1781, %v1712
  %1842 = vst.msk [vmem:[%s5 + $0xf0] sm:$0xf] %vm1781, %v1713
  %1843 = vst.msk [vmem:[%s5 + $0xf4] sm:$0xf] %vm1781, %v1714
  %1844 = vst.msk [vmem:[%s5 + $0xf8] sm:$0xf] %vm1781, %v1715
  %1845 = vst.msk [vmem:[%s5 + $0xfc] sm:$0xf] %vm1781, %v1716
  // Predicated region
  $region22: #{tiny_vae_forward.8} parent=0 // pred_check
    _
  $region23: #{tiny_vae_forward.8} parent=0 // pred_check_branch
    %1847 = sbr.rel (0) target = $region25
  $region24: #{tiny_vae_forward.8} parent=0 // pred_region
    _
  $region25: #{tiny_vae_forward.8} parent=0 // pred_fallthru
    _
  // Predicated region
  $region26: #{tiny_vae_forward.8} parent=0 // pred_check
    _
  $region27: #{tiny_vae_forward.8} parent=0 // pred_check_branch
    %1849 = sbr.rel (0) target = $region29
  $region28: #{tiny_vae_forward.8} parent=0 // pred_region
    _
  $region29: #{tiny_vae_forward.8} parent=0 // pred_fallthru
    _

// kernel: tiny_vae_forward.9
$region0: #{tiny_vae_forward.9}
  #allocation0 [shape = 'u32[]', space=smem, size = 0x4, offset = 0x4, fixed_abs, tag = 'smem constant byte address 0x4 - core index']
  #allocation1 [shape = 'u32[144,128]{1,0:T(1,128)}', space=vmem, size = 0x12000, scoped, tag = 'internal scratch']
  %s0 = inlined_call_operand.vmem [shape: bf16[2048,36], index: 0, kind: input, shape index: {}]
  %s1 = inlined_call_operand.vmem [shape: bf16[36,3], index: 1, kind: input, shape index: {}]
  %s2 = inlined_call_operand.vmem [shape: f32[1,3], index: 2, kind: input, shape index: {}]
  %s3 = inlined_call_operand.vmem [shape: f32[2048,3], index: 3, kind: output, shape index: {}]
  %s4 = sld [smem:[#allocation0]]
  $region45: #{tiny_vae_forward.9} parent=0
    _
  %s6 = ssub.s32 1, %s4
  %s7 = scalar_select 0, %s6, %s4
  loop: start=0, step=1, limit=4
  $region2: #{tiny_vae_forward.9} parent=0 // loop_pre_header
    _
  $region3: #{tiny_vae_forward.9} parent=0 // loop_header
    %s9 = sphi 0, %s13
    %p10 = scmp.ge.s32.totalorder %s9, 4
    %s19 = sphi 0, %s21
    %s22 = sphi 0, %s19
    %s23 = sphi 0, %s22
    %s39 = sphi 0, %s23
    %s43 = sphi 0, %s43
    %s45 = sphi 0, %s43
    %s46 = sphi 0, %s45
    %s60 = sphi 0, %s46
    %s64 = sphi 0, %s64
    %s66 = sphi 0, %s64
    %s67 = sphi 0, %s66
    %s81 = sphi 0, %s67
    %s87 = sphi 0, %s89
    %s90 = sphi 0, %s87
    %s91 = sphi 0, %s90
    %s107 = sphi 0, %s91
  $region4: #{tiny_vae_forward.9} parent=0 // loop_header_branch
    %12 = sbr.rel (%p10) target = $region8
  $region5: #{tiny_vae_forward.9} parent=0 // loop_body
    %s14 = ssub.s32 %s9, 1
    %s15 = ssub.s32 %s9, 2
    %s16 = sadd.s32 %s9, 1
    %s17 = ssub.s32 %s9, %s16
    %p18 = scmp.eq.s32.totalorder %s17, 0
    %s20 = sadd.s32 %s19, 1
    %s21 = scalar_select %p18, %s19, %s20
    %p24 = pneg %p18
    %p25 = scmp.eq.s32.totalorder %s9, 1
    %p26 = por %p24, %p25
    %p27 = scmp.ne.s32.totalorder %s19, %s22
    %p28 = scmp.eq.s32.totalorder %s9, 0
    %p29 = por %p27, %p28
    %p30 = scmp.ne.s32.totalorder %s19, %s22
    %p31 = scmp.eq.s32.totalorder %s14, 1
    %p32 = por %p30, %p31
    %p33 = scmp.ne.s32.totalorder %s22, %s23
    %p34 = scmp.eq.s32.totalorder %s14, 0
    %p35 = por %p33, %p34
    %p36 = scmp.ne.s32.totalorder %s22, %s23
    %p37 = scmp.eq.s32.totalorder %s15, 1
    %p38 = por %p36, %p37
    %p40 = scmp.ne.s32.totalorder %s23, %s39
    %p41 = scmp.eq.s32.totalorder %s15, 0
    %p42 = por %p40, %p41
    %s44 = sadd.s32 %s43, 1
    %p47 = scmp.eq.s32.totalorder %s9, 1
    %p48 = scmp.ne.s32.totalorder %s43, %s45
    %p49 = scmp.eq.s32.totalorder %s9, 0
    %p50 = por %p48, %p49
    %p51 = scmp.ne.s32.totalorder %s43, %s45
    %p52 = scmp.eq.s32.totalorder %s14, 1
    %p53 = por %p51, %p52
    %p54 = scmp.ne.s32.totalorder %s45, %s46
    %p55 = scmp.eq.s32.totalorder %s14, 0
    %p56 = por %p54, %p55
    %p57 = scmp.ne.s32.totalorder %s45, %s46
    %p58 = scmp.eq.s32.totalorder %s15, 1
    %p59 = por %p57, %p58
    %p61 = scmp.ne.s32.totalorder %s46, %s60
    %p62 = scmp.eq.s32.totalorder %s15, 0
    %p63 = por %p61, %p62
    %s65 = sadd.s32 %s64, 1
    %p68 = scmp.eq.s32.totalorder %s9, 1
    %p69 = scmp.ne.s32.totalorder %s64, %s66
    %p70 = scmp.eq.s32.totalorder %s9, 0
    %p71 = por %p69, %p70
    %p72 = scmp.ne.s32.totalorder %s64, %s66
    %p73 = scmp.eq.s32.totalorder %s14, 1
    %p74 = por %p72, %p73
    %p75 = scmp.ne.s32.totalorder %s66, %s67
    %p76 = scmp.eq.s32.totalorder %s14, 0
    %p77 = por %p75, %p76
    %p78 = scmp.ne.s32.totalorder %s66, %s67
    %p79 = scmp.eq.s32.totalorder %s15, 1
    %p80 = por %p78, %p79
    %p82 = scmp.ne.s32.totalorder %s67, %s81
    %p83 = scmp.eq.s32.totalorder %s15, 0
    %p84 = por %p82, %p83
    %s85 = ssub.s32 %s9, %s16
    %p86 = scmp.eq.s32.totalorder %s85, 0
    %s88 = sadd.s32 %s87, 1
    %s89 = scalar_select %p86, %s87, %s88
    %p92 = pneg %p86
    %p93 = scmp.eq.s32.totalorder %s9, 1
    %p94 = por %p92, %p93
    %p95 = scmp.ne.s32.totalorder %s87, %s90
    %p96 = scmp.eq.s32.totalorder %s9, 0
    %p97 = por %p95, %p96
    %p98 = scmp.ne.s32.totalorder %s87, %s90
    %p99 = scmp.eq.s32.totalorder %s14, 1
    %p100 = por %p98, %p99
    %p101 = scmp.ne.s32.totalorder %s90, %s91
    %p102 = scmp.eq.s32.totalorder %s14, 0
    %p103 = por %p101, %p102
    %p104 = scmp.ne.s32.totalorder %s90, %s91
    %p105 = scmp.eq.s32.totalorder %s15, 1
    %p106 = por %p104, %p105
    %p108 = scmp.ne.s32.totalorder %s91, %s107
    %p109 = scmp.eq.s32.totalorder %s15, 0
    %p110 = por %p108, %p109
    %p111 = scmp.le.s32.totalorder 1, %s9
    %p112 = scmp.lt.s32.totalorder %s9, 3
    %p113 = pnand %p111, %p112
    %p114 = pneg %p113
    // Predicated region
    $region9: #{tiny_vae_forward.9} parent=5 // pred_check
      _
    $region10: #{tiny_vae_forward.9} parent=5 // pred_check_branch
      %116 = sbr.rel (%p113) target = $region12
    $region11: #{tiny_vae_forward.9} parent=5 // pred_region
      %s117 = ssub.s32 %s9, 1
      // Predicated region
      $region13: #{tiny_vae_forward.9} parent=11 // pred_check
        %p118 = pneg %p56
      $region14: #{tiny_vae_forward.9} parent=11 // pred_check_branch
        %120 = sbr.rel (%p118) target = $region16
      $region15: #{tiny_vae_forward.9} parent=11 // pred_region
        _
      $region16: #{tiny_vae_forward.9} parent=11 // pred_fallthru
        _
      // Predicated region
      $region17: #{tiny_vae_forward.9} parent=11 // pred_check
        %p121 = pneg %p77
      $region18: #{tiny_vae_forward.9} parent=11 // pred_check_branch
        %123 = sbr.rel (%p121) target = $region20
      $region19: #{tiny_vae_forward.9} parent=11 // pred_region
        _
      $region20: #{tiny_vae_forward.9} parent=11 // pred_fallthru
        _
    $region12: #{tiny_vae_forward.9} parent=5 // pred_fallthru
      _
    %p124 = scmp.lt.s32.totalorder %s9, 2
    // Predicated region
    $region21: #{tiny_vae_forward.9} parent=5 // pred_check
      %p125 = pneg %p124
    $region22: #{tiny_vae_forward.9} parent=5 // pred_check_branch
      %127 = sbr.rel (%p125) target = $region24
    $region23: #{tiny_vae_forward.9} parent=5 // pred_region
      // Predicated region
      $region25: #{tiny_vae_forward.9} parent=23 // pred_check
        %p128 = pneg %p29
      $region26: #{tiny_vae_forward.9} parent=23 // pred_check_branch
        %130 = sbr.rel (%p128) target = $region28
      $region27: #{tiny_vae_forward.9} parent=23 // pred_region
        %s131 = smul.u32 128, %s9
        %p132 = scmp.lt.s32.totalorder %s131, 255
        %s133 = scalar_select %p132, %s131, 255
        %s134 = smul.addr %s133, 4
        %s135 = scalar_lea.vmem %s0, %s134
        %s136 = smul.u32 128, %s9
      $region28: #{tiny_vae_forward.9} parent=23 // pred_fallthru
        _
    $region24: #{tiny_vae_forward.9} parent=5 // pred_fallthru
      _
    %p137 = scmp.le.s32.totalorder 1, %s9
    %p138 = scmp.lt.s32.totalorder %s9, 3
    %p139 = pnand %p137, %p138
    %p140 = pneg %p139
    // Predicated region
    $region29: #{tiny_vae_forward.9} parent=5 // pred_check
      _
    $region30: #{tiny_vae_forward.9} parent=5 // pred_check_branch
      %142 = sbr.rel (%p139) target = $region32
    $region31: #{tiny_vae_forward.9} parent=5 // pred_region
      %s143 = ssub.s32 %s9, 1
      %s144 = smul.u32 128, %s14
      %p145 = scmp.lt.s32.totalorder %s144, 255
      %s146 = scalar_select %p145, %s144, 255
      %s147 = smul.addr %s146, 4
      %s148 = scalar_lea.vmem %s0, %s147
      %p149 = pneg %p35
      %p150 = pneg %p32
      %p151 = pneg %p56
      %p152 = pneg %p53
      %p153 = pneg %p77
      %p154 = pneg %p74
      %p155 = pneg %p103
      %p156 = pneg %p100
      %s157 = smul.u32 128, %s14
      %p158 = scmp.lt.s32.totalorder %s157, 255
      %s159 = scalar_select %p158, %s157, 255
      %s160 = smul.addr %s159, 8
      %s161 = scalar_lea.vmem %s3, %s160
      %s162 = smul.u32 128, %s14
      %p163 = scmp.lt.s32.totalorder %s162, 255
      %s164 = scalar_select %p163, %s162, 255
      %s165 = smul.addr %s164, 4
      %s166 = scalar_lea.vmem %s0, %s165
      %s167 = smul.u32 128, %s14
      %s168 = smul.u32 128, %s14
      %p169 = scmp.lt.s32.totalorder %s168, 255
      %s170 = scalar_select %p169, %s168, 255
      %s171 = smul.addr %s170, 8
      %s172 = scalar_lea.vmem %s3, %s171
      %s173 = smul.u32 128, %s14
      %v175 = vld [vmem:[%s166] sm:$0xf]
      %v176 = vld [vmem:[%s166 + $0x4] sm:$0xf]
      %v177 = vld [vmem:[%s166 + $0x8] sm:$0xf]
      %v178 = vld [vmem:[%s166 + $0xc] sm:$0xf]
      %v179 = vld [vmem:[%s166 + $0x10] sm:$0xf]
      %v180 = vld [vmem:[%s166 + $0x14] sm:$0xf]
      %v181 = vld [vmem:[%s166 + $0x18] sm:$0xf]
      %v182 = vld [vmem:[%s166 + $0x1c] sm:$0xf]
      %v183 = vld [vmem:[%s166 + $0x20] sm:$0xf]
      %v184 = vld [vmem:[%s166 + $0x24] sm:$0xf]
      %v185 = vld [vmem:[%s166 + $0x28] sm:$0xf]
      %v186 = vld [vmem:[%s166 + $0x2c] sm:$0xf]
      %v187 = vld [vmem:[%s166 + $0x30] sm:$0xf]
      %v188 = vld [vmem:[%s166 + $0x34] sm:$0xf]
      %v189 = vld [vmem:[%s166 + $0x38] sm:$0xf]
      %v190 = vld [vmem:[%s166 + $0x3c] sm:$0xf]
      %v191 = vld [vmem:[%s166 + $0x40] sm:$0xf]
      %v192 = vld [vmem:[%s166 + $0x44] sm:$0xf]
      %v193 = vld [vmem:[%s166 + $0x48] sm:$0xf]
      %v194 = vld [vmem:[%s166 + $0x4c] sm:$0xf]
      %v195 = vld [vmem:[%s166 + $0x50] sm:$0xf]
      %v196 = vld [vmem:[%s166 + $0x54] sm:$0xf]
      %v197 = vld [vmem:[%s166 + $0x58] sm:$0xf]
      %v198 = vld [vmem:[%s166 + $0x5c] sm:$0xf]
      %v199 = vld [vmem:[%s166 + $0x60] sm:$0xf]
      %v200 = vld [vmem:[%s166 + $0x64] sm:$0xf]
      %v201 = vld [vmem:[%s166 + $0x68] sm:$0xf]
      %v202 = vld [vmem:[%s166 + $0x6c] sm:$0xf]
      %v203 = vld [vmem:[%s166 + $0x70] sm:$0xf]
      %v204 = vld [vmem:[%s166 + $0x74] sm:$0xf]
      %v205 = vld [vmem:[%s166 + $0x78] sm:$0xf]
      %v206 = vld [vmem:[%s166 + $0x7c] sm:$0xf]
      %v207 = vld [vmem:[%s166 + $0x80] sm:$0xf]
      %v208 = vld [vmem:[%s166 + $0x84] sm:$0xf]
      %v209 = vld [vmem:[%s166 + $0x88] sm:$0xf]
      %v210 = vld [vmem:[%s166 + $0x8c] sm:$0xf]
      %v211 = vld [vmem:[%s166 + $0x90] sm:$0xf]
      %v212 = vld [vmem:[%s166 + $0x94] sm:$0xf]
      %v213 = vld [vmem:[%s166 + $0x98] sm:$0xf]
      %v214 = vld [vmem:[%s166 + $0x9c] sm:$0xf]
      %v215 = vld [vmem:[%s166 + $0xa0] sm:$0xf]
      %v216 = vld [vmem:[%s166 + $0xa4] sm:$0xf]
      %v217 = vld [vmem:[%s166 + $0xa8] sm:$0xf]
      %v218 = vld [vmem:[%s166 + $0xac] sm:$0xf]
      %v219 = vld [vmem:[%s166 + $0xb0] sm:$0xf]
      %v220 = vld [vmem:[%s166 + $0xb4] sm:$0xf]
      %v221 = vld [vmem:[%s166 + $0xb8] sm:$0xf]
      %v222 = vld [vmem:[%s166 + $0xbc] sm:$0xf]
      %v223 = vld [vmem:[%s166 + $0xc0] sm:$0xf]
      %v224 = vld [vmem:[%s166 + $0xc4] sm:$0xf]
      %v225 = vld [vmem:[%s166 + $0xc8] sm:$0xf]
      %v226 = vld [vmem:[%s166 + $0xcc] sm:$0xf]
      %v227 = vld [vmem:[%s166 + $0xd0] sm:$0xf]
      %v228 = vld [vmem:[%s166 + $0xd4] sm:$0xf]
      %v229 = vld [vmem:[%s166 + $0xd8] sm:$0xf]
      %v230 = vld [vmem:[%s166 + $0xdc] sm:$0xf]
      %v231 = vld [vmem:[%s166 + $0xe0] sm:$0xf]
      %v232 = vld [vmem:[%s166 + $0xe4] sm:$0xf]
      %v233 = vld [vmem:[%s166 + $0xe8] sm:$0xf]
      %v234 = vld [vmem:[%s166 + $0xec] sm:$0xf]
      %v235 = vld [vmem:[%s166 + $0xf0] sm:$0xf]
      %v236 = vld [vmem:[%s166 + $0xf4] sm:$0xf]
      %v237 = vld [vmem:[%s166 + $0xf8] sm:$0xf]
      %v238 = vld [vmem:[%s166 + $0xfc] sm:$0xf]
      %v239 = vld [vmem:[%s166 + $0x100] sm:$0xf]
      %v240 = vld [vmem:[%s166 + $0x104] sm:$0xf]
      %v241 = vld [vmem:[%s166 + $0x108] sm:$0xf]
      %v242 = vld [vmem:[%s166 + $0x10c] sm:$0xf]
      %v243 = vld [vmem:[%s166 + $0x110] sm:$0xf]
      %v244 = vld [vmem:[%s166 + $0x114] sm:$0xf]
      %v245 = vld [vmem:[%s166 + $0x118] sm:$0xf]
      %v246 = vld [vmem:[%s166 + $0x11c] sm:$0xf]
      %v247 = vld [vmem:[%s166 + $0x120] sm:$0xf]
      %v248 = vld [vmem:[%s166 + $0x124] sm:$0xf]
      %v249 = vld [vmem:[%s166 + $0x128] sm:$0xf]
      %v250 = vld [vmem:[%s166 + $0x12c] sm:$0xf]
      %v251 = vld [vmem:[%s166 + $0x130] sm:$0xf]
      %v252 = vld [vmem:[%s166 + $0x134] sm:$0xf]
      %v253 = vld [vmem:[%s166 + $0x138] sm:$0xf]
      %v254 = vld [vmem:[%s166 + $0x13c] sm:$0xf]
      %v255 = vld [vmem:[%s166 + $0x140] sm:$0xf]
      %v256 = vld [vmem:[%s166 + $0x144] sm:$0xf]
      %v257 = vld [vmem:[%s166 + $0x148] sm:$0xf]
      %v258 = vld [vmem:[%s166 + $0x14c] sm:$0xf]
      %v259 = vld [vmem:[%s166 + $0x150] sm:$0xf]
      %v260 = vld [vmem:[%s166 + $0x154] sm:$0xf]
      %v261 = vld [vmem:[%s166 + $0x158] sm:$0xf]
      %v262 = vld [vmem:[%s166 + $0x15c] sm:$0xf]
      %v263 = vld [vmem:[%s166 + $0x160] sm:$0xf]
      %v264 = vld [vmem:[%s166 + $0x164] sm:$0xf]
      %v265 = vld [vmem:[%s166 + $0x168] sm:$0xf]
      %v266 = vld [vmem:[%s166 + $0x16c] sm:$0xf]
      %v267 = vld [vmem:[%s166 + $0x170] sm:$0xf]
      %v268 = vld [vmem:[%s166 + $0x174] sm:$0xf]
      %v269 = vld [vmem:[%s166 + $0x178] sm:$0xf]
      %v270 = vld [vmem:[%s166 + $0x17c] sm:$0xf]
      %v271 = vld [vmem:[%s166 + $0x180] sm:$0xf]
      %v272 = vld [vmem:[%s166 + $0x184] sm:$0xf]
      %v273 = vld [vmem:[%s166 + $0x188] sm:$0xf]
      %v274 = vld [vmem:[%s166 + $0x18c] sm:$0xf]
      %v275 = vld [vmem:[%s166 + $0x190] sm:$0xf]
      %v276 = vld [vmem:[%s166 + $0x194] sm:$0xf]
      %v277 = vld [vmem:[%s166 + $0x198] sm:$0xf]
      %v278 = vld [vmem:[%s166 + $0x19c] sm:$0xf]
      %v279 = vld [vmem:[%s166 + $0x1a0] sm:$0xf]
      %v280 = vld [vmem:[%s166 + $0x1a4] sm:$0xf]
      %v281 = vld [vmem:[%s166 + $0x1a8] sm:$0xf]
      %v282 = vld [vmem:[%s166 + $0x1ac] sm:$0xf]
      %v283 = vld [vmem:[%s166 + $0x1b0] sm:$0xf]
      %v284 = vld [vmem:[%s166 + $0x1b4] sm:$0xf]
      %v285 = vld [vmem:[%s166 + $0x1b8] sm:$0xf]
      %v286 = vld [vmem:[%s166 + $0x1bc] sm:$0xf]
      %v287 = vld [vmem:[%s166 + $0x1c0] sm:$0xf]
      %v288 = vld [vmem:[%s166 + $0x1c4] sm:$0xf]
      %v289 = vld [vmem:[%s166 + $0x1c8] sm:$0xf]
      %v290 = vld [vmem:[%s166 + $0x1cc] sm:$0xf]
      %v291 = vld [vmem:[%s166 + $0x1d0] sm:$0xf]
      %v292 = vld [vmem:[%s166 + $0x1d4] sm:$0xf]
      %v293 = vld [vmem:[%s166 + $0x1d8] sm:$0xf]
      %v294 = vld [vmem:[%s166 + $0x1dc] sm:$0xf]
      %v295 = vld [vmem:[%s166 + $0x1e0] sm:$0xf]
      %v296 = vld [vmem:[%s166 + $0x1e4] sm:$0xf]
      %v297 = vld [vmem:[%s166 + $0x1e8] sm:$0xf]
      %v298 = vld [vmem:[%s166 + $0x1ec] sm:$0xf]
      %v299 = vld [vmem:[%s166 + $0x1f0] sm:$0xf]
      %v300 = vld [vmem:[%s166 + $0x1f4] sm:$0xf]
      %v301 = vld [vmem:[%s166 + $0x1f8] sm:$0xf]
      %v302 = vld [vmem:[%s166 + $0x1fc] sm:$0xf]
      %v303 = vld [vmem:[%s1] sm:$0xf]
      %v304 = vld [vmem:[%s1 + $0x4] sm:$0xf]
      %v305 = vld [vmem:[%s1 + $0x8] sm:$0xf]
      %v306 = vld [vmem:[%s1 + $0xc] sm:$0xf]
      %v307 = vld [vmem:[%s1 + $0x10] sm:$0x3]
      %v308 = vld [vmem:[%s2] sm:$0x1]
      %v310 = vlaneseq
      %v311 = vshrl.u32 %v310, 7
      %v312 = vsub.s32 0, %v311
      %v313 = vrot.slane %v308, %v312
      %v443 = vunpack.c.l.b16 %v175
      %v444 = vunpack.c.l.b16 %v176
      %v445 = vunpack.c.l.b16 %v177
      %v446 = vunpack.c.l.b16 %v178
      %v447 = vunpack.c.l.b16 %v179
      %v448 = vunpack.c.l.b16 %v180
      %v449 = vunpack.c.l.b16 %v181
      %v450 = vunpack.c.l.b16 %v182
      %v451 = vunpack.c.l.b16 %v183
      %v452 = vunpack.c.l.b16 %v184
      %v453 = vunpack.c.l.b16 %v185
      %v454 = vunpack.c.l.b16 %v186
      %v455 = vunpack.c.l.b16 %v187
      %v456 = vunpack.c.l.b16 %v188
      %v457 = vunpack.c.l.b16 %v189
      %v458 = vunpack.c.l.b16 %v190
      %v459 = vunpack.c.l.b16 %v191
      %v460 = vunpack.c.l.b16 %v192
      %v461 = vunpack.c.l.b16 %v193
      %v462 = vunpack.c.l.b16 %v194
      %v463 = vunpack.c.l.b16 %v195
      %v464 = vunpack.c.l.b16 %v196
      %v465 = vunpack.c.l.b16 %v197
      %v466 = vunpack.c.l.b16 %v198
      %v467 = vunpack.c.l.b16 %v199
      %v468 = vunpack.c.l.b16 %v200
      %v469 = vunpack.c.l.b16 %v201
      %v470 = vunpack.c.l.b16 %v202
      %v471 = vunpack.c.l.b16 %v203
      %v472 = vunpack.c.l.b16 %v204
      %v473 = vunpack.c.l.b16 %v205
      %v474 = vunpack.c.l.b16 %v206
      %v475 = vunpack.c.l.b16 %v207
      %v476 = vunpack.c.l.b16 %v208
      %v477 = vunpack.c.l.b16 %v209
      %v478 = vunpack.c.l.b16 %v210
      %v479 = vunpack.c.l.b16 %v211
      %v480 = vunpack.c.l.b16 %v212
      %v481 = vunpack.c.l.b16 %v213
      %v482 = vunpack.c.l.b16 %v214
      %v483 = vunpack.c.l.b16 %v215
      %v484 = vunpack.c.l.b16 %v216
      %v485 = vunpack.c.l.b16 %v217
      %v486 = vunpack.c.l.b16 %v218
      %v487 = vunpack.c.l.b16 %v219
      %v488 = vunpack.c.l.b16 %v220
      %v489 = vunpack.c.l.b16 %v221
      %v490 = vunpack.c.l.b16 %v222
      %v491 = vunpack.c.l.b16 %v223
      %v492 = vunpack.c.l.b16 %v224
      %v493 = vunpack.c.l.b16 %v225
      %v494 = vunpack.c.l.b16 %v226
      %v495 = vunpack.c.l.b16 %v227
      %v496 = vunpack.c.l.b16 %v228
      %v497 = vunpack.c.l.b16 %v229
      %v498 = vunpack.c.l.b16 %v230
      %v499 = vunpack.c.l.b16 %v231
      %v500 = vunpack.c.l.b16 %v232
      %v501 = vunpack.c.l.b16 %v233
      %v502 = vunpack.c.l.b16 %v234
      %v503 = vunpack.c.l.b16 %v235
      %v504 = vunpack.c.l.b16 %v236
      %v505 = vunpack.c.l.b16 %v237
      %v506 = vunpack.c.l.b16 %v238
      %v507 = vunpack.c.l.b16 %v239
      %v508 = vunpack.c.l.b16 %v240
      %v509 = vunpack.c.l.b16 %v241
      %v510 = vunpack.c.l.b16 %v242
      %v511 = vunpack.c.l.b16 %v243
      %v512 = vunpack.c.l.b16 %v244
      %v513 = vunpack.c.l.b16 %v245
      %v514 = vunpack.c.l.b16 %v246
      %v515 = vunpack.c.l.b16 %v247
      %v516 = vunpack.c.l.b16 %v248
      %v517 = vunpack.c.l.b16 %v249
      %v518 = vunpack.c.l.b16 %v250
      %v519 = vunpack.c.l.b16 %v251
      %v520 = vunpack.c.l.b16 %v252
      %v521 = vunpack.c.l.b16 %v253
      %v522 = vunpack.c.l.b16 %v254
      %v523 = vunpack.c.l.b16 %v255
      %v524 = vunpack.c.l.b16 %v256
      %v525 = vunpack.c.l.b16 %v257
      %v526 = vunpack.c.l.b16 %v258
      %v527 = vunpack.c.l.b16 %v259
      %v528 = vunpack.c.l.b16 %v260
      %v529 = vunpack.c.l.b16 %v261
      %v530 = vunpack.c.l.b16 %v262
      %v531 = vunpack.c.l.b16 %v263
      %v532 = vunpack.c.l.b16 %v264
      %v533 = vunpack.c.l.b16 %v265
      %v534 = vunpack.c.l.b16 %v266
      %v535 = vunpack.c.l.b16 %v267
      %v536 = vunpack.c.l.b16 %v268
      %v537 = vunpack.c.l.b16 %v269
      %v538 = vunpack.c.l.b16 %v270
      %v539 = vunpack.c.l.b16 %v271
      %v540 = vunpack.c.l.b16 %v272
      %v541 = vunpack.c.l.b16 %v273
      %v542 = vunpack.c.l.b16 %v274
      %v543 = vunpack.c.l.b16 %v275
      %v544 = vunpack.c.l.b16 %v276
      %v545 = vunpack.c.l.b16 %v277
      %v546 = vunpack.c.l.b16 %v278
      %v547 = vunpack.c.l.b16 %v279
      %v548 = vunpack.c.l.b16 %v280
      %v549 = vunpack.c.l.b16 %v281
      %v550 = vunpack.c.l.b16 %v282
      %v551 = vunpack.c.l.b16 %v283
      %v552 = vunpack.c.l.b16 %v284
      %v553 = vunpack.c.l.b16 %v285
      %v554 = vunpack.c.l.b16 %v286
      %v555 = vunpack.c.l.b16 %v287
      %v556 = vunpack.c.l.b16 %v288
      %v557 = vunpack.c.l.b16 %v289
      %v558 = vunpack.c.l.b16 %v290
      %v559 = vunpack.c.l.b16 %v291
      %v560 = vunpack.c.l.b16 %v292
      %v561 = vunpack.c.l.b16 %v293
      %v562 = vunpack.c.l.b16 %v294
      %v563 = vunpack.c.l.b16 %v295
      %v564 = vunpack.c.l.b16 %v296
      %v565 = vunpack.c.l.b16 %v297
      %v566 = vunpack.c.l.b16 %v298
      %v567 = vunpack.c.l.b16 %v299
      %v568 = vunpack.c.l.b16 %v300
      %v569 = vunpack.c.l.b16 %v301
      %v570 = vunpack.c.l.b16 %v302
      %v571 = vpack.c.b16 %v444, %v443
      %v572 = vpack.c.b16 %v446, %v445
      %v573 = vpack.c.b16 %v448, %v447
      %v574 = vpack.c.b16 %v450, %v449
      %v575 = vpack.c.b16 %v452, %v451
      %v576 = vpack.c.b16 %v454, %v453
      %v577 = vpack.c.b16 %v456, %v455
      %v578 = vpack.c.b16 %v458, %v457
      %v579 = vpack.c.b16 %v460, %v459
      %v580 = vpack.c.b16 %v462, %v461
      %v581 = vpack.c.b16 %v464, %v463
      %v582 = vpack.c.b16 %v466, %v465
      %v583 = vpack.c.b16 %v468, %v467
      %v584 = vpack.c.b16 %v470, %v469
      %v585 = vpack.c.b16 %v472, %v471
      %v586 = vpack.c.b16 %v474, %v473
      %v587 = vpack.c.b16 %v476, %v475
      %v588 = vpack.c.b16 %v478, %v477
      %v589 = vpack.c.b16 %v480, %v479
      %v590 = vpack.c.b16 %v482, %v481
      %v591 = vpack.c.b16 %v484, %v483
      %v592 = vpack.c.b16 %v486, %v485
      %v593 = vpack.c.b16 %v488, %v487
      %v594 = vpack.c.b16 %v490, %v489
      %v595 = vpack.c.b16 %v492, %v491
      %v596 = vpack.c.b16 %v494, %v493
      %v597 = vpack.c.b16 %v496, %v495
      %v598 = vpack.c.b16 %v498, %v497
      %v599 = vpack.c.b16 %v500, %v499
      %v600 = vpack.c.b16 %v502, %v501
      %v601 = vpack.c.b16 %v504, %v503
      %v602 = vpack.c.b16 %v506, %v505
      %v603 = vpack.c.b16 %v508, %v507
      %v604 = vpack.c.b16 %v510, %v509
      %v605 = vpack.c.b16 %v512, %v511
      %v606 = vpack.c.b16 %v514, %v513
      %v607 = vpack.c.b16 %v516, %v515
      %v608 = vpack.c.b16 %v518, %v517
      %v609 = vpack.c.b16 %v520, %v519
      %v610 = vpack.c.b16 %v522, %v521
      %v611 = vpack.c.b16 %v524, %v523
      %v612 = vpack.c.b16 %v526, %v525
      %v613 = vpack.c.b16 %v528, %v527
      %v614 = vpack.c.b16 %v530, %v529
      %v615 = vpack.c.b16 %v532, %v531
      %v616 = vpack.c.b16 %v534, %v533
      %v617 = vpack.c.b16 %v536, %v535
      %v618 = vpack.c.b16 %v538, %v537
      %v619 = vpack.c.b16 %v540, %v539
      %v620 = vpack.c.b16 %v542, %v541
      %v621 = vpack.c.b16 %v544, %v543
      %v622 = vpack.c.b16 %v546, %v545
      %v623 = vpack.c.b16 %v548, %v547
      %v624 = vpack.c.b16 %v550, %v549
      %v625 = vpack.c.b16 %v552, %v551
      %v626 = vpack.c.b16 %v554, %v553
      %v627 = vpack.c.b16 %v556, %v555
      %v628 = vpack.c.b16 %v558, %v557
      %v629 = vpack.c.b16 %v560, %v559
      %v630 = vpack.c.b16 %v562, %v561
      %v631 = vpack.c.b16 %v564, %v563
      %v632 = vpack.c.b16 %v566, %v565
      %v633 = vpack.c.b16 %v568, %v567
      %v634 = vpack.c.b16 %v570, %v569
      %v640 = vunpack.c.l.b16 %v303
      %v641 = vunpack.c.l.b16 %v304
      %v642 = vunpack.c.l.b16 %v305
      %v643 = vunpack.c.l.b16 %v306
      %v644 = vunpack.c.l.b16 %v307
      %v645 = vpack.c.b16 %v641, %v640
      %v646 = vpack.c.b16 %v643, %v642
      %v647 = vpack.c.b16 %v644, %v644
      %vm650 = vcmask 293888
      %v652 = vsel %vm650, %v571, 0
      %v655 = vsel %vm650, %v572, 0
      %v658 = vsel %vm650, %v573, 0
      %v661 = vsel %vm650, %v574, 0
      %v664 = vsel %vm650, %v575, 0
      %v667 = vsel %vm650, %v576, 0
      %v670 = vsel %vm650, %v577, 0
      %v673 = vsel %vm650, %v578, 0
      %v676 = vsel %vm650, %v579, 0
      %v679 = vsel %vm650, %v580, 0
      %v682 = vsel %vm650, %v581, 0
      %v685 = vsel %vm650, %v582, 0
      %v688 = vsel %vm650, %v583, 0
      %v691 = vsel %vm650, %v584, 0
      %v694 = vsel %vm650, %v585, 0
      %v697 = vsel %vm650, %v586, 0
      %v700 = vsel %vm650, %v587, 0
      %v703 = vsel %vm650, %v588, 0
      %v706 = vsel %vm650, %v589, 0
      %v709 = vsel %vm650, %v590, 0
      %v712 = vsel %vm650, %v591, 0
      %v715 = vsel %vm650, %v592, 0
      %v718 = vsel %vm650, %v593, 0
      %v721 = vsel %vm650, %v594, 0
      %v724 = vsel %vm650, %v595, 0
      %v727 = vsel %vm650, %v596, 0
      %v730 = vsel %vm650, %v597, 0
      %v733 = vsel %vm650, %v598, 0
      %v736 = vsel %vm650, %v599, 0
      %v739 = vsel %vm650, %v600, 0
      %v742 = vsel %vm650, %v601, 0
      %v745 = vsel %vm650, %v602, 0
      %v748 = vsel %vm650, %v603, 0
      %v751 = vsel %vm650, %v604, 0
      %v754 = vsel %vm650, %v605, 0
      %v757 = vsel %vm650, %v606, 0
      %v760 = vsel %vm650, %v607, 0
      %v763 = vsel %vm650, %v608, 0
      %v766 = vsel %vm650, %v609, 0
      %v769 = vsel %vm650, %v610, 0
      %v772 = vsel %vm650, %v611, 0
      %v775 = vsel %vm650, %v612, 0
      %v778 = vsel %vm650, %v613, 0
      %v781 = vsel %vm650, %v614, 0
      %v784 = vsel %vm650, %v615, 0
      %v787 = vsel %vm650, %v616, 0
      %v790 = vsel %vm650, %v617, 0
      %v793 = vsel %vm650, %v618, 0
      %v796 = vsel %vm650, %v619, 0
      %v799 = vsel %vm650, %v620, 0
      %v802 = vsel %vm650, %v621, 0
      %v805 = vsel %vm650, %v622, 0
      %v808 = vsel %vm650, %v623, 0
      %v811 = vsel %vm650, %v624, 0
      %v814 = vsel %vm650, %v625, 0
      %v817 = vsel %vm650, %v626, 0
      %v820 = vsel %vm650, %v627, 0
      %v823 = vsel %vm650, %v628, 0
      %v826 = vsel %vm650, %v629, 0
      %v829 = vsel %vm650, %v630, 0
      %v832 = vsel %vm650, %v631, 0
      %v835 = vsel %vm650, %v632, 0
      %v838 = vsel %vm650, %v633, 0
      %v841 = vsel %vm650, %v634, 0
      %vm843 = vcmask 1041408
      %v845 = vsel %vm843, %v647, 0
      %847 = vmatprep.subr.bf16.mxu0 0
      %848 = vmatpush1.bf16.msra.mxu0 0
      %849 = vmatprep.subr.bf16.mxu0 0
      %850 = vmatpush1.bf16.msra.mxu0 0
      %851 = vmatprep.subr.bf16.mxu0 0
      %852 = vmatpush1.bf16.msra.mxu0 0
      %853 = vmatprep.subr.bf16.mxu0 0
      %854 = vmatpush1.bf16.msra.mxu0 0
      %855 = vmatprep.subr.bf16.mxu0 0
      %856 = vmatpush1.bf16.msra.mxu0 0
      %857 = vmatprep.subr.bf16.mxu0 0
      %858 = vmatpush1.bf16.msra.mxu0 %v845
      %859 = vmatprep.subr.bf16.mxu0 0
      %860 = vmatpush1.bf16.msra.mxu0 %v646
      %861 = vmatprep.subr.bf16.mxu0 0
      %862 = vmatpush1.bf16.msra.mxu0 %v645
      %863 = vmatprep.subr.bf16.mxu0 0
      %864 = vmatpush2.bf16.msra.mxu0 0
      %865 = vmatprep.subr.bf16.mxu0 0
      %866 = vmatpush2.bf16.msra.mxu0 0
      %867 = vmatprep.subr.bf16.mxu0 0
      %868 = vmatpush2.bf16.msra.mxu0 0
      %869 = vmatprep.subr.bf16.mxu0 0
      %870 = vmatpush2.bf16.msra.mxu0 0
      %871 = vmatprep.subr.bf16.mxu0 0
      %872 = vmatpush2.bf16.msra.mxu0 0
      %873 = vmatprep.subr.bf16.mxu0 0
      %874 = vmatpush2.bf16.msra.mxu0 0
      %875 = vmatprep.subr.bf16.mxu0 0
      %876 = vmatpush2.bf16.msra.mxu0 0
      %877 = vmatprep.subr.bf16.mxu0 0
      %878 = vmatpush2.bf16.msra.mxu0 0
      %879 = vmatprep.mubr.bf16.mxu0 0
      %880 = vmatmul.mubr.bf16.gmra.mxu0 %v652
      %v881 = vpop.f32.mrf.mxu0
      %v882 = vadd.f32 %v313, %v881
      %v883 = vpop.f32.mrf.mxu0
      %v884 = vpop.f32.mrf.mxu0
      %v885 = vadd.f32 %v313, %v884
      %v886 = vpop.f32.mrf.mxu0
      %887 = vmatprep.mubr.bf16.mxu0 0
      %888 = vmatmul.mubr.bf16.gmra.mxu0 %v655
      %v889 = vpop.f32.mrf.mxu0
      %v890 = vadd.f32 %v313, %v889
      %v891 = vpop.f32.mrf.mxu0
      %v892 = vpop.f32.mrf.mxu0
      %v893 = vadd.f32 %v313, %v892
      %v894 = vpop.f32.mrf.mxu0
      %895 = vmatprep.mubr.bf16.mxu0 0
      %896 = vmatmul.mubr.bf16.gmra.mxu0 %v658
      %v897 = vpop.f32.mrf.mxu0
      %v898 = vadd.f32 %v313, %v897
      %v899 = vpop.f32.mrf.mxu0
      %v900 = vpop.f32.mrf.mxu0
      %v901 = vadd.f32 %v313, %v900
      %v902 = vpop.f32.mrf.mxu0
      %903 = vmatprep.mubr.bf16.mxu0 0
      %904 = vmatmul.mubr.bf16.gmra.mxu0 %v661
      %v905 = vpop.f32.mrf.mxu0
      %v906 = vadd.f32 %v313, %v905
      %v907 = vpop.f32.mrf.mxu0
      %v908 = vpop.f32.mrf.mxu0
      %v909 = vadd.f32 %v313, %v908
      %v910 = vpop.f32.mrf.mxu0
      %911 = vmatprep.mubr.bf16.mxu0 0
      %912 = vmatmul.mubr.bf16.gmra.mxu0 %v664
      %v913 = vpop.f32.mrf.mxu0
      %v914 = vadd.f32 %v313, %v913
      %v915 = vpop.f32.mrf.mxu0
      %v916 = vpop.f32.mrf.mxu0
      %v917 = vadd.f32 %v313, %v916
      %v918 = vpop.f32.mrf.mxu0
      %919 = vmatprep.mubr.bf16.mxu0 0
      %920 = vmatmul.mubr.bf16.gmra.mxu0 %v667
      %v921 = vpop.f32.mrf.mxu0
      %v922 = vadd.f32 %v313, %v921
      %v923 = vpop.f32.mrf.mxu0
      %v924 = vpop.f32.mrf.mxu0
      %v925 = vadd.f32 %v313, %v924
      %v926 = vpop.f32.mrf.mxu0
      %927 = vmatprep.mubr.bf16.mxu0 0
      %928 = vmatmul.mubr.bf16.gmra.mxu0 %v670
      %v929 = vpop.f32.mrf.mxu0
      %v930 = vadd.f32 %v313, %v929
      %v931 = vpop.f32.mrf.mxu0
      %v932 = vpop.f32.mrf.mxu0
      %v933 = vadd.f32 %v313, %v932
      %v934 = vpop.f32.mrf.mxu0
      %935 = vmatprep.mubr.bf16.mxu0 0
      %936 = vmatmul.mubr.bf16.gmra.mxu0 %v673
      %v937 = vpop.f32.mrf.mxu0
      %v938 = vadd.f32 %v313, %v937
      %v939 = vpop.f32.mrf.mxu0
      %v940 = vpop.f32.mrf.mxu0
      %v941 = vadd.f32 %v313, %v940
      %v942 = vpop.f32.mrf.mxu0
      %943 = vmatprep.mubr.bf16.mxu0 0
      %944 = vmatmul.mubr.bf16.gmra.mxu0 %v676
      %v945 = vpop.f32.mrf.mxu0
      %v946 = vadd.f32 %v313, %v945
      %v947 = vpop.f32.mrf.mxu0
      %v948 = vpop.f32.mrf.mxu0
      %v949 = vadd.f32 %v313, %v948
      %v950 = vpop.f32.mrf.mxu0
      %951 = vmatprep.mubr.bf16.mxu0 0
      %952 = vmatmul.mubr.bf16.gmra.mxu0 %v679
      %v953 = vpop.f32.mrf.mxu0
      %v954 = vadd.f32 %v313, %v953
      %v955 = vpop.f32.mrf.mxu0
      %v956 = vpop.f32.mrf.mxu0
      %v957 = vadd.f32 %v313, %v956
      %v958 = vpop.f32.mrf.mxu0
      %959 = vmatprep.mubr.bf16.mxu0 0
      %960 = vmatmul.mubr.bf16.gmra.mxu0 %v682
      %v961 = vpop.f32.mrf.mxu0
      %v962 = vadd.f32 %v313, %v961
      %v963 = vpop.f32.mrf.mxu0
      %v964 = vpop.f32.mrf.mxu0
      %v965 = vadd.f32 %v313, %v964
      %v966 = vpop.f32.mrf.mxu0
      %967 = vmatprep.mubr.bf16.mxu0 0
      %968 = vmatmul.mubr.bf16.gmra.mxu0 %v685
      %v969 = vpop.f32.mrf.mxu0
      %v970 = vadd.f32 %v313, %v969
      %v971 = vpop.f32.mrf.mxu0
      %v972 = vpop.f32.mrf.mxu0
      %v973 = vadd.f32 %v313, %v972
      %v974 = vpop.f32.mrf.mxu0
      %975 = vmatprep.mubr.bf16.mxu0 0
      %976 = vmatmul.mubr.bf16.gmra.mxu0 %v688
      %v977 = vpop.f32.mrf.mxu0
      %v978 = vadd.f32 %v313, %v977
      %v979 = vpop.f32.mrf.mxu0
      %v980 = vpop.f32.mrf.mxu0
      %v981 = vadd.f32 %v313, %v980
      %v982 = vpop.f32.mrf.mxu0
      %983 = vmatprep.mubr.bf16.mxu0 0
      %984 = vmatmul.mubr.bf16.gmra.mxu0 %v691
      %v985 = vpop.f32.mrf.mxu0
      %v986 = vadd.f32 %v313, %v985
      %v987 = vpop.f32.mrf.mxu0
      %v988 = vpop.f32.mrf.mxu0
      %v989 = vadd.f32 %v313, %v988
      %v990 = vpop.f32.mrf.mxu0
      %991 = vmatprep.mubr.bf16.mxu0 0
      %992 = vmatmul.mubr.bf16.gmra.mxu0 %v694
      %v993 = vpop.f32.mrf.mxu0
      %v994 = vadd.f32 %v313, %v993
      %v995 = vpop.f32.mrf.mxu0
      %v996 = vpop.f32.mrf.mxu0
      %v997 = vadd.f32 %v313, %v996
      %v998 = vpop.f32.mrf.mxu0
      %999 = vmatprep.mubr.bf16.mxu0 0
      %1000 = vmatmul.mubr.bf16.gmra.mxu0 %v697
      %v1001 = vpop.f32.mrf.mxu0
      %v1002 = vadd.f32 %v313, %v1001
      %v1003 = vpop.f32.mrf.mxu0
      %v1004 = vpop.f32.mrf.mxu0
      %v1005 = vadd.f32 %v313, %v1004
      %v1006 = vpop.f32.mrf.mxu0
      %1007 = vmatprep.mubr.bf16.mxu0 0
      %1008 = vmatmul.mubr.bf16.gmra.mxu0 %v700
      %v1009 = vpop.f32.mrf.mxu0
      %v1010 = vadd.f32 %v313, %v1009
      %v1011 = vpop.f32.mrf.mxu0
      %v1012 = vpop.f32.mrf.mxu0
      %v1013 = vadd.f32 %v313, %v1012
      %v1014 = vpop.f32.mrf.mxu0
      %1015 = vmatprep.mubr.bf16.mxu0 0
      %1016 = vmatmul.mubr.bf16.gmra.mxu0 %v703
      %v1017 = vpop.f32.mrf.mxu0
      %v1018 = vadd.f32 %v313, %v1017
      %v1019 = vpop.f32.mrf.mxu0
      %v1020 = vpop.f32.mrf.mxu0
      %v1021 = vadd.f32 %v313, %v1020
      %v1022 = vpop.f32.mrf.mxu0
      %1023 = vmatprep.mubr.bf16.mxu0 0
      %1024 = vmatmul.mubr.bf16.gmra.mxu0 %v706
      %v1025 = vpop.f32.mrf.mxu0
      %v1026 = vadd.f32 %v313, %v1025
      %v1027 = vpop.f32.mrf.mxu0
      %v1028 = vpop.f32.mrf.mxu0
      %v1029 = vadd.f32 %v313, %v1028
      %v1030 = vpop.f32.mrf.mxu0
      %1031 = vmatprep.mubr.bf16.mxu0 0
      %1032 = vmatmul.mubr.bf16.gmra.mxu0 %v709
      %v1033 = vpop.f32.mrf.mxu0
      %v1034 = vadd.f32 %v313, %v1033
      %v1035 = vpop.f32.mrf.mxu0
      %v1036 = vpop.f32.mrf.mxu0
      %v1037 = vadd.f32 %v313, %v1036
      %v1038 = vpop.f32.mrf.mxu0
      %1039 = vmatprep.mubr.bf16.mxu0 0
      %1040 = vmatmul.mubr.bf16.gmra.mxu0 %v712
      %v1041 = vpop.f32.mrf.mxu0
      %v1042 = vadd.f32 %v313, %v1041
      %v1043 = vpop.f32.mrf.mxu0
      %v1044 = vpop.f32.mrf.mxu0
      %v1045 = vadd.f32 %v313, %v1044
      %v1046 = vpop.f32.mrf.mxu0
      %1047 = vmatprep.mubr.bf16.mxu0 0
      %1048 = vmatmul.mubr.bf16.gmra.mxu0 %v715
      %v1049 = vpop.f32.mrf.mxu0
      %v1050 = vadd.f32 %v313, %v1049
      %v1051 = vpop.f32.mrf.mxu0
      %v1052 = vpop.f32.mrf.mxu0
      %v1053 = vadd.f32 %v313, %v1052
      %v1054 = vpop.f32.mrf.mxu0
      %1055 = vmatprep.mubr.bf16.mxu0 0
      %1056 = vmatmul.mubr.bf16.gmra.mxu0 %v718
      %v1057 = vpop.f32.mrf.mxu0
      %v1058 = vadd.f32 %v313, %v1057
      %v1059 = vpop.f32.mrf.mxu0
      %v1060 = vpop.f32.mrf.mxu0
      %v1061 = vadd.f32 %v313, %v1060
      %v1062 = vpop.f32.mrf.mxu0
      %1063 = vmatprep.mubr.bf16.mxu0 0
      %1064 = vmatmul.mubr.bf16.gmra.mxu0 %v721
      %v1065 = vpop.f32.mrf.mxu0
      %v1066 = vadd.f32 %v313, %v1065
      %v1067 = vpop.f32.mrf.mxu0
      %v1068 = vpop.f32.mrf.mxu0
      %v1069 = vadd.f32 %v313, %v1068
      %v1070 = vpop.f32.mrf.mxu0
      %1071 = vmatprep.mubr.bf16.mxu0 0
      %1072 = vmatmul.mubr.bf16.gmra.mxu0 %v724
      %v1073 = vpop.f32.mrf.mxu0
      %v1074 = vadd.f32 %v313, %v1073
      %v1075 = vpop.f32.mrf.mxu0
      %v1076 = vpop.f32.mrf.mxu0
      %v1077 = vadd.f32 %v313, %v1076
      %v1078 = vpop.f32.mrf.mxu0
      %1079 = vmatprep.mubr.bf16.mxu0 0
      %1080 = vmatmul.mubr.bf16.gmra.mxu0 %v727
      %v1081 = vpop.f32.mrf.mxu0
      %v1082 = vadd.f32 %v313, %v1081
      %v1083 = vpop.f32.mrf.mxu0
      %v1084 = vpop.f32.mrf.mxu0
      %v1085 = vadd.f32 %v313, %v1084
      %v1086 = vpop.f32.mrf.mxu0
      %1087 = vmatprep.mubr.bf16.mxu0 0
      %1088 = vmatmul.mubr.bf16.gmra.mxu0 %v730
      %v1089 = vpop.f32.mrf.mxu0
      %v1090 = vadd.f32 %v313, %v1089
      %v1091 = vpop.f32.mrf.mxu0
      %v1092 = vpop.f32.mrf.mxu0
      %v1093 = vadd.f32 %v313, %v1092
      %v1094 = vpop.f32.mrf.mxu0
      %1095 = vmatprep.mubr.bf16.mxu0 0
      %1096 = vmatmul.mubr.bf16.gmra.mxu0 %v733
      %v1097 = vpop.f32.mrf.mxu0
      %v1098 = vadd.f32 %v313, %v1097
      %v1099 = vpop.f32.mrf.mxu0
      %v1100 = vpop.f32.mrf.mxu0
      %v1101 = vadd.f32 %v313, %v1100
      %v1102 = vpop.f32.mrf.mxu0
      %1103 = vmatprep.mubr.bf16.mxu0 0
      %1104 = vmatmul.mubr.bf16.gmra.mxu0 %v736
      %v1105 = vpop.f32.mrf.mxu0
      %v1106 = vadd.f32 %v313, %v1105
      %v1107 = vpop.f32.mrf.mxu0
      %v1108 = vpop.f32.mrf.mxu0
      %v1109 = vadd.f32 %v313, %v1108
      %v1110 = vpop.f32.mrf.mxu0
      %1111 = vmatprep.mubr.bf16.mxu0 0
      %1112 = vmatmul.mubr.bf16.gmra.mxu0 %v739
      %v1113 = vpop.f32.mrf.mxu0
      %v1114 = vadd.f32 %v313, %v1113
      %v1115 = vpop.f32.mrf.mxu0
      %v1116 = vpop.f32.mrf.mxu0
      %v1117 = vadd.f32 %v313, %v1116
      %v1118 = vpop.f32.mrf.mxu0
      %1119 = vmatprep.mubr.bf16.mxu0 0
      %1120 = vmatmul.mubr.bf16.gmra.mxu0 %v742
      %v1121 = vpop.f32.mrf.mxu0
      %v1122 = vadd.f32 %v313, %v1121
      %v1123 = vpop.f32.mrf.mxu0
      %v1124 = vpop.f32.mrf.mxu0
      %v1125 = vadd.f32 %v313, %v1124
      %v1126 = vpop.f32.mrf.mxu0
      %1127 = vmatprep.mubr.bf16.mxu0 0
      %1128 = vmatmul.mubr.bf16.gmra.mxu0 %v745
      %v1129 = vpop.f32.mrf.mxu0
      %v1130 = vadd.f32 %v313, %v1129
      %v1131 = vpop.f32.mrf.mxu0
      %v1132 = vpop.f32.mrf.mxu0
      %v1133 = vadd.f32 %v313, %v1132
      %v1134 = vpop.f32.mrf.mxu0
      %1135 = vmatprep.mubr.bf16.mxu0 0
      %1136 = vmatmul.mubr.bf16.gmra.mxu0 %v748
      %v1137 = vpop.f32.mrf.mxu0
      %v1138 = vadd.f32 %v313, %v1137
      %v1139 = vpop.f32.mrf.mxu0
      %v1140 = vpop.f32.mrf.mxu0
      %v1141 = vadd.f32 %v313, %v1140
      %v1142 = vpop.f32.mrf.mxu0
      %1143 = vmatprep.mubr.bf16.mxu0 0
      %1144 = vmatmul.mubr.bf16.gmra.mxu0 %v751
      %v1145 = vpop.f32.mrf.mxu0
      %v1146 = vadd.f32 %v313, %v1145
      %v1147 = vpop.f32.mrf.mxu0
      %v1148 = vpop.f32.mrf.mxu0
      %v1149 = vadd.f32 %v313, %v1148
      %v1150 = vpop.f32.mrf.mxu0
      %1151 = vmatprep.mubr.bf16.mxu0 0
      %1152 = vmatmul.mubr.bf16.gmra.mxu0 %v754
      %v1153 = vpop.f32.mrf.mxu0
      %v1154 = vadd.f32 %v313, %v1153
      %v1155 = vpop.f32.mrf.mxu0
      %v1156 = vpop.f32.mrf.mxu0
      %v1157 = vadd.f32 %v313, %v1156
      %v1158 = vpop.f32.mrf.mxu0
      %1159 = vmatprep.mubr.bf16.mxu0 0
      %1160 = vmatmul.mubr.bf16.gmra.mxu0 %v757
      %v1161 = vpop.f32.mrf.mxu0
      %v1162 = vadd.f32 %v313, %v1161
      %v1163 = vpop.f32.mrf.mxu0
      %v1164 = vpop.f32.mrf.mxu0
      %v1165 = vadd.f32 %v313, %v1164
      %v1166 = vpop.f32.mrf.mxu0
      %1167 = vmatprep.mubr.bf16.mxu0 0
      %1168 = vmatmul.mubr.bf16.gmra.mxu0 %v760
      %v1169 = vpop.f32.mrf.mxu0
      %v1170 = vadd.f32 %v313, %v1169
      %v1171 = vpop.f32.mrf.mxu0
      %v1172 = vpop.f32.mrf.mxu0
      %v1173 = vadd.f32 %v313, %v1172
      %v1174 = vpop.f32.mrf.mxu0
      %1175 = vmatprep.mubr.bf16.mxu0 0
      %1176 = vmatmul.mubr.bf16.gmra.mxu0 %v763
      %v1177 = vpop.f32.mrf.mxu0
      %v1178 = vadd.f32 %v313, %v1177
      %v1179 = vpop.f32.mrf.mxu0
      %v1180 = vpop.f32.mrf.mxu0
      %v1181 = vadd.f32 %v313, %v1180
      %v1182 = vpop.f32.mrf.mxu0
      %1183 = vmatprep.mubr.bf16.mxu0 0
      %1184 = vmatmul.mubr.bf16.gmra.mxu0 %v766
      %v1185 = vpop.f32.mrf.mxu0
      %v1186 = vadd.f32 %v313, %v1185
      %v1187 = vpop.f32.mrf.mxu0
      %v1188 = vpop.f32.mrf.mxu0
      %v1189 = vadd.f32 %v313, %v1188
      %v1190 = vpop.f32.mrf.mxu0
      %1191 = vmatprep.mubr.bf16.mxu0 0
      %1192 = vmatmul.mubr.bf16.gmra.mxu0 %v769
      %v1193 = vpop.f32.mrf.mxu0
      %v1194 = vadd.f32 %v313, %v1193
      %v1195 = vpop.f32.mrf.mxu0
      %v1196 = vpop.f32.mrf.mxu0
      %v1197 = vadd.f32 %v313, %v1196
      %v1198 = vpop.f32.mrf.mxu0
      %1199 = vmatprep.mubr.bf16.mxu0 0
      %1200 = vmatmul.mubr.bf16.gmra.mxu0 %v772
      %v1201 = vpop.f32.mrf.mxu0
      %v1202 = vadd.f32 %v313, %v1201
      %v1203 = vpop.f32.mrf.mxu0
      %v1204 = vpop.f32.mrf.mxu0
      %v1205 = vadd.f32 %v313, %v1204
      %v1206 = vpop.f32.mrf.mxu0
      %1207 = vmatprep.mubr.bf16.mxu0 0
      %1208 = vmatmul.mubr.bf16.gmra.mxu0 %v775
      %v1209 = vpop.f32.mrf.mxu0
      %v1210 = vadd.f32 %v313, %v1209
      %v1211 = vpop.f32.mrf.mxu0
      %v1212 = vpop.f32.mrf.mxu0
      %v1213 = vadd.f32 %v313, %v1212
      %v1214 = vpop.f32.mrf.mxu0
      %1215 = vmatprep.mubr.bf16.mxu0 0
      %1216 = vmatmul.mubr.bf16.gmra.mxu0 %v778
      %v1217 = vpop.f32.mrf.mxu0
      %v1218 = vadd.f32 %v313, %v1217
      %v1219 = vpop.f32.mrf.mxu0
      %v1220 = vpop.f32.mrf.mxu0
      %v1221 = vadd.f32 %v313, %v1220
      %v1222 = vpop.f32.mrf.mxu0
      %1223 = vmatprep.mubr.bf16.mxu0 0
      %1224 = vmatmul.mubr.bf16.gmra.mxu0 %v781
      %v1225 = vpop.f32.mrf.mxu0
      %v1226 = vadd.f32 %v313, %v1225
      %v1227 = vpop.f32.mrf.mxu0
      %v1228 = vpop.f32.mrf.mxu0
      %v1229 = vadd.f32 %v313, %v1228
      %v1230 = vpop.f32.mrf.mxu0
      %1231 = vmatprep.mubr.bf16.mxu0 0
      %1232 = vmatmul.mubr.bf16.gmra.mxu0 %v784
      %v1233 = vpop.f32.mrf.mxu0
      %v1234 = vadd.f32 %v313, %v1233
      %v1235 = vpop.f32.mrf.mxu0
      %v1236 = vpop.f32.mrf.mxu0
      %v1237 = vadd.f32 %v313, %v1236
      %v1238 = vpop.f32.mrf.mxu0
      %1239 = vmatprep.mubr.bf16.mxu0 0
      %1240 = vmatmul.mubr.bf16.gmra.mxu0 %v787
      %v1241 = vpop.f32.mrf.mxu0
      %v1242 = vadd.f32 %v313, %v1241
      %v1243 = vpop.f32.mrf.mxu0
      %v1244 = vpop.f32.mrf.mxu0
      %v1245 = vadd.f32 %v313, %v1244
      %v1246 = vpop.f32.mrf.mxu0
      %1247 = vmatprep.mubr.bf16.mxu0 0
      %1248 = vmatmul.mubr.bf16.gmra.mxu0 %v790
      %v1249 = vpop.f32.mrf.mxu0
      %v1250 = vadd.f32 %v313, %v1249
      %v1251 = vpop.f32.mrf.mxu0
      %v1252 = vpop.f32.mrf.mxu0
      %v1253 = vadd.f32 %v313, %v1252
      %v1254 = vpop.f32.mrf.mxu0
      %1255 = vmatprep.mubr.bf16.mxu0 0
      %1256 = vmatmul.mubr.bf16.gmra.mxu0 %v793
      %v1257 = vpop.f32.mrf.mxu0
      %v1258 = vadd.f32 %v313, %v1257
      %v1259 = vpop.f32.mrf.mxu0
      %v1260 = vpop.f32.mrf.mxu0
      %v1261 = vadd.f32 %v313, %v1260
      %v1262 = vpop.f32.mrf.mxu0
      %1263 = vmatprep.mubr.bf16.mxu0 0
      %1264 = vmatmul.mubr.bf16.gmra.mxu0 %v796
      %v1265 = vpop.f32.mrf.mxu0
      %v1266 = vadd.f32 %v313, %v1265
      %v1267 = vpop.f32.mrf.mxu0
      %v1268 = vpop.f32.mrf.mxu0
      %v1269 = vadd.f32 %v313, %v1268
      %v1270 = vpop.f32.mrf.mxu0
      %1271 = vmatprep.mubr.bf16.mxu0 0
      %1272 = vmatmul.mubr.bf16.gmra.mxu0 %v799
      %v1273 = vpop.f32.mrf.mxu0
      %v1274 = vadd.f32 %v313, %v1273
      %v1275 = vpop.f32.mrf.mxu0
      %v1276 = vpop.f32.mrf.mxu0
      %v1277 = vadd.f32 %v313, %v1276
      %v1278 = vpop.f32.mrf.mxu0
      %1279 = vmatprep.mubr.bf16.mxu0 0
      %1280 = vmatmul.mubr.bf16.gmra.mxu0 %v802
      %v1281 = vpop.f32.mrf.mxu0
      %v1282 = vadd.f32 %v313, %v1281
      %v1283 = vpop.f32.mrf.mxu0
      %v1284 = vpop.f32.mrf.mxu0
      %v1285 = vadd.f32 %v313, %v1284
      %v1286 = vpop.f32.mrf.mxu0
      %1287 = vmatprep.mubr.bf16.mxu0 0
      %1288 = vmatmul.mubr.bf16.gmra.mxu0 %v805
      %v1289 = vpop.f32.mrf.mxu0
      %v1290 = vadd.f32 %v313, %v1289
      %v1291 = vpop.f32.mrf.mxu0
      %v1292 = vpop.f32.mrf.mxu0
      %v1293 = vadd.f32 %v313, %v1292
      %v1294 = vpop.f32.mrf.mxu0
      %1295 = vmatprep.mubr.bf16.mxu0 0
      %1296 = vmatmul.mubr.bf16.gmra.mxu0 %v808
      %v1297 = vpop.f32.mrf.mxu0
      %v1298 = vadd.f32 %v313, %v1297
      %v1299 = vpop.f32.mrf.mxu0
      %v1300 = vpop.f32.mrf.mxu0
      %v1301 = vadd.f32 %v313, %v1300
      %v1302 = vpop.f32.mrf.mxu0
      %1303 = vmatprep.mubr.bf16.mxu0 0
      %1304 = vmatmul.mubr.bf16.gmra.mxu0 %v811
      %v1305 = vpop.f32.mrf.mxu0
      %v1306 = vadd.f32 %v313, %v1305
      %v1307 = vpop.f32.mrf.mxu0
      %v1308 = vpop.f32.mrf.mxu0
      %v1309 = vadd.f32 %v313, %v1308
      %v1310 = vpop.f32.mrf.mxu0
      %1311 = vmatprep.mubr.bf16.mxu0 0
      %1312 = vmatmul.mubr.bf16.gmra.mxu0 %v814
      %v1313 = vpop.f32.mrf.mxu0
      %v1314 = vadd.f32 %v313, %v1313
      %v1315 = vpop.f32.mrf.mxu0
      %v1316 = vpop.f32.mrf.mxu0
      %v1317 = vadd.f32 %v313, %v1316
      %v1318 = vpop.f32.mrf.mxu0
      %1319 = vmatprep.mubr.bf16.mxu0 0
      %1320 = vmatmul.mubr.bf16.gmra.mxu0 %v817
      %v1321 = vpop.f32.mrf.mxu0
      %v1322 = vadd.f32 %v313, %v1321
      %v1323 = vpop.f32.mrf.mxu0
      %v1324 = vpop.f32.mrf.mxu0
      %v1325 = vadd.f32 %v313, %v1324
      %v1326 = vpop.f32.mrf.mxu0
      %1327 = vmatprep.mubr.bf16.mxu0 0
      %1328 = vmatmul.mubr.bf16.gmra.mxu0 %v820
      %v1329 = vpop.f32.mrf.mxu0
      %v1330 = vadd.f32 %v313, %v1329
      %v1331 = vpop.f32.mrf.mxu0
      %v1332 = vpop.f32.mrf.mxu0
      %v1333 = vadd.f32 %v313, %v1332
      %v1334 = vpop.f32.mrf.mxu0
      %1335 = vmatprep.mubr.bf16.mxu0 0
      %1336 = vmatmul.mubr.bf16.gmra.mxu0 %v823
      %v1337 = vpop.f32.mrf.mxu0
      %v1338 = vadd.f32 %v313, %v1337
      %v1339 = vpop.f32.mrf.mxu0
      %v1340 = vpop.f32.mrf.mxu0
      %v1341 = vadd.f32 %v313, %v1340
      %v1342 = vpop.f32.mrf.mxu0
      %1343 = vmatprep.mubr.bf16.mxu0 0
      %1344 = vmatmul.mubr.bf16.gmra.mxu0 %v826
      %v1345 = vpop.f32.mrf.mxu0
      %v1346 = vadd.f32 %v313, %v1345
      %v1347 = vpop.f32.mrf.mxu0
      %v1348 = vpop.f32.mrf.mxu0
      %v1349 = vadd.f32 %v313, %v1348
      %v1350 = vpop.f32.mrf.mxu0
      %1351 = vmatprep.mubr.bf16.mxu0 0
      %1352 = vmatmul.mubr.bf16.gmra.mxu0 %v829
      %v1353 = vpop.f32.mrf.mxu0
      %v1354 = vadd.f32 %v313, %v1353
      %v1355 = vpop.f32.mrf.mxu0
      %v1356 = vpop.f32.mrf.mxu0
      %v1357 = vadd.f32 %v313, %v1356
      %v1358 = vpop.f32.mrf.mxu0
      %1359 = vmatprep.mubr.bf16.mxu0 0
      %1360 = vmatmul.mubr.bf16.gmra.mxu0 %v832
      %v1361 = vpop.f32.mrf.mxu0
      %v1362 = vadd.f32 %v313, %v1361
      %v1363 = vpop.f32.mrf.mxu0
      %v1364 = vpop.f32.mrf.mxu0
      %v1365 = vadd.f32 %v313, %v1364
      %v1366 = vpop.f32.mrf.mxu0
      %1367 = vmatprep.mubr.bf16.mxu0 0
      %1368 = vmatmul.mubr.bf16.gmra.mxu0 %v835
      %v1369 = vpop.f32.mrf.mxu0
      %v1370 = vadd.f32 %v313, %v1369
      %v1371 = vpop.f32.mrf.mxu0
      %v1372 = vpop.f32.mrf.mxu0
      %v1373 = vadd.f32 %v313, %v1372
      %v1374 = vpop.f32.mrf.mxu0
      %1375 = vmatprep.mubr.bf16.mxu0 0
      %1376 = vmatmul.mubr.bf16.gmra.mxu0 %v838
      %v1377 = vpop.f32.mrf.mxu0
      %v1378 = vadd.f32 %v313, %v1377
      %v1379 = vpop.f32.mrf.mxu0
      %v1380 = vpop.f32.mrf.mxu0
      %v1381 = vadd.f32 %v313, %v1380
      %v1382 = vpop.f32.mrf.mxu0
      %1383 = vmatprep.mubr.bf16.mxu0 0
      %1384 = vmatmul.mubr.bf16.gmra.mxu0 %v841
      %v1385 = vpop.f32.mrf.mxu0
      %v1386 = vadd.f32 %v313, %v1385
      %v1387 = vpop.f32.mrf.mxu0
      %v1388 = vpop.f32.mrf.mxu0
      %v1389 = vadd.f32 %v313, %v1388
      %v1390 = vpop.f32.mrf.mxu0
      %1391 = vdwg.mxu0
      %v1392 = vtanh.pop %v882
      %v1393 = vtanh.pop %v885
      %v1394 = vtanh.pop %v890
      %v1395 = vtanh.pop %v893
      %v1396 = vtanh.pop %v898
      %v1397 = vtanh.pop %v901
      %v1398 = vtanh.pop %v906
      %v1399 = vtanh.pop %v909
      %v1400 = vtanh.pop %v914
      %v1401 = vtanh.pop %v917
      %v1402 = vtanh.pop %v922
      %v1403 = vtanh.pop %v925
      %v1404 = vtanh.pop %v930
      %v1405 = vtanh.pop %v933
      %v1406 = vtanh.pop %v938
      %v1407 = vtanh.pop %v941
      %v1408 = vtanh.pop %v946
      %v1409 = vtanh.pop %v949
      %v1410 = vtanh.pop %v954
      %v1411 = vtanh.pop %v957
      %v1412 = vtanh.pop %v962
      %v1413 = vtanh.pop %v965
      %v1414 = vtanh.pop %v970
      %v1415 = vtanh.pop %v973
      %v1416 = vtanh.pop %v978
      %v1417 = vtanh.pop %v981
      %v1418 = vtanh.pop %v986
      %v1419 = vtanh.pop %v989
      %v1420 = vtanh.pop %v994
      %v1421 = vtanh.pop %v997
      %v1422 = vtanh.pop %v1002
      %v1423 = vtanh.pop %v1005
      %v1424 = vtanh.pop %v1010
      %v1425 = vtanh.pop %v1013
      %v1426 = vtanh.pop %v1018
      %v1427 = vtanh.pop %v1021
      %v1428 = vtanh.pop %v1026
      %v1429 = vtanh.pop %v1029
      %v1430 = vtanh.pop %v1034
      %v1431 = vtanh.pop %v1037
      %v1432 = vtanh.pop %v1042
      %v1433 = vtanh.pop %v1045
      %v1434 = vtanh.pop %v1050
      %v1435 = vtanh.pop %v1053
      %v1436 = vtanh.pop %v1058
      %v1437 = vtanh.pop %v1061
      %v1438 = vtanh.pop %v1066
      %v1439 = vtanh.pop %v1069
      %v1440 = vtanh.pop %v1074
      %v1441 = vtanh.pop %v1077
      %v1442 = vtanh.pop %v1082
      %v1443 = vtanh.pop %v1085
      %v1444 = vtanh.pop %v1090
      %v1445 = vtanh.pop %v1093
      %v1446 = vtanh.pop %v1098
      %v1447 = vtanh.pop %v1101
      %v1448 = vtanh.pop %v1106
      %v1449 = vtanh.pop %v1109
      %v1450 = vtanh.pop %v1114
      %v1451 = vtanh.pop %v1117
      %v1452 = vtanh.pop %v1122
      %v1453 = vtanh.pop %v1125
      %v1454 = vtanh.pop %v1130
      %v1455 = vtanh.pop %v1133
      %v1456 = vtanh.pop %v1138
      %v1457 = vtanh.pop %v1141
      %v1458 = vtanh.pop %v1146
      %v1459 = vtanh.pop %v1149
      %v1460 = vtanh.pop %v1154
      %v1461 = vtanh.pop %v1157
      %v1462 = vtanh.pop %v1162
      %v1463 = vtanh.pop %v1165
      %v1464 = vtanh.pop %v1170
      %v1465 = vtanh.pop %v1173
      %v1466 = vtanh.pop %v1178
      %v1467 = vtanh.pop %v1181
      %v1468 = vtanh.pop %v1186
      %v1469 = vtanh.pop %v1189
      %v1470 = vtanh.pop %v1194
      %v1471 = vtanh.pop %v1197
      %v1472 = vtanh.pop %v1202
      %v1473 = vtanh.pop %v1205
      %v1474 = vtanh.pop %v1210
      %v1475 = vtanh.pop %v1213
      %v1476 = vtanh.pop %v1218
      %v1477 = vtanh.pop %v1221
      %v1478 = vtanh.pop %v1226
      %v1479 = vtanh.pop %v1229
      %v1480 = vtanh.pop %v1234
      %v1481 = vtanh.pop %v1237
      %v1482 = vtanh.pop %v1242
      %v1483 = vtanh.pop %v1245
      %v1484 = vtanh.pop %v1250
      %v1485 = vtanh.pop %v1253
      %v1486 = vtanh.pop %v1258
      %v1487 = vtanh.pop %v1261
      %v1488 = vtanh.pop %v1266
      %v1489 = vtanh.pop %v1269
      %v1490 = vtanh.pop %v1274
      %v1491 = vtanh.pop %v1277
      %v1492 = vtanh.pop %v1282
      %v1493 = vtanh.pop %v1285
      %v1494 = vtanh.pop %v1290
      %v1495 = vtanh.pop %v1293
      %v1496 = vtanh.pop %v1298
      %v1497 = vtanh.pop %v1301
      %v1498 = vtanh.pop %v1306
      %v1499 = vtanh.pop %v1309
      %v1500 = vtanh.pop %v1314
      %v1501 = vtanh.pop %v1317
      %v1502 = vtanh.pop %v1322
      %v1503 = vtanh.pop %v1325
      %v1504 = vtanh.pop %v1330
      %v1505 = vtanh.pop %v1333
      %v1506 = vtanh.pop %v1338
      %v1507 = vtanh.pop %v1341
      %v1508 = vtanh.pop %v1346
      %v1509 = vtanh.pop %v1349
      %v1510 = vtanh.pop %v1354
      %v1511 = vtanh.pop %v1357
      %v1512 = vtanh.pop %v1362
      %v1513 = vtanh.pop %v1365
      %v1514 = vtanh.pop %v1370
      %v1515 = vtanh.pop %v1373
      %v1516 = vtanh.pop %v1378
      %v1517 = vtanh.pop %v1381
      %v1518 = vtanh.pop %v1386
      %v1519 = vtanh.pop %v1389
      %vm1520 = vcmask 23552
      %1521 = vst.msk [vmem:[%s172] sm:$0xff] %vm1520, %v1392
      %1522 = vst.msk [vmem:[%s172 + $0x8] sm:$0xff] %vm1520, %v1393
      %1523 = vst.msk [vmem:[%s172 + $0x10] sm:$0xff] %vm1520, %v1394
      %1524 = vst.msk [vmem:[%s172 + $0x18] sm:$0xff] %vm1520, %v1395
      %1525 = vst.msk [vmem:[%s172 + $0x20] sm:$0xff] %vm1520, %v1396
      %1526 = vst.msk [vmem:[%s172 + $0x28] sm:$0xff] %vm1520, %v1397
      %1527 = vst.msk [vmem:[%s172 + $0x30] sm:$0xff] %vm1520, %v1398
      %1528 = vst.msk [vmem:[%s172 + $0x38] sm:$0xff] %vm1520, %v1399
      %1529 = vst.msk [vmem:[%s172 + $0x40] sm:$0xff] %vm1520, %v1400
      %1530 = vst.msk [vmem:[%s172 + $0x48] sm:$0xff] %vm1520, %v1401
      %1531 = vst.msk [vmem:[%s172 + $0x50] sm:$0xff] %vm1520, %v1402
      %1532 = vst.msk [vmem:[%s172 + $0x58] sm:$0xff] %vm1520, %v1403
      %1533 = vst.msk [vmem:[%s172 + $0x60] sm:$0xff] %vm1520, %v1404
      %1534 = vst.msk [vmem:[%s172 + $0x68] sm:$0xff] %vm1520, %v1405
      %1535 = vst.msk [vmem:[%s172 + $0x70] sm:$0xff] %vm1520, %v1406
      %1536 = vst.msk [vmem:[%s172 + $0x78] sm:$0xff] %vm1520, %v1407
      %1537 = vst.msk [vmem:[%s172 + $0x80] sm:$0xff] %vm1520, %v1408
      %1538 = vst.msk [vmem:[%s172 + $0x88] sm:$0xff] %vm1520, %v1409
      %1539 = vst.msk [vmem:[%s172 + $0x90] sm:$0xff] %vm1520, %v1410
      %1540 = vst.msk [vmem:[%s172 + $0x98] sm:$0xff] %vm1520, %v1411
      %1541 = vst.msk [vmem:[%s172 + $0xa0] sm:$0xff] %vm1520, %v1412
      %1542 = vst.msk [vmem:[%s172 + $0xa8] sm:$0xff] %vm1520, %v1413
      %1543 = vst.msk [vmem:[%s172 + $0xb0] sm:$0xff] %vm1520, %v1414
      %1544 = vst.msk [vmem:[%s172 + $0xb8] sm:$0xff] %vm1520, %v1415
      %1545 = vst.msk [vmem:[%s172 + $0xc0] sm:$0xff] %vm1520, %v1416
      %1546 = vst.msk [vmem:[%s172 + $0xc8] sm:$0xff] %vm1520, %v1417
      %1547 = vst.msk [vmem:[%s172 + $0xd0] sm:$0xff] %vm1520, %v1418
      %1548 = vst.msk [vmem:[%s172 + $0xd8] sm:$0xff] %vm1520, %v1419
      %1549 = vst.msk [vmem:[%s172 + $0xe0] sm:$0xff] %vm1520, %v1420
      %1550 = vst.msk [vmem:[%s172 + $0xe8] sm:$0xff] %vm1520, %v1421
      %1551 = vst.msk [vmem:[%s172 + $0xf0] sm:$0xff] %vm1520, %v1422
      %1552 = vst.msk [vmem:[%s172 + $0xf8] sm:$0xff] %vm1520, %v1423
      %1553 = vst.msk [vmem:[%s172 + $0x100] sm:$0xff] %vm1520, %v1424
      %1554 = vst.msk [vmem:[%s172 + $0x108] sm:$0xff] %vm1520, %v1425
      %1555 = vst.msk [vmem:[%s172 + $0x110] sm:$0xff] %vm1520, %v1426
      %1556 = vst.msk [vmem:[%s172 + $0x118] sm:$0xff] %vm1520, %v1427
      %1557 = vst.msk [vmem:[%s172 + $0x120] sm:$0xff] %vm1520, %v1428
      %1558 = vst.msk [vmem:[%s172 + $0x128] sm:$0xff] %vm1520, %v1429
      %1559 = vst.msk [vmem:[%s172 + $0x130] sm:$0xff] %vm1520, %v1430
      %1560 = vst.msk [vmem:[%s172 + $0x138] sm:$0xff] %vm1520, %v1431
      %1561 = vst.msk [vmem:[%s172 + $0x140] sm:$0xff] %vm1520, %v1432
      %1562 = vst.msk [vmem:[%s172 + $0x148] sm:$0xff] %vm1520, %v1433
      %1563 = vst.msk [vmem:[%s172 + $0x150] sm:$0xff] %vm1520, %v1434
      %1564 = vst.msk [vmem:[%s172 + $0x158] sm:$0xff] %vm1520, %v1435
      %1565 = vst.msk [vmem:[%s172 + $0x160] sm:$0xff] %vm1520, %v1436
      %1566 = vst.msk [vmem:[%s172 + $0x168] sm:$0xff] %vm1520, %v1437
      %1567 = vst.msk [vmem:[%s172 + $0x170] sm:$0xff] %vm1520, %v1438
      %1568 = vst.msk [vmem:[%s172 + $0x178] sm:$0xff] %vm1520, %v1439
      %1569 = vst.msk [vmem:[%s172 + $0x180] sm:$0xff] %vm1520, %v1440
      %1570 = vst.msk [vmem:[%s172 + $0x188] sm:$0xff] %vm1520, %v1441
      %1571 = vst.msk [vmem:[%s172 + $0x190] sm:$0xff] %vm1520, %v1442
      %1572 = vst.msk [vmem:[%s172 + $0x198] sm:$0xff] %vm1520, %v1443
      %1573 = vst.msk [vmem:[%s172 + $0x1a0] sm:$0xff] %vm1520, %v1444
      %1574 = vst.msk [vmem:[%s172 + $0x1a8] sm:$0xff] %vm1520, %v1445
      %1575 = vst.msk [vmem:[%s172 + $0x1b0] sm:$0xff] %vm1520, %v1446
      %1576 = vst.msk [vmem:[%s172 + $0x1b8] sm:$0xff] %vm1520, %v1447
      %1577 = vst.msk [vmem:[%s172 + $0x1c0] sm:$0xff] %vm1520, %v1448
      %1578 = vst.msk [vmem:[%s172 + $0x1c8] sm:$0xff] %vm1520, %v1449
      %1579 = vst.msk [vmem:[%s172 + $0x1d0] sm:$0xff] %vm1520, %v1450
      %1580 = vst.msk [vmem:[%s172 + $0x1d8] sm:$0xff] %vm1520, %v1451
      %1581 = vst.msk [vmem:[%s172 + $0x1e0] sm:$0xff] %vm1520, %v1452
      %1582 = vst.msk [vmem:[%s172 + $0x1e8] sm:$0xff] %vm1520, %v1453
      %1583 = vst.msk [vmem:[%s172 + $0x1f0] sm:$0xff] %vm1520, %v1454
      %1584 = vst.msk [vmem:[%s172 + $0x1f8] sm:$0xff] %vm1520, %v1455
      %1585 = vst.msk [vmem:[%s172 + $0x200] sm:$0xff] %vm1520, %v1456
      %1586 = vst.msk [vmem:[%s172 + $0x208] sm:$0xff] %vm1520, %v1457
      %1587 = vst.msk [vmem:[%s172 + $0x210] sm:$0xff] %vm1520, %v1458
      %1588 = vst.msk [vmem:[%s172 + $0x218] sm:$0xff] %vm1520, %v1459
      %1589 = vst.msk [vmem:[%s172 + $0x220] sm:$0xff] %vm1520, %v1460
      %1590 = vst.msk [vmem:[%s172 + $0x228] sm:$0xff] %vm1520, %v1461
      %1591 = vst.msk [vmem:[%s172 + $0x230] sm:$0xff] %vm1520, %v1462
      %1592 = vst.msk [vmem:[%s172 + $0x238] sm:$0xff] %vm1520, %v1463
      %1593 = vst.msk [vmem:[%s172 + $0x240] sm:$0xff] %vm1520, %v1464
      %1594 = vst.msk [vmem:[%s172 + $0x248] sm:$0xff] %vm1520, %v1465
      %1595 = vst.msk [vmem:[%s172 + $0x250] sm:$0xff] %vm1520, %v1466
      %1596 = vst.msk [vmem:[%s172 + $0x258] sm:$0xff] %vm1520, %v1467
      %1597 = vst.msk [vmem:[%s172 + $0x260] sm:$0xff] %vm1520, %v1468
      %1598 = vst.msk [vmem:[%s172 + $0x268] sm:$0xff] %vm1520, %v1469
      %1599 = vst.msk [vmem:[%s172 + $0x270] sm:$0xff] %vm1520, %v1470
      %1600 = vst.msk [vmem:[%s172 + $0x278] sm:$0xff] %vm1520, %v1471
      %1601 = vst.msk [vmem:[%s172 + $0x280] sm:$0xff] %vm1520, %v1472
      %1602 = vst.msk [vmem:[%s172 + $0x288] sm:$0xff] %vm1520, %v1473
      %1603 = vst.msk [vmem:[%s172 + $0x290] sm:$0xff] %vm1520, %v1474
      %1604 = vst.msk [vmem:[%s172 + $0x298] sm:$0xff] %vm1520, %v1475
      %1605 = vst.msk [vmem:[%s172 + $0x2a0] sm:$0xff] %vm1520, %v1476
      %1606 = vst.msk [vmem:[%s172 + $0x2a8] sm:$0xff] %vm1520, %v1477
      %1607 = vst.msk [vmem:[%s172 + $0x2b0] sm:$0xff] %vm1520, %v1478
      %1608 = vst.msk [vmem:[%s172 + $0x2b8] sm:$0xff] %vm1520, %v1479
      %1609 = vst.msk [vmem:[%s172 + $0x2c0] sm:$0xff] %vm1520, %v1480
      %1610 = vst.msk [vmem:[%s172 + $0x2c8] sm:$0xff] %vm1520, %v1481
      %1611 = vst.msk [vmem:[%s172 + $0x2d0] sm:$0xff] %vm1520, %v1482
      %1612 = vst.msk [vmem:[%s172 + $0x2d8] sm:$0xff] %vm1520, %v1483
      %1613 = vst.msk [vmem:[%s172 + $0x2e0] sm:$0xff] %vm1520, %v1484
      %1614 = vst.msk [vmem:[%s172 + $0x2e8] sm:$0xff] %vm1520, %v1485
      %1615 = vst.msk [vmem:[%s172 + $0x2f0] sm:$0xff] %vm1520, %v1486
      %1616 = vst.msk [vmem:[%s172 + $0x2f8] sm:$0xff] %vm1520, %v1487
      %1617 = vst.msk [vmem:[%s172 + $0x300] sm:$0xff] %vm1520, %v1488
      %1618 = vst.msk [vmem:[%s172 + $0x308] sm:$0xff] %vm1520, %v1489
      %1619 = vst.msk [vmem:[%s172 + $0x310] sm:$0xff] %vm1520, %v1490
      %1620 = vst.msk [vmem:[%s172 + $0x318] sm:$0xff] %vm1520, %v1491
      %1621 = vst.msk [vmem:[%s172 + $0x320] sm:$0xff] %vm1520, %v1492
      %1622 = vst.msk [vmem:[%s172 + $0x328] sm:$0xff] %vm1520, %v1493
      %1623 = vst.msk [vmem:[%s172 + $0x330] sm:$0xff] %vm1520, %v1494
      %1624 = vst.msk [vmem:[%s172 + $0x338] sm:$0xff] %vm1520, %v1495
      %1625 = vst.msk [vmem:[%s172 + $0x340] sm:$0xff] %vm1520, %v1496
      %1626 = vst.msk [vmem:[%s172 + $0x348] sm:$0xff] %vm1520, %v1497
      %1627 = vst.msk [vmem:[%s172 + $0x350] sm:$0xff] %vm1520, %v1498
      %1628 = vst.msk [vmem:[%s172 + $0x358] sm:$0xff] %vm1520, %v1499
      %1629 = vst.msk [vmem:[%s172 + $0x360] sm:$0xff] %vm1520, %v1500
      %1630 = vst.msk [vmem:[%s172 + $0x368] sm:$0xff] %vm1520, %v1501
      %1631 = vst.msk [vmem:[%s172 + $0x370] sm:$0xff] %vm1520, %v1502
      %1632 = vst.msk [vmem:[%s172 + $0x378] sm:$0xff] %vm1520, %v1503
      %1633 = vst.msk [vmem:[%s172 + $0x380] sm:$0xff] %vm1520, %v1504
      %1634 = vst.msk [vmem:[%s172 + $0x388] sm:$0xff] %vm1520, %v1505
      %1635 = vst.msk [vmem:[%s172 + $0x390] sm:$0xff] %vm1520, %v1506
      %1636 = vst.msk [vmem:[%s172 + $0x398] sm:$0xff] %vm1520, %v1507
      %1637 = vst.msk [vmem:[%s172 + $0x3a0] sm:$0xff] %vm1520, %v1508
      %1638 = vst.msk [vmem:[%s172 + $0x3a8] sm:$0xff] %vm1520, %v1509
      %1639 = vst.msk [vmem:[%s172 + $0x3b0] sm:$0xff] %vm1520, %v1510
      %1640 = vst.msk [vmem:[%s172 + $0x3b8] sm:$0xff] %vm1520, %v1511
      %1641 = vst.msk [vmem:[%s172 + $0x3c0] sm:$0xff] %vm1520, %v1512
      %1642 = vst.msk [vmem:[%s172 + $0x3c8] sm:$0xff] %vm1520, %v1513
      %1643 = vst.msk [vmem:[%s172 + $0x3d0] sm:$0xff] %vm1520, %v1514
      %1644 = vst.msk [vmem:[%s172 + $0x3d8] sm:$0xff] %vm1520, %v1515
      %1645 = vst.msk [vmem:[%s172 + $0x3e0] sm:$0xff] %vm1520, %v1516
      %1646 = vst.msk [vmem:[%s172 + $0x3e8] sm:$0xff] %vm1520, %v1517
      %1647 = vst.msk [vmem:[%s172 + $0x3f0] sm:$0xff] %vm1520, %v1518
      %1648 = vst.msk [vmem:[%s172 + $0x3f8] sm:$0xff] %vm1520, %v1519
      %s1649 = smul.u32 128, %s14
      %p1650 = scmp.lt.s32.totalorder %s1649, 255
      %s1651 = scalar_select %p1650, %s1649, 255
      %s1652 = smul.addr %s1651, 8
      %s1653 = scalar_lea.vmem %s3, %s1652
      // Predicated region
      $region33: #{tiny_vae_forward.9} parent=31 // pred_check
        %p1654 = pneg %p100
      $region34: #{tiny_vae_forward.9} parent=31 // pred_check_branch
        %1656 = sbr.rel (%p1654) target = $region36
      $region35: #{tiny_vae_forward.9} parent=31 // pred_region
        %s1657 = smul.u32 128, %s14
      $region36: #{tiny_vae_forward.9} parent=31 // pred_fallthru
        _
    $region32: #{tiny_vae_forward.9} parent=5 // pred_fallthru
      _
    %p1658 = scmp.le.s32.totalorder 2, %s9
    // Predicated region
    $region37: #{tiny_vae_forward.9} parent=5 // pred_check
      %p1659 = pneg %p1658
    $region38: #{tiny_vae_forward.9} parent=5 // pred_check_branch
      %1661 = sbr.rel (%p1659) target = $region40
    $region39: #{tiny_vae_forward.9} parent=5 // pred_region
      %s1662 = ssub.s32 %s9, 2
      // Predicated region
      $region41: #{tiny_vae_forward.9} parent=39 // pred_check
        %p1663 = pneg %p106
      $region42: #{tiny_vae_forward.9} parent=39 // pred_check_branch
        %1665 = sbr.rel (%p1663) target = $region44
      $region43: #{tiny_vae_forward.9} parent=39 // pred_region
        %s1666 = smul.u32 128, %s15
        %p1667 = scmp.lt.s32.totalorder %s1666, 255
        %s1668 = scalar_select %p1667, %s1666, 255
        %s1669 = smul.addr %s1668, 8
        %s1670 = scalar_lea.vmem %s3, %s1669
      $region44: #{tiny_vae_forward.9} parent=39 // pred_fallthru
        _
    $region40: #{tiny_vae_forward.9} parent=5 // pred_fallthru
      _
  $region6: #{tiny_vae_forward.9} parent=0 // loop_footer
    %s13 = sadd.s32 1, %s9
  $region7: #{tiny_vae_forward.9} parent=0 // loop_footer_branch
    %8 = sbr.rel target = $region3
  $region8: #{tiny_vae_forward.9} parent=0 // loop_exit
    _

</llo_original>
